<compile_context>
chip_gen: v5e
topology: v5e:2x2
jax: 0.10.0
libtpu: 0.0.40
codegen_flags: <defaults>
</compile_context>

<pallas_src>
import math

import jax
import jax.numpy as jnp
from jax.experimental import pallas as pl
from jax.experimental.pallas import tpu as pltpu  # noqa: F401  (TPU backend assumed)

# Make the pure-JAX reference (and the interpret-mode kernel) use true-f32
# matmuls; XLA:TPU's default bf16-truncated f32 dots otherwise diverge from the
# restructured kernel by a few 1e-3.
jax.config.update("jax_default_matmul_precision", "highest")


# ----------------------------- model dims -----------------------------------
B = 2          # batch
N = 8          # n_agent / graph nodes
F_IN = 16      # obs_dim (DHGAS node feature dim)
D = 32         # n_embd
H = 4          # n_head
DH = D // H    # per-head dim
HP = 8         # heads padded to 8 (sublane-aligned head-grouping matrices)
FF = 4 * D     # MLP hidden (= 128, exactly one lane tile)
A = 8          # action_dim (logits per agent)
A_PAD = 128    # lane-dense padded logits width
BN = B * N

# ------------------------- parameter-slab layout -----------------------------
# One [R_TOTAL, 128] f32 slab; every block starts at lane 0 and at a row offset
# that is a multiple of 8.  Static slices inside the kernel are free views.
LANES = 128
R_ADJ = 0                    # [BN, BN]   block-diag kron(I_B, adj)
R_WG = R_ADJ + BN            # [F_IN, D]
R_WQ = R_WG + F_IN           # [D, D]     pre-scaled by 1/sqrt(DH)
R_WK = R_WQ + D              # [D, D]
R_WV = R_WK + D              # [D, D]
R_WO = R_WV + D              # [D, D]
R_W1 = R_WO + D              # [D, FF]
R_W2 = R_W1 + D              # [FF, D]
R_WH = R_W2 + FF             # [D, A_PAD] (only first A lanes nonzero)
R_HG = R_WH + D              # [D, HP]    0/1 head grouping
R_HGT = R_HG + D             # [HP, D]
R_VEC = R_HGT + HP           # 7 vector rows: ln1g, ln1b, ln2g, ln2b, b1, b2, bh
R_TOTAL = R_VEC + 8          # = 400 rows (multiple of 8)


def _gelu_tanh(x):
    # tanh-approx GELU (EUP-friendly; PyTorch's exact erf GELU has no clean
    # Mosaic lowering, and reference/kernel use the same approximation).
    c = math.sqrt(2.0 / math.pi)
    return 0.5 * x * (1.0 + jnp.tanh(c * (x + 0.044715 * x * x * x)))


# ------------------------------ Pallas kernel --------------------------------
def integrated_kernel(x_ref, p_ref, out_ref):
    x = x_ref[...]                                            # [BN, F_IN]

    # ---- static slab views (zero-cost) ----
    adjb = p_ref[R_ADJ:R_ADJ + BN, 0:BN]                      # [BN, BN]
    wg = p_ref[R_WG:R_WG + F_IN, 0:D]
    wq = p_ref[R_WQ:R_WQ + D, 0:D]
    wk = p_ref[R_WK:R_WK + D, 0:D]
    wv = p_ref[R_WV:R_WV + D, 0:D]
    wo = p_ref[R_WO:R_WO + D, 0:D]
    w1 = p_ref[R_W1:R_W1 + D, 0:FF]
    w2 = p_ref[R_W2:R_W2 + FF, 0:D]
    wh = p_ref[R_WH:R_WH + D, 0:A_PAD]
    hg = p_ref[R_HG:R_HG + D, 0:HP]
    hgt = p_ref[R_HGT:R_HGT + HP, 0:D]
    ln1g = p_ref[R_VEC + 0:R_VEC + 1, 0:D]
    ln1b = p_ref[R_VEC + 1:R_VEC + 2, 0:D]
    ln2g = p_ref[R_VEC + 2:R_VEC + 3, 0:D]
    ln2b = p_ref[R_VEC + 3:R_VEC + 4, 0:D]
    b1 = p_ref[R_VEC + 4:R_VEC + 5, 0:FF]
    b2 = p_ref[R_VEC + 5:R_VEC + 6, 0:D]
    bh = p_ref[R_VEC + 6:R_VEC + 7, 0:A_PAD]

    # ---- DHGAS-style stage: aggregate (narrow F_IN) then project, ReLU ----
    agg = jnp.dot(adjb, x, preferred_element_type=jnp.float32)              # [BN, F_IN]
    h = jnp.maximum(
        jnp.dot(agg, wg, preferred_element_type=jnp.float32), 0.0)          # [BN, D]

    # ---- CommFormer encoder block ----
    # LayerNorm 1
    mu = jnp.mean(h, axis=-1, keepdims=True)
    var = jnp.mean((h - mu) ** 2, axis=-1, keepdims=True)
    hn = (h - mu) * jax.lax.rsqrt(var + 1e-5) * ln1g + ln1b                 # [BN, D]

    # Q/K/V: three lane-offset-0 [D,D] matmuls (scale already folded into wq)
    q = jnp.dot(hn, wq, preferred_element_type=jnp.float32)                 # [BN, D]
    k = jnp.dot(hn, wk, preferred_element_type=jnp.float32)
    v = jnp.dot(hn, wv, preferred_element_type=jnp.float32)

    # ---- multi-head attention without per-head lane slicing ----
    # Implicit 4-D broadcast (no explicit broadcast_to materialisation), then
    # contract the lane dim with the 0/1 head-grouping matrix G [D, HP] to get
    # per-head scores; G^T expands back and zeroes the padded heads.
    q4 = q.reshape(B, N, 1, D)
    k4 = k.reshape(B, 1, N, D)
    prod = q4 * k4                                                           # [B,N,N,D]
    s = jnp.dot(prod.reshape(B * N * N, D), hg,
                preferred_element_type=jnp.float32)                          # [BNN, HP]

    # Softmax over the key axis.  Scores are bounded (LayerNormed inputs +
    # folded 1/sqrt(DH) scale), so the max-subtraction is safely dropped.
    p = jnp.exp(s.reshape(B, N, N, HP))
    p = p / jnp.sum(p, axis=2, keepdims=True)                                # exact

    pe = jnp.dot(p.reshape(B * N * N, HP), hgt,
                 preferred_element_type=jnp.float32).reshape(B, N, N, D)
    v4 = v.reshape(B, 1, N, D)
    attn = jnp.sum(pe * v4, axis=2).reshape(BN, D)                           # [BN, D]

    h = h + jnp.dot(attn, wo, preferred_element_type=jnp.float32)

    # LayerNorm 2 + GELU MLP
    mu2 = jnp.mean(h, axis=-1, keepdims=True)
    var2 = jnp.mean((h - mu2) ** 2, axis=-1, keepdims=True)
    h2n = (h - mu2) * jax.lax.rsqrt(var2 + 1e-5) * ln2g + ln2b

    m = jnp.dot(h2n, w1, preferred_element_type=jnp.float32) + b1            # [BN, FF]
    m = _gelu_tanh(m)
    m = jnp.dot(m, w2, preferred_element_type=jnp.float32) + b2              # [BN, D]
    h = h + m

    # Action head, zero-padded to 128 lanes -> one unmasked lane-dense store.
    logits = jnp.dot(h, wh, preferred_element_type=jnp.float32) + bh         # [BN, 128]
    out_ref[...] = logits.astype(out_ref.dtype)


# ------------------------- one-time host-side prep ---------------------------
def prepare_params(adj, params):
    """Pack everything into one pre-padded parameter slab (called once)."""
    (wg, ln1g, ln1b, wq, wk, wv, wo, ln2g, ln2b, w1, b1, w2, b2, wh, bh) = params
    f32 = jnp.float32

    adj_blk = jnp.kron(jnp.eye(B, dtype=f32), adj.astype(f32))              # [BN, BN]
    head_ids = jnp.arange(D) // DH
    hg = (head_ids[:, None] == jnp.arange(HP)[None, :]).astype(f32)         # [D, HP]

    slab = jnp.zeros((R_TOTAL, LANES), f32)

    def put(s, r, m):
        m = jnp.asarray(m, f32)
        return s.at[r:r + m.shape[0], 0:m.shape[1]].set(m)

    slab = put(slab, R_ADJ, adj_blk)
    slab = put(slab, R_WG, wg)
    slab = put(slab, R_WQ, wq * (1.0 / math.sqrt(DH)))   # fold attention scale
    slab = put(slab, R_WK, wk)
    slab = put(slab, R_WV, wv)
    slab = put(slab, R_WO, wo)
    slab = put(slab, R_W1, w1)
    slab = put(slab, R_W2, w2)
    slab = put(slab, R_WH, wh)                            # lanes A..127 stay 0
    slab = put(slab, R_HG, hg)
    slab = put(slab, R_HGT, hg.T)
    slab = put(slab, R_VEC + 0, ln1g.reshape(1, D))
    slab = put(slab, R_VEC + 1, ln1b.reshape(1, D))
    slab = put(slab, R_VEC + 2, ln2g.reshape(1, D))
    slab = put(slab, R_VEC + 3, ln2b.reshape(1, D))
    slab = put(slab, R_VEC + 4, b1.reshape(1, FF))
    slab = put(slab, R_VEC + 5, b2.reshape(1, D))
    slab = put(slab, R_VEC + 6, bh.reshape(1, A))
    return slab


# ------------------------------ jitted forward -------------------------------
@jax.jit
def integrated_model(x, slab):
    # Only a reshape + one pallas_call + a slice per step: 2 input DMAs, 1 out.
    out = pl.pallas_call(
        integrated_kernel,
        out_shape=jax.ShapeDtypeStruct((BN, A_PAD), jnp.float32),
    )(x.reshape(BN, F_IN), slab)
    return out[:, :A].reshape(B, N, A)


# ---------------------------- pure-JAX reference ------------------------------
def reference_model(x, adj, params):
    (wg, ln1g, ln1b, wq, wk, wv, wo, ln2g, ln2b, w1, b1, w2, b2, wh, bh) = params

    def ln(z, g, bta):
        mu = jnp.mean(z, -1, keepdims=True)
        var = jnp.mean((z - mu) ** 2, -1, keepdims=True)
        return (z - mu) * jax.lax.rsqrt(var + 1e-5) * g + bta

    def one(xb):
        h = jnp.maximum(adj @ (xb @ wg), 0.0)
        hn = ln(h, ln1g, ln1b)
        q, k, v = hn @ wq, hn @ wk, hn @ wv
        scale = 1.0 / math.sqrt(DH)
        outs = []
        for hd in range(H):
            sl = slice(hd * DH, (hd + 1) * DH)
            s = (q[:, sl] @ k[:, sl].T) * scale
            p = jax.nn.softmax(s, axis=-1)
            outs.append(p @ v[:, sl])
        attn = jnp.concatenate(outs, -1)
        h = h + attn @ wo
        h2n = ln(h, ln2g, ln2b)
        m = _gelu_tanh(h2n @ w1 + b1)
        h = h + (m @ w2 + b2)
        return h @ wh + bh

    return jax.vmap(one)(x)


# --------------------------------- main ---------------------------------------
if __name__ == "__main__":
    key = jax.random.PRNGKey(0)
    keys = jax.random.split(key, 16)

    x = jax.random.normal(keys[0], (B, N, F_IN), dtype=jnp.float32)

    # deterministic adjacency: ring graph + self loops, row-normalized
    eye = jnp.eye(N, dtype=jnp.float32)
    ring = jnp.roll(eye, 1, axis=1) + jnp.roll(eye, -1, axis=1)
    adj = ring + eye
    adj = adj / jnp.sum(adj, axis=-1, keepdims=True)

    def w(k, shape, fan_in):
        return (jax.random.normal(k, shape, dtype=jnp.float32)
                / math.sqrt(fan_in)).astype(jnp.float32)

    params = (
        w(keys[1], (F_IN, D), F_IN),                 # wg
        jnp.ones((1, D), jnp.float32),               # ln1 gamma
        jnp.zeros((1, D), jnp.float32),              # ln1 beta
        w(keys[2], (D, D), D),                       # wq
        w(keys[3], (D, D), D),                       # wk
        w(keys[4], (D, D), D),                       # wv
        w(keys[5], (D, D), D),                       # wo
        jnp.ones((1, D), jnp.float32),               # ln2 gamma
        jnp.zeros((1, D), jnp.float32),              # ln2 beta
        w(keys[6], (D, FF), D),                      # mlp w1
        jnp.zeros((1, FF), jnp.float32),             # mlp b1
        w(keys[7], (FF, D), FF),                     # mlp w2
        jnp.zeros((1, D), jnp.float32),              # mlp b2
        w(keys[8], (D, A), D),                       # action head w
        jnp.zeros((1, A), jnp.float32),              # action head b
    )

    # One-time parameter preparation (hoisted out of the jitted forward).
    slab = prepare_params(adj, params)
    slab = jax.block_until_ready(slab)

    out = integrated_model(x, slab)
    out = jax.block_until_ready(out)

    ref = reference_model(x, adj, params)
    assert out.shape == (B, N, A), out.shape
    assert jnp.allclose(out, ref, atol=2e-3, rtol=2e-3), \
        float(jnp.max(jnp.abs(out - ref)))

    print("KERNEL_OK")
</pallas_src>

<mosaic_0001>
module attributes {stable_mosaic.version = 11 : i64} {
  func.func @integrated_kernel(%arg0: memref<16x16xf32, #tpu.memory_space<vmem>>, %arg1: memref<400x128xf32, #tpu.memory_space<vmem>>, %arg2: memref<16x128xf32, #tpu.memory_space<vmem>>) attributes {dimension_semantics = [], scalar_prefetch = 0 : i64, scratch_operands = 0 : i64, tpu.core_type = #tpu.core_type<tc>} {
    %c0 = arith.constant 0 : index
    %c0_0 = arith.constant 0 : index
    %0 = vector.load %arg0[%c0, %c0_0] : memref<16x16xf32, #tpu.memory_space<vmem>>, vector<16x16xf32>
    %c0_1 = arith.constant 0 : index
    %c0_2 = arith.constant 0 : index
    %1 = vector.load %arg1[%c0_1, %c0_2] : memref<400x128xf32, #tpu.memory_space<vmem>>, vector<16x16xf32>
    %c16 = arith.constant 16 : index
    %c0_3 = arith.constant 0 : index
    %2 = vector.load %arg1[%c16, %c0_3] : memref<400x128xf32, #tpu.memory_space<vmem>>, vector<16x32xf32>
    %c32 = arith.constant 32 : index
    %c0_4 = arith.constant 0 : index
    %3 = vector.load %arg1[%c32, %c0_4] : memref<400x128xf32, #tpu.memory_space<vmem>>, vector<32x32xf32>
    %c64 = arith.constant 64 : index
    %c0_5 = arith.constant 0 : index
    %4 = vector.load %arg1[%c64, %c0_5] : memref<400x128xf32, #tpu.memory_space<vmem>>, vector<32x32xf32>
    %c96 = arith.constant 96 : index
    %c0_6 = arith.constant 0 : index
    %5 = vector.load %arg1[%c96, %c0_6] : memref<400x128xf32, #tpu.memory_space<vmem>>, vector<32x32xf32>
    %c128 = arith.constant 128 : index
    %c0_7 = arith.constant 0 : index
    %6 = vector.load %arg1[%c128, %c0_7] : memref<400x128xf32, #tpu.memory_space<vmem>>, vector<32x32xf32>
    %c160 = arith.constant 160 : index
    %c0_8 = arith.constant 0 : index
    %7 = vector.load %arg1[%c160, %c0_8] : memref<400x128xf32, #tpu.memory_space<vmem>>, vector<32x128xf32>
    %c192 = arith.constant 192 : index
    %c0_9 = arith.constant 0 : index
    %8 = vector.load %arg1[%c192, %c0_9] : memref<400x128xf32, #tpu.memory_space<vmem>>, vector<128x32xf32>
    %c320 = arith.constant 320 : index
    %c0_10 = arith.constant 0 : index
    %9 = vector.load %arg1[%c320, %c0_10] : memref<400x128xf32, #tpu.memory_space<vmem>>, vector<32x128xf32>
    %c352 = arith.constant 352 : index
    %c0_11 = arith.constant 0 : index
    %10 = vector.load %arg1[%c352, %c0_11] : memref<400x128xf32, #tpu.memory_space<vmem>>, vector<32x8xf32>
    %c384 = arith.constant 384 : index
    %c0_12 = arith.constant 0 : index
    %11 = vector.load %arg1[%c384, %c0_12] : memref<400x128xf32, #tpu.memory_space<vmem>>, vector<8x32xf32>
    %c392 = arith.constant 392 : index
    %c0_13 = arith.constant 0 : index
    %12 = vector.load %arg1[%c392, %c0_13] : memref<400x128xf32, #tpu.memory_space<vmem>>, vector<1x32xf32>
    %c393 = arith.constant 393 : index
    %c0_14 = arith.constant 0 : index
    %13 = vector.load %arg1[%c393, %c0_14] : memref<400x128xf32, #tpu.memory_space<vmem>>, vector<1x32xf32>
    %c394 = arith.constant 394 : index
    %c0_15 = arith.constant 0 : index
    %14 = vector.load %arg1[%c394, %c0_15] : memref<400x128xf32, #tpu.memory_space<vmem>>, vector<1x32xf32>
    %c395 = arith.constant 395 : index
    %c0_16 = arith.constant 0 : index
    %15 = vector.load %arg1[%c395, %c0_16] : memref<400x128xf32, #tpu.memory_space<vmem>>, vector<1x32xf32>
    %c396 = arith.constant 396 : index
    %c0_17 = arith.constant 0 : index
    %16 = vector.load %arg1[%c396, %c0_17] : memref<400x128xf32, #tpu.memory_space<vmem>>, vector<1x128xf32>
    %c397 = arith.constant 397 : index
    %c0_18 = arith.constant 0 : index
    %17 = vector.load %arg1[%c397, %c0_18] : memref<400x128xf32, #tpu.memory_space<vmem>>, vector<1x32xf32>
    %c398 = arith.constant 398 : index
    %c0_19 = arith.constant 0 : index
    %18 = vector.load %arg1[%c398, %c0_19] : memref<400x128xf32, #tpu.memory_space<vmem>>, vector<1x128xf32>
    %cst = arith.constant dense<0.000000e+00> : vector<16x16xf32>
    %19 = tpu.matmul %1, %0, %cst {dimension_numbers = #tpu.dot_dimension_numbers<[1], [0], [0], [1], [0, 0, 1, 1], [], []>, precision = #tpu.contract_precision<fp32>} : vector<16x16xf32>, vector<16x16xf32>, vector<16x16xf32> -> vector<16x16xf32>
    %cst_20 = arith.constant dense<0.000000e+00> : vector<16x32xf32>
    %20 = tpu.matmul %19, %2, %cst_20 {dimension_numbers = #tpu.dot_dimension_numbers<[1], [0], [0], [1], [0, 0, 1, 1], [], []>, precision = #tpu.contract_precision<fp32>} : vector<16x16xf32>, vector<16x32xf32>, vector<16x32xf32> -> vector<16x32xf32>
    %cst_21 = arith.constant 0.000000e+00 : f32
    %21 = vector.broadcast %cst_21 : f32 to vector<16x32xf32>
    %22 = arith.maximumf %20, %21 : vector<16x32xf32>
    %cst_22 = arith.constant dense<0.000000e+00> : vector<16xf32>
    %23 = vector.multi_reduction <add>, %22, %cst_22 [1] : vector<16x32xf32> to vector<16xf32>
    %24 = vector.shape_cast %23 : vector<16xf32> to vector<16x1xf32>
    %cst_23 = arith.constant 3.200000e+01 : f32
    %25 = vector.broadcast %cst_23 : f32 to vector<16x1xf32>
    %26 = arith.divf %24, %25 : vector<16x1xf32>
    %27 = vector.broadcast %26 : vector<16x1xf32> to vector<16x32xf32>
    %28 = arith.subf %22, %27 : vector<16x32xf32>
    %29 = arith.mulf %28, %28 : vector<16x32xf32>
    %cst_24 = arith.constant dense<0.000000e+00> : vector<16xf32>
    %30 = vector.multi_reduction <add>, %29, %cst_24 [1] : vector<16x32xf32> to vector<16xf32>
    %31 = vector.shape_cast %30 : vector<16xf32> to vector<16x1xf32>
    %cst_25 = arith.constant 3.200000e+01 : f32
    %32 = vector.broadcast %cst_25 : f32 to vector<16x1xf32>
    %33 = arith.divf %31, %32 : vector<16x1xf32>
    %34 = vector.broadcast %26 : vector<16x1xf32> to vector<16x32xf32>
    %35 = arith.subf %22, %34 : vector<16x32xf32>
    %cst_26 = arith.constant 9.99999974E-6 : f32
    %36 = vector.broadcast %cst_26 : f32 to vector<16x1xf32>
    %37 = arith.addf %33, %36 : vector<16x1xf32>
    %38 = math.rsqrt %37 : vector<16x1xf32>
    %39 = vector.broadcast %38 : vector<16x1xf32> to vector<16x32xf32>
    %40 = arith.mulf %35, %39 : vector<16x32xf32>
    %41 = vector.broadcast %12 : vector<1x32xf32> to vector<16x32xf32>
    %42 = arith.mulf %40, %41 : vector<16x32xf32>
    %43 = vector.broadcast %13 : vector<1x32xf32> to vector<16x32xf32>
    %44 = arith.addf %42, %43 : vector<16x32xf32>
    %cst_27 = arith.constant dense<0.000000e+00> : vector<16x32xf32>
    %45 = tpu.matmul %44, %3, %cst_27 {dimension_numbers = #tpu.dot_dimension_numbers<[1], [0], [0], [1], [0, 0, 1, 1], [], []>, precision = #tpu.contract_precision<fp32>} : vector<16x32xf32>, vector<32x32xf32>, vector<16x32xf32> -> vector<16x32xf32>
    %cst_28 = arith.constant dense<0.000000e+00> : vector<16x32xf32>
    %46 = tpu.matmul %44, %4, %cst_28 {dimension_numbers = #tpu.dot_dimension_numbers<[1], [0], [0], [1], [0, 0, 1, 1], [], []>, precision = #tpu.contract_precision<fp32>} : vector<16x32xf32>, vector<32x32xf32>, vector<16x32xf32> -> vector<16x32xf32>
    %cst_29 = arith.constant dense<0.000000e+00> : vector<16x32xf32>
    %47 = tpu.matmul %44, %5, %cst_29 {dimension_numbers = #tpu.dot_dimension_numbers<[1], [0], [0], [1], [0, 0, 1, 1], [], []>, precision = #tpu.contract_precision<fp32>} : vector<16x32xf32>, vector<32x32xf32>, vector<16x32xf32> -> vector<16x32xf32>
    %48 = vector.shape_cast %45 : vector<16x32xf32> to vector<2x8x1x32xf32>
    %49 = vector.shape_cast %46 : vector<16x32xf32> to vector<2x1x8x32xf32>
    %50 = vector.broadcast %48 : vector<2x8x1x32xf32> to vector<2x8x8x32xf32>
    %51 = vector.broadcast %49 : vector<2x1x8x32xf32> to vector<2x8x8x32xf32>
    %52 = arith.mulf %50, %51 : vector<2x8x8x32xf32>
    %53 = vector.shape_cast %52 : vector<2x8x8x32xf32> to vector<128x32xf32>
    %cst_30 = arith.constant dense<0.000000e+00> : vector<128x8xf32>
    %54 = tpu.matmul %53, %10, %cst_30 {dimension_numbers = #tpu.dot_dimension_numbers<[1], [0], [0], [1], [0, 0, 1, 1], [], []>, precision = #tpu.contract_precision<fp32>} : vector<128x32xf32>, vector<32x8xf32>, vector<128x8xf32> -> vector<128x8xf32>
    %55 = vector.shape_cast %54 : vector<128x8xf32> to vector<2x8x8x8xf32>
    %56 = math.exp %55 : vector<2x8x8x8xf32>
    %cst_31 = arith.constant dense<0.000000e+00> : vector<2x8x8xf32>
    %57 = vector.multi_reduction <add>, %56, %cst_31 [2] : vector<2x8x8x8xf32> to vector<2x8x8xf32>
    %58 = vector.shape_cast %57 : vector<2x8x8xf32> to vector<2x8x1x8xf32>
    %59 = vector.broadcast %58 : vector<2x8x1x8xf32> to vector<2x8x8x8xf32>
    %60 = arith.divf %56, %59 : vector<2x8x8x8xf32>
    %61 = vector.shape_cast %60 : vector<2x8x8x8xf32> to vector<128x8xf32>
    %cst_32 = arith.constant dense<0.000000e+00> : vector<128x32xf32>
    %62 = tpu.matmul %61, %11, %cst_32 {dimension_numbers = #tpu.dot_dimension_numbers<[1], [0], [0], [1], [0, 0, 1, 1], [], []>, precision = #tpu.contract_precision<fp32>} : vector<128x8xf32>, vector<8x32xf32>, vector<128x32xf32> -> vector<128x32xf32>
    %63 = vector.shape_cast %62 : vector<128x32xf32> to vector<2x8x8x32xf32>
    %64 = vector.shape_cast %47 : vector<16x32xf32> to vector<2x1x8x32xf32>
    %65 = vector.broadcast %64 : vector<2x1x8x32xf32> to vector<2x8x8x32xf32>
    %66 = arith.mulf %63, %65 : vector<2x8x8x32xf32>
    %cst_33 = arith.constant dense<0.000000e+00> : vector<2x8x32xf32>
    %67 = vector.multi_reduction <add>, %66, %cst_33 [2] : vector<2x8x8x32xf32> to vector<2x8x32xf32>
    %68 = vector.shape_cast %67 : vector<2x8x32xf32> to vector<16x32xf32>
    %cst_34 = arith.constant dense<0.000000e+00> : vector<16x32xf32>
    %69 = tpu.matmul %68, %6, %cst_34 {dimension_numbers = #tpu.dot_dimension_numbers<[1], [0], [0], [1], [0, 0, 1, 1], [], []>, precision = #tpu.contract_precision<fp32>} : vector<16x32xf32>, vector<32x32xf32>, vector<16x32xf32> -> vector<16x32xf32>
    %70 = arith.addf %22, %69 : vector<16x32xf32>
    %cst_35 = arith.constant dense<0.000000e+00> : vector<16xf32>
    %71 = vector.multi_reduction <add>, %70, %cst_35 [1] : vector<16x32xf32> to vector<16xf32>
    %72 = vector.shape_cast %71 : vector<16xf32> to vector<16x1xf32>
    %cst_36 = arith.constant 3.200000e+01 : f32
    %73 = vector.broadcast %cst_36 : f32 to vector<16x1xf32>
    %74 = arith.divf %72, %73 : vector<16x1xf32>
    %75 = vector.broadcast %74 : vector<16x1xf32> to vector<16x32xf32>
    %76 = arith.subf %70, %75 : vector<16x32xf32>
    %77 = arith.mulf %76, %76 : vector<16x32xf32>
    %cst_37 = arith.constant dense<0.000000e+00> : vector<16xf32>
    %78 = vector.multi_reduction <add>, %77, %cst_37 [1] : vector<16x32xf32> to vector<16xf32>
    %79 = vector.shape_cast %78 : vector<16xf32> to vector<16x1xf32>
    %cst_38 = arith.constant 3.200000e+01 : f32
    %80 = vector.broadcast %cst_38 : f32 to vector<16x1xf32>
    %81 = arith.divf %79, %80 : vector<16x1xf32>
    %82 = vector.broadcast %74 : vector<16x1xf32> to vector<16x32xf32>
    %83 = arith.subf %70, %82 : vector<16x32xf32>
    %cst_39 = arith.constant 9.99999974E-6 : f32
    %84 = vector.broadcast %cst_39 : f32 to vector<16x1xf32>
    %85 = arith.addf %81, %84 : vector<16x1xf32>
    %86 = math.rsqrt %85 : vector<16x1xf32>
    %87 = vector.broadcast %86 : vector<16x1xf32> to vector<16x32xf32>
    %88 = arith.mulf %83, %87 : vector<16x32xf32>
    %89 = vector.broadcast %14 : vector<1x32xf32> to vector<16x32xf32>
    %90 = arith.mulf %88, %89 : vector<16x32xf32>
    %91 = vector.broadcast %15 : vector<1x32xf32> to vector<16x32xf32>
    %92 = arith.addf %90, %91 : vector<16x32xf32>
    %cst_40 = arith.constant dense<0.000000e+00> : vector<16x128xf32>
    %93 = tpu.matmul %92, %7, %cst_40 {dimension_numbers = #tpu.dot_dimension_numbers<[1], [0], [0], [1], [0, 0, 1, 1], [], []>, precision = #tpu.contract_precision<fp32>} : vector<16x32xf32>, vector<32x128xf32>, vector<16x128xf32> -> vector<16x128xf32>
    %94 = vector.broadcast %16 : vector<1x128xf32> to vector<16x128xf32>
    %95 = arith.addf %93, %94 : vector<16x128xf32>
    %cst_41 = arith.constant 5.000000e-01 : f32
    %96 = vector.broadcast %cst_41 : f32 to vector<16x128xf32>
    %97 = arith.mulf %96, %95 : vector<16x128xf32>
    %cst_42 = arith.constant 4.471500e-02 : f32
    %98 = vector.broadcast %cst_42 : f32 to vector<16x128xf32>
    %99 = arith.mulf %98, %95 : vector<16x128xf32>
    %100 = arith.mulf %99, %95 : vector<16x128xf32>
    %101 = arith.mulf %100, %95 : vector<16x128xf32>
    %102 = arith.addf %95, %101 : vector<16x128xf32>
    %cst_43 = arith.constant 0.797884583 : f32
    %103 = vector.broadcast %cst_43 : f32 to vector<16x128xf32>
    %104 = arith.mulf %103, %102 : vector<16x128xf32>
    %105 = math.tanh %104 : vector<16x128xf32>
    %cst_44 = arith.constant 1.000000e+00 : f32
    %106 = vector.broadcast %cst_44 : f32 to vector<16x128xf32>
    %107 = arith.addf %106, %105 : vector<16x128xf32>
    %108 = arith.mulf %97, %107 : vector<16x128xf32>
    %cst_45 = arith.constant dense<0.000000e+00> : vector<16x32xf32>
    %109 = tpu.matmul %108, %8, %cst_45 {dimension_numbers = #tpu.dot_dimension_numbers<[1], [0], [0], [1], [0, 0, 1, 1], [], []>, precision = #tpu.contract_precision<fp32>} : vector<16x128xf32>, vector<128x32xf32>, vector<16x32xf32> -> vector<16x32xf32>
    %110 = vector.broadcast %17 : vector<1x32xf32> to vector<16x32xf32>
    %111 = arith.addf %109, %110 : vector<16x32xf32>
    %112 = arith.addf %70, %111 : vector<16x32xf32>
    %cst_46 = arith.constant dense<0.000000e+00> : vector<16x128xf32>
    %113 = tpu.matmul %112, %9, %cst_46 {dimension_numbers = #tpu.dot_dimension_numbers<[1], [0], [0], [1], [0, 0, 1, 1], [], []>, precision = #tpu.contract_precision<fp32>} : vector<16x32xf32>, vector<32x128xf32>, vector<16x128xf32> -> vector<16x128xf32>
    %114 = vector.broadcast %18 : vector<1x128xf32> to vector<16x128xf32>
    %115 = arith.addf %113, %114 : vector<16x128xf32>
    %c0_47 = arith.constant 0 : index
    %c0_48 = arith.constant 0 : index
    %116 = vector.load %arg2[%c0_47, %c0_48] : memref<16x128xf32, #tpu.memory_space<vmem>>, vector<16x128xf32>
    tpu.vector_store %arg2[%c0_47, %c0_48], %115 {strides = array<i32>} : memref<16x128xf32, #tpu.memory_space<vmem>>, vector<16x128xf32>,
    return
  }
}

</mosaic_0001>

<llo_original>
// kernel: integrated_model.1
$region0: #{integrated_model.1}
  #allocation0 [shape = 'u32[]', space=smem, size = 0x4, offset = 0x4, fixed_abs, tag = 'smem constant byte address 0x4 - core index']
  #allocation1 [shape = 'u32[72,128]{1,0:T(1,128)}', space=vmem, size = 0x9000, scoped, tag = 'internal scratch']
  %s0 = inlined_call_operand.hbm [shape: f32[16,16], index: 0, kind: input, shape index: {}]
  %s1 = inlined_call_operand.hbm [shape: f32[400,128], index: 1, kind: input, shape index: {}]
  %s2 = inlined_call_operand.vmem [shape: f32[16,128], index: 2, kind: output, shape index: {}]
  %s3 = sld [smem:[#allocation0]]
  $region26: #{integrated_model.1} parent=0
    _
  %s5 = ssub.s32 1, %s3
  %s6 = scalar_select 0, %s5, %s3
  $region1: #{integrated_model.1} parent=0
    #allocation2 [shape = 'u8[8192]{0}', space=vmem, size = 0x2000, scoped, tag = 'input window, operand 0, single buffered']
    #allocation3 [shape = 's32[1]{0}', space=sflag, size = 0x4, scoped, tag = 'scoped memory for integrated_model.1']
    #allocation4 [shape = 'u8[204800]{0}', space=vmem, size = 0x32000, scoped, tag = 'input window, operand 1, single buffered']
    #allocation5 [shape = 's32[1]{0}', space=sflag, size = 0x4, scoped, tag = 'scoped memory for integrated_model.1']
    %7 = vsyncpa [#allocation3], 0
    %8 = vsyncpa [#allocation5], 0
    // Predicated region
    $region2: #{integrated_model.1} parent=1 // pred_check
      _
    $region3: #{integrated_model.1} parent=1 // pred_check_branch
      %10 = sbr.rel (0) target = $region5
    $region4: #{integrated_model.1} parent=1 // pred_region
      %12 = vsyncadd [#allocation3], 0
      %s13 = sshll.u32 %s0, 4
      %s14 = int_to_ptr.hbm [resolvable:$true] %s13
      %s15 = sshll.u32 [#allocation2], 4
      %s16 = int_to_ptr.vmem [resolvable:$true] %s15
      %21 = dma.hbm_to_vmem [thread:$0]  %s14, 256, %s16, [#allocation3], 128, 128, 8
    $region5: #{integrated_model.1} parent=1 // pred_fallthru
      _
    // Predicated region
    $region6: #{integrated_model.1} parent=1 // pred_check
      _
    $region7: #{integrated_model.1} parent=1 // pred_check_branch
      %23 = sbr.rel (0) target = $region9
    $region8: #{integrated_model.1} parent=1 // pred_region
      %25 = vsyncadd [#allocation5], 0
      %s26 = sshll.u32 %s1, 4
      %s27 = int_to_ptr.hbm [resolvable:$true] %s26
      %s28 = sshll.u32 [#allocation4], 4
      %s29 = int_to_ptr.vmem [resolvable:$true] %s28
      %34 = dma.hbm_to_vmem [thread:$0]  %s27, 6400, %s29, [#allocation5], 128, 128, 8
    $region9: #{integrated_model.1} parent=1 // pred_fallthru
      _
    // Predicated region
    $region10: #{integrated_model.1} parent=1 // pred_check
      _
    $region11: #{integrated_model.1} parent=1 // pred_check_branch
      %36 = sbr.rel (0) target = $region13
    $region12: #{integrated_model.1} parent=1 // pred_region
      %38 = dma.done [#allocation3], 256
    $region13: #{integrated_model.1} parent=1 // pred_fallthru
      _
    // Predicated region
    $region14: #{integrated_model.1} parent=1 // pred_check
      _
    $region15: #{integrated_model.1} parent=1 // pred_check_branch
      %40 = sbr.rel (0) target = $region17
    $region16: #{integrated_model.1} parent=1 // pred_region
      %42 = dma.done [#allocation5], 6400
    $region17: #{integrated_model.1} parent=1 // pred_fallthru
      _
    %v43 = vld [vmem:[#allocation2] sm:$0xff]
    %v44 = vld [vmem:[#allocation2 + $0x8] sm:$0xff]
    %v45 = vld [vmem:[#allocation4] sm:$0xff]
    %v46 = vld [vmem:[#allocation4 + $0x8] sm:$0xff]
    %v47 = vld [vmem:[#allocation4 + $0x10] sm:$0xff]
    %v48 = vld [vmem:[#allocation4 + $0x18] sm:$0xff]
    %v49 = vld [vmem:[#allocation4 + $0x20] sm:$0xff]
    %v50 = vld [vmem:[#allocation4 + $0x28] sm:$0xff]
    %v51 = vld [vmem:[#allocation4 + $0x30] sm:$0xff]
    %v52 = vld [vmem:[#allocation4 + $0x38] sm:$0xff]
    %v53 = vld [vmem:[#allocation4 + $0x40] sm:$0xff]
    %v54 = vld [vmem:[#allocation4 + $0x48] sm:$0xff]
    %v55 = vld [vmem:[#allocation4 + $0x50] sm:$0xff]
    %v56 = vld [vmem:[#allocation4 + $0x58] sm:$0xff]
    %v57 = vld [vmem:[#allocation4 + $0x60] sm:$0xff]
    %v58 = vld [vmem:[#allocation4 + $0x68] sm:$0xff]
    %v59 = vld [vmem:[#allocation4 + $0x70] sm:$0xff]
    %v60 = vld [vmem:[#allocation4 + $0x78] sm:$0xff]
    %v61 = vld [vmem:[#allocation4 + $0x80] sm:$0xff]
    %v62 = vld [vmem:[#allocation4 + $0x88] sm:$0xff]
    %v63 = vld [vmem:[#allocation4 + $0x90] sm:$0xff]
    %v64 = vld [vmem:[#allocation4 + $0x98] sm:$0xff]
    %v65 = vld [vmem:[#allocation4 + $0xa0] sm:$0xff]
    %v66 = vld [vmem:[#allocation4 + $0xa8] sm:$0xff]
    %v67 = vld [vmem:[#allocation4 + $0xb0] sm:$0xff]
    %v68 = vld [vmem:[#allocation4 + $0xb8] sm:$0xff]
    %v69 = vld [vmem:[#allocation4 + $0xc0] sm:$0xff]
    %v70 = vld [vmem:[#allocation4 + $0xc8] sm:$0xff]
    %v71 = vld [vmem:[#allocation4 + $0xd0] sm:$0xff]
    %v72 = vld [vmem:[#allocation4 + $0xd8] sm:$0xff]
    %v73 = vld [vmem:[#allocation4 + $0xe0] sm:$0xff]
    %v74 = vld [vmem:[#allocation4 + $0xe8] sm:$0xff]
    %v75 = vld [vmem:[#allocation4 + $0xf0] sm:$0xff]
    %v76 = vld [vmem:[#allocation4 + $0xf8] sm:$0xff]
    %v77 = vld [vmem:[#allocation4 + $0x100] sm:$0xff]
    %v78 = vld [vmem:[#allocation4 + $0x108] sm:$0xff]
    %v79 = vld [vmem:[#allocation4 + $0x110] sm:$0xff]
    %v80 = vld [vmem:[#allocation4 + $0x118] sm:$0xff]
    %v81 = vld [vmem:[#allocation4 + $0x120] sm:$0xff]
    %v82 = vld [vmem:[#allocation4 + $0x128] sm:$0xff]
    %v83 = vld [vmem:[#allocation4 + $0x130] sm:$0xff]
    %v84 = vld [vmem:[#allocation4 + $0x138] sm:$0xff]
    %v85 = vld [vmem:[#allocation4 + $0x140] sm:$0xff]
    %v86 = vld [vmem:[#allocation4 + $0x148] sm:$0xff]
    %v87 = vld [vmem:[#allocation4 + $0x150] sm:$0xff]
    %v88 = vld [vmem:[#allocation4 + $0x158] sm:$0xff]
    %v89 = vld [vmem:[#allocation4 + $0x160] sm:$0xff]
    %v90 = vld [vmem:[#allocation4 + $0x168] sm:$0xff]
    %v91 = vld [vmem:[#allocation4 + $0x170] sm:$0xff]
    %v92 = vld [vmem:[#allocation4 + $0x178] sm:$0xff]
    %v93 = vld [vmem:[#allocation4 + $0x180] sm:$0xff]
    %v94 = vld [vmem:[#allocation4 + $0x188] sm:$0x1]
    %v95 = vld [vmem:[#allocation4 + $0x189] sm:$0x1]
    %v96 = vld [vmem:[#allocation4 + $0x18a] sm:$0x1]
    %v97 = vld [vmem:[#allocation4 + $0x18b] sm:$0x1]
    %v98 = vld [vmem:[#allocation4 + $0x18c] sm:$0x1]
    %v99 = vld [vmem:[#allocation4 + $0x18d] sm:$0x1]
    %v100 = vld [vmem:[#allocation4 + $0x18e] sm:$0x1]
    %vm101 = vcmask 130048
    %v103 = vsel %vm101, %v45, 0
    %v106 = vsel %vm101, %v46, 0
    %108 = vmatpush.msra.mxu0 0.0
    %109 = vmatpush.msra.mxu0 0.0
    %110 = vmatpush.msra.mxu0 0.0
    %111 = vmatpush.msra.mxu0 0.0
    %112 = vmatpush.msra.mxu0 0.0
    %113 = vmatpush.msra.mxu0 0.0
    %114 = vmatpush.msra.mxu0 0.0
    %115 = vmatpush.msra.mxu0 0.0
    %116 = vmatpush.msra.mxu0 0.0
    %117 = vmatpush.msra.mxu0 0.0
    %118 = vmatpush.msra.mxu0 0.0
    %119 = vmatpush.msra.mxu0 0.0
    %120 = vmatpush.msra.mxu0 0.0
    %121 = vmatpush.msra.mxu0 0.0
    %v122 = vand.u32 %v44, 4294901760
    %123 = vmatpush.msra.mxu0 %v122
    %v124 = vand.u32 %v43, 4294901760
    %125 = vmatpush.msra.mxu0 %v124
    %v126 = vand.u32 %v103, 4294901760
    %v127 = vsub.f32 %v103, %v126
    %v128 = vand.u32 %v127, 4294901760
    %v129 = vsub.f32 %v127, %v128
    %v130 = vand.u32 %v129, 4294901760
    %131 = vmatmul.f32.gmra.mxu0 %v130
    %v132 = vpop.f32.mrf.mxu0
    %v133 = vadd.f32 0.0, %v132
    %v134 = vand.u32 %v106, 4294901760
    %v135 = vsub.f32 %v106, %v134
    %v136 = vand.u32 %v135, 4294901760
    %v137 = vsub.f32 %v135, %v136
    %v138 = vand.u32 %v137, 4294901760
    %139 = vmatmul.f32.gmra.mxu0 %v138
    %v140 = vpop.f32.mrf.mxu0
    %v141 = vadd.f32 0.0, %v140
    %142 = vdwg.mxu0
    %143 = vmatpush.msra.mxu0 0.0
    %144 = vmatpush.msra.mxu0 0.0
    %145 = vmatpush.msra.mxu0 0.0
    %146 = vmatpush.msra.mxu0 0.0
    %147 = vmatpush.msra.mxu0 0.0
    %148 = vmatpush.msra.mxu0 0.0
    %149 = vmatpush.msra.mxu0 0.0
    %150 = vmatpush.msra.mxu0 0.0
    %151 = vmatpush.msra.mxu0 0.0
    %152 = vmatpush.msra.mxu0 0.0
    %153 = vmatpush.msra.mxu0 0.0
    %154 = vmatpush.msra.mxu0 0.0
    %155 = vmatpush.msra.mxu0 0.0
    %156 = vmatpush.msra.mxu0 0.0
    %v157 = vand.u32 %v44, 4294901760
    %v158 = vsub.f32 %v44, %v157
    %v159 = vand.u32 %v158, 4294901760
    %v160 = vsub.f32 %v158, %v159
    %v161 = vand.u32 %v160, 4294901760
    %162 = vmatpush.msra.mxu0 %v161
    %v163 = vand.u32 %v43, 4294901760
    %v164 = vsub.f32 %v43, %v163
    %v165 = vand.u32 %v164, 4294901760
    %v166 = vsub.f32 %v164, %v165
    %v167 = vand.u32 %v166, 4294901760
    %168 = vmatpush.msra.mxu0 %v167
    %v169 = vand.u32 %v103, 4294901760
    %170 = vmatmul.f32.gmra.mxu0 %v169
    %v171 = vpop.f32.mrf.mxu0
    %v172 = vadd.f32 %v133, %v171
    %v173 = vand.u32 %v106, 4294901760
    %174 = vmatmul.f32.gmra.mxu0 %v173
    %v175 = vpop.f32.mrf.mxu0
    %v176 = vadd.f32 %v141, %v175
    %177 = vdwg.mxu0
    %178 = vmatpush.msra.mxu0 0.0
    %179 = vmatpush.msra.mxu0 0.0
    %180 = vmatpush.msra.mxu0 0.0
    %181 = vmatpush.msra.mxu0 0.0
    %182 = vmatpush.msra.mxu0 0.0
    %183 = vmatpush.msra.mxu0 0.0
    %184 = vmatpush.msra.mxu0 0.0
    %185 = vmatpush.msra.mxu0 0.0
    %186 = vmatpush.msra.mxu0 0.0
    %187 = vmatpush.msra.mxu0 0.0
    %188 = vmatpush.msra.mxu0 0.0
    %189 = vmatpush.msra.mxu0 0.0
    %190 = vmatpush.msra.mxu0 0.0
    %191 = vmatpush.msra.mxu0 0.0
    %v192 = vand.u32 %v44, 4294901760
    %v193 = vsub.f32 %v44, %v192
    %194 = vmatpush.msra.mxu0 %v193
    %v195 = vand.u32 %v43, 4294901760
    %v196 = vsub.f32 %v43, %v195
    %197 = vmatpush.msra.mxu0 %v196
    %v198 = vand.u32 %v103, 4294901760
    %v199 = vsub.f32 %v103, %v198
    %200 = vmatmul.f32.gmra.mxu0 %v199
    %v201 = vpop.f32.mrf.mxu0
    %v202 = vadd.f32 %v172, %v201
    %v203 = vand.u32 %v106, 4294901760
    %v204 = vsub.f32 %v106, %v203
    %205 = vmatmul.f32.gmra.mxu0 %v204
    %v206 = vpop.f32.mrf.mxu0
    %v207 = vadd.f32 %v176, %v206
    %208 = vdwg.mxu0
    %209 = vmatpush.msra.mxu0 0.0
    %210 = vmatpush.msra.mxu0 0.0
    %211 = vmatpush.msra.mxu0 0.0
    %212 = vmatpush.msra.mxu0 0.0
    %213 = vmatpush.msra.mxu0 0.0
    %214 = vmatpush.msra.mxu0 0.0
    %215 = vmatpush.msra.mxu0 0.0
    %216 = vmatpush.msra.mxu0 0.0
    %217 = vmatpush.msra.mxu0 0.0
    %218 = vmatpush.msra.mxu0 0.0
    %219 = vmatpush.msra.mxu0 0.0
    %220 = vmatpush.msra.mxu0 0.0
    %221 = vmatpush.msra.mxu0 0.0
    %222 = vmatpush.msra.mxu0 0.0
    %v223 = vand.u32 %v44, 4294901760
    %224 = vmatpush.msra.mxu0 %v223
    %v225 = vand.u32 %v43, 4294901760
    %226 = vmatpush.msra.mxu0 %v225
    %v227 = vand.u32 %v103, 4294901760
    %v228 = vsub.f32 %v103, %v227
    %v229 = vand.u32 %v228, 4294901760
    %230 = vmatmul.f32.gmra.mxu0 %v229
    %v231 = vpop.f32.mrf.mxu0
    %v232 = vadd.f32 %v202, %v231
    %v233 = vand.u32 %v106, 4294901760
    %v234 = vsub.f32 %v106, %v233
    %v235 = vand.u32 %v234, 4294901760
    %236 = vmatmul.f32.gmra.mxu0 %v235
    %v237 = vpop.f32.mrf.mxu0
    %v238 = vadd.f32 %v207, %v237
    %239 = vdwg.mxu0
    %240 = vmatpush.msra.mxu0 0.0
    %241 = vmatpush.msra.mxu0 0.0
    %242 = vmatpush.msra.mxu0 0.0
    %243 = vmatpush.msra.mxu0 0.0
    %244 = vmatpush.msra.mxu0 0.0
    %245 = vmatpush.msra.mxu0 0.0
    %246 = vmatpush.msra.mxu0 0.0
    %247 = vmatpush.msra.mxu0 0.0
    %248 = vmatpush.msra.mxu0 0.0
    %249 = vmatpush.msra.mxu0 0.0
    %250 = vmatpush.msra.mxu0 0.0
    %251 = vmatpush.msra.mxu0 0.0
    %252 = vmatpush.msra.mxu0 0.0
    %253 = vmatpush.msra.mxu0 0.0
    %v254 = vand.u32 %v44, 4294901760
    %v255 = vsub.f32 %v44, %v254
    %v256 = vand.u32 %v255, 4294901760
    %257 = vmatpush.msra.mxu0 %v256
    %v258 = vand.u32 %v43, 4294901760
    %v259 = vsub.f32 %v43, %v258
    %v260 = vand.u32 %v259, 4294901760
    %261 = vmatpush.msra.mxu0 %v260
    %v262 = vand.u32 %v103, 4294901760
    %263 = vmatmul.f32.gmra.mxu0 %v262
    %v264 = vpop.f32.mrf.mxu0
    %v265 = vadd.f32 %v232, %v264
    %v266 = vand.u32 %v106, 4294901760
    %267 = vmatmul.f32.gmra.mxu0 %v266
    %v268 = vpop.f32.mrf.mxu0
    %v269 = vadd.f32 %v238, %v268
    %270 = vdwg.mxu0
    %271 = vmatpush.msra.mxu0 0.0
    %272 = vmatpush.msra.mxu0 0.0
    %273 = vmatpush.msra.mxu0 0.0
    %274 = vmatpush.msra.mxu0 0.0
    %275 = vmatpush.msra.mxu0 0.0
    %276 = vmatpush.msra.mxu0 0.0
    %277 = vmatpush.msra.mxu0 0.0
    %278 = vmatpush.msra.mxu0 0.0
    %279 = vmatpush.msra.mxu0 0.0
    %280 = vmatpush.msra.mxu0 0.0
    %281 = vmatpush.msra.mxu0 0.0
    %282 = vmatpush.msra.mxu0 0.0
    %283 = vmatpush.msra.mxu0 0.0
    %284 = vmatpush.msra.mxu0 0.0
    %v285 = vand.u32 %v44, 4294901760
    %286 = vmatpush.msra.mxu0 %v285
    %v287 = vand.u32 %v43, 4294901760
    %288 = vmatpush.msra.mxu0 %v287
    %v289 = vand.u32 %v103, 4294901760
    %290 = vmatmul.f32.gmra.mxu0 %v289
    %v291 = vpop.f32.mrf.mxu0
    %v292 = vadd.f32 %v265, %v291
    %v293 = vand.u32 %v106, 4294901760
    %294 = vmatmul.f32.gmra.mxu0 %v293
    %v295 = vpop.f32.mrf.mxu0
    %v296 = vadd.f32 %v269, %v295
    %297 = vdwg.mxu0
    %v299 = vsel %vm101, %v292, 0
    %v302 = vsel %vm101, %v296, 0
    %304 = vmatpush.msra.mxu0 0.0
    %305 = vmatpush.msra.mxu0 0.0
    %306 = vmatpush.msra.mxu0 0.0
    %307 = vmatpush.msra.mxu0 0.0
    %308 = vmatpush.msra.mxu0 0.0
    %309 = vmatpush.msra.mxu0 0.0
    %310 = vmatpush.msra.mxu0 0.0
    %311 = vmatpush.msra.mxu0 0.0
    %312 = vmatpush.msra.mxu0 0.0
    %313 = vmatpush.msra.mxu0 0.0
    %314 = vmatpush.msra.mxu0 0.0
    %315 = vmatpush.msra.mxu0 0.0
    %316 = vmatpush.msra.mxu0 0.0
    %317 = vmatpush.msra.mxu0 0.0
    %v318 = vand.u32 %v48, 4294901760
    %319 = vmatpush.msra.mxu0 %v318
    %v320 = vand.u32 %v47, 4294901760
    %321 = vmatpush.msra.mxu0 %v320
    %v322 = vand.u32 %v299, 4294901760
    %v323 = vsub.f32 %v299, %v322
    %v324 = vand.u32 %v323, 4294901760
    %v325 = vsub.f32 %v323, %v324
    %v326 = vand.u32 %v325, 4294901760
    %327 = vmatmul.f32.gmra.mxu0 %v326
    %v328 = vpop.f32.mrf.mxu0
    %v329 = vadd.f32 0.0, %v328
    %v330 = vand.u32 %v302, 4294901760
    %v331 = vsub.f32 %v302, %v330
    %v332 = vand.u32 %v331, 4294901760
    %v333 = vsub.f32 %v331, %v332
    %v334 = vand.u32 %v333, 4294901760
    %335 = vmatmul.f32.gmra.mxu0 %v334
    %v336 = vpop.f32.mrf.mxu0
    %v337 = vadd.f32 0.0, %v336
    %338 = vdwg.mxu0
    %339 = vmatpush.msra.mxu0 0.0
    %340 = vmatpush.msra.mxu0 0.0
    %341 = vmatpush.msra.mxu0 0.0
    %342 = vmatpush.msra.mxu0 0.0
    %343 = vmatpush.msra.mxu0 0.0
    %344 = vmatpush.msra.mxu0 0.0
    %345 = vmatpush.msra.mxu0 0.0
    %346 = vmatpush.msra.mxu0 0.0
    %347 = vmatpush.msra.mxu0 0.0
    %348 = vmatpush.msra.mxu0 0.0
    %349 = vmatpush.msra.mxu0 0.0
    %350 = vmatpush.msra.mxu0 0.0
    %351 = vmatpush.msra.mxu0 0.0
    %352 = vmatpush.msra.mxu0 0.0
    %v353 = vand.u32 %v48, 4294901760
    %v354 = vsub.f32 %v48, %v353
    %v355 = vand.u32 %v354, 4294901760
    %v356 = vsub.f32 %v354, %v355
    %v357 = vand.u32 %v356, 4294901760
    %358 = vmatpush.msra.mxu0 %v357
    %v359 = vand.u32 %v47, 4294901760
    %v360 = vsub.f32 %v47, %v359
    %v361 = vand.u32 %v360, 4294901760
    %v362 = vsub.f32 %v360, %v361
    %v363 = vand.u32 %v362, 4294901760
    %364 = vmatpush.msra.mxu0 %v363
    %v365 = vand.u32 %v299, 4294901760
    %366 = vmatmul.f32.gmra.mxu0 %v365
    %v367 = vpop.f32.mrf.mxu0
    %v368 = vadd.f32 %v329, %v367
    %v369 = vand.u32 %v302, 4294901760
    %370 = vmatmul.f32.gmra.mxu0 %v369
    %v371 = vpop.f32.mrf.mxu0
    %v372 = vadd.f32 %v337, %v371
    %373 = vdwg.mxu0
    %374 = vmatpush.msra.mxu0 0.0
    %375 = vmatpush.msra.mxu0 0.0
    %376 = vmatpush.msra.mxu0 0.0
    %377 = vmatpush.msra.mxu0 0.0
    %378 = vmatpush.msra.mxu0 0.0
    %379 = vmatpush.msra.mxu0 0.0
    %380 = vmatpush.msra.mxu0 0.0
    %381 = vmatpush.msra.mxu0 0.0
    %382 = vmatpush.msra.mxu0 0.0
    %383 = vmatpush.msra.mxu0 0.0
    %384 = vmatpush.msra.mxu0 0.0
    %385 = vmatpush.msra.mxu0 0.0
    %386 = vmatpush.msra.mxu0 0.0
    %387 = vmatpush.msra.mxu0 0.0
    %v388 = vand.u32 %v48, 4294901760
    %v389 = vsub.f32 %v48, %v388
    %390 = vmatpush.msra.mxu0 %v389
    %v391 = vand.u32 %v47, 4294901760
    %v392 = vsub.f32 %v47, %v391
    %393 = vmatpush.msra.mxu0 %v392
    %v394 = vand.u32 %v299, 4294901760
    %v395 = vsub.f32 %v299, %v394
    %396 = vmatmul.f32.gmra.mxu0 %v395
    %v397 = vpop.f32.mrf.mxu0
    %v398 = vadd.f32 %v368, %v397
    %v399 = vand.u32 %v302, 4294901760
    %v400 = vsub.f32 %v302, %v399
    %401 = vmatmul.f32.gmra.mxu0 %v400
    %v402 = vpop.f32.mrf.mxu0
    %v403 = vadd.f32 %v372, %v402
    %404 = vdwg.mxu0
    %405 = vmatpush.msra.mxu0 0.0
    %406 = vmatpush.msra.mxu0 0.0
    %407 = vmatpush.msra.mxu0 0.0
    %408 = vmatpush.msra.mxu0 0.0
    %409 = vmatpush.msra.mxu0 0.0
    %410 = vmatpush.msra.mxu0 0.0
    %411 = vmatpush.msra.mxu0 0.0
    %412 = vmatpush.msra.mxu0 0.0
    %413 = vmatpush.msra.mxu0 0.0
    %414 = vmatpush.msra.mxu0 0.0
    %415 = vmatpush.msra.mxu0 0.0
    %416 = vmatpush.msra.mxu0 0.0
    %417 = vmatpush.msra.mxu0 0.0
    %418 = vmatpush.msra.mxu0 0.0
    %v419 = vand.u32 %v48, 4294901760
    %420 = vmatpush.msra.mxu0 %v419
    %v421 = vand.u32 %v47, 4294901760
    %422 = vmatpush.msra.mxu0 %v421
    %v423 = vand.u32 %v299, 4294901760
    %v424 = vsub.f32 %v299, %v423
    %v425 = vand.u32 %v424, 4294901760
    %426 = vmatmul.f32.gmra.mxu0 %v425
    %v427 = vpop.f32.mrf.mxu0
    %v428 = vadd.f32 %v398, %v427
    %v429 = vand.u32 %v302, 4294901760
    %v430 = vsub.f32 %v302, %v429
    %v431 = vand.u32 %v430, 4294901760
    %432 = vmatmul.f32.gmra.mxu0 %v431
    %v433 = vpop.f32.mrf.mxu0
    %v434 = vadd.f32 %v403, %v433
    %435 = vdwg.mxu0
    %436 = vmatpush.msra.mxu0 0.0
    %437 = vmatpush.msra.mxu0 0.0
    %438 = vmatpush.msra.mxu0 0.0
    %439 = vmatpush.msra.mxu0 0.0
    %440 = vmatpush.msra.mxu0 0.0
    %441 = vmatpush.msra.mxu0 0.0
    %442 = vmatpush.msra.mxu0 0.0
    %443 = vmatpush.msra.mxu0 0.0
    %444 = vmatpush.msra.mxu0 0.0
    %445 = vmatpush.msra.mxu0 0.0
    %446 = vmatpush.msra.mxu0 0.0
    %447 = vmatpush.msra.mxu0 0.0
    %448 = vmatpush.msra.mxu0 0.0
    %449 = vmatpush.msra.mxu0 0.0
    %v450 = vand.u32 %v48, 4294901760
    %v451 = vsub.f32 %v48, %v450
    %v452 = vand.u32 %v451, 4294901760
    %453 = vmatpush.msra.mxu0 %v452
    %v454 = vand.u32 %v47, 4294901760
    %v455 = vsub.f32 %v47, %v454
    %v456 = vand.u32 %v455, 4294901760
    %457 = vmatpush.msra.mxu0 %v456
    %v458 = vand.u32 %v299, 4294901760
    %459 = vmatmul.f32.gmra.mxu0 %v458
    %v460 = vpop.f32.mrf.mxu0
    %v461 = vadd.f32 %v428, %v460
    %v462 = vand.u32 %v302, 4294901760
    %463 = vmatmul.f32.gmra.mxu0 %v462
    %v464 = vpop.f32.mrf.mxu0
    %v465 = vadd.f32 %v434, %v464
    %466 = vdwg.mxu0
    %467 = vmatpush.msra.mxu0 0.0
    %468 = vmatpush.msra.mxu0 0.0
    %469 = vmatpush.msra.mxu0 0.0
    %470 = vmatpush.msra.mxu0 0.0
    %471 = vmatpush.msra.mxu0 0.0
    %472 = vmatpush.msra.mxu0 0.0
    %473 = vmatpush.msra.mxu0 0.0
    %474 = vmatpush.msra.mxu0 0.0
    %475 = vmatpush.msra.mxu0 0.0
    %476 = vmatpush.msra.mxu0 0.0
    %477 = vmatpush.msra.mxu0 0.0
    %478 = vmatpush.msra.mxu0 0.0
    %479 = vmatpush.msra.mxu0 0.0
    %480 = vmatpush.msra.mxu0 0.0
    %v481 = vand.u32 %v48, 4294901760
    %482 = vmatpush.msra.mxu0 %v481
    %v483 = vand.u32 %v47, 4294901760
    %484 = vmatpush.msra.mxu0 %v483
    %v485 = vand.u32 %v299, 4294901760
    %486 = vmatmul.f32.gmra.mxu0 %v485
    %v487 = vpop.f32.mrf.mxu0
    %v488 = vadd.f32 %v461, %v487
    %v489 = vand.u32 %v302, 4294901760
    %490 = vmatmul.f32.gmra.mxu0 %v489
    %v491 = vpop.f32.mrf.mxu0
    %v492 = vadd.f32 %v465, %v491
    %493 = vdwg.mxu0
    %v494 = vmax.f32 %v488, 0.0
    %v495 = vmax.f32 %v492, 0.0
    %vm496 = vcmask 261120
    %v497 = vsel %vm496, %v494, 0.0
    %498 = vadd.xlane.f32.xlu0 %v497
    %v499 = vpop.xlane.xlu0 %498
    %v500 = vsel %vm496, %v495, 0.0
    %501 = vadd.xlane.f32.xlu0 %v500
    %v502 = vpop.xlane.xlu0 %501
    %v503 = vrcp.pop 32.0
    %v504 = vmul.f32 32.0, %v503
    %v505 = vsub.f32 1.0, %v504
    %v506 = vmul.f32 %v503, %v505
    %v507 = vadd.f32 %v503, %v506
    %vm508 = vweird.f32 %v503
    %v509 = vsel %vm508, %v503, %v507
    %v510 = vmul.f32 %v499, %v509
    %v511 = vmul.f32 %v502, %v509
    %v512 = vsub.f32 %v494, %v510
    %v513 = vsub.f32 %v495, %v511
    %v514 = vmul.f32 %v512, %v512
    %v515 = vmul.f32 %v513, %v513
    %v516 = vsel %vm496, %v514, 0.0
    %517 = vadd.xlane.f32.xlu0 %v516
    %v518 = vpop.xlane.xlu0 %517
    %v519 = vsel %vm496, %v515, 0.0
    %520 = vadd.xlane.f32.xlu0 %v519
    %v521 = vpop.xlane.xlu0 %520
    %v522 = vmul.f32 %v518, %v509
    %v523 = vmul.f32 %v521, %v509
    %v524 = vadd.f32 %v522, 1e-05
    %v525 = vadd.f32 %v523, 1e-05
    %v526 = vrsqrt.pop %v524
    %v527 = vmul.f32 %v526, %v524
    %v528 = vmul.f32 %v527, %v526
    %v529 = vmul.f32 0.5, %v528
    %v530 = vsub.f32 1.5, %v529
    %v531 = vmul.f32 %v526, %v530
    %vm532 = vweird.f32 %v524
    %vm533 = vweird.f32 %v526
    %vm534 = vmor %vm532, %vm533
    %v535 = vsel %vm534, %v526, %v531
    %v536 = vrsqrt.pop %v525
    %v537 = vmul.f32 %v536, %v525
    %v538 = vmul.f32 %v537, %v536
    %v539 = vmul.f32 0.5, %v538
    %v540 = vsub.f32 1.5, %v539
    %v541 = vmul.f32 %v536, %v540
    %vm542 = vweird.f32 %v525
    %vm543 = vweird.f32 %v536
    %vm544 = vmor %vm542, %vm543
    %v545 = vsel %vm544, %v536, %v541
    %v546 = vmul.f32 %v512, %v535
    %v547 = vmul.f32 %v513, %v545
    %v548 = vperm.slane %v94, 0
    %v549 = vmul.f32 %v546, %v548
    %v550 = vmul.f32 %v547, %v548
    %v551 = vperm.slane %v95, 0
    %v552 = vadd.f32 %v549, %v551
    %v553 = vadd.f32 %v550, %v551
    %v555 = vsel %vm496, %v552, 0
    %v558 = vsel %vm496, %v553, 0
    %560 = vmatpush.msra.mxu0 0.0
    %561 = vmatpush.msra.mxu0 0.0
    %562 = vmatpush.msra.mxu0 0.0
    %563 = vmatpush.msra.mxu0 0.0
    %564 = vmatpush.msra.mxu0 0.0
    %565 = vmatpush.msra.mxu0 0.0
    %566 = vmatpush.msra.mxu0 0.0
    %567 = vmatpush.msra.mxu0 0.0
    %568 = vmatpush.msra.mxu0 0.0
    %569 = vmatpush.msra.mxu0 0.0
    %570 = vmatpush.msra.mxu0 0.0
    %571 = vmatpush.msra.mxu0 0.0
    %v572 = vand.u32 %v52, 4294901760
    %573 = vmatpush.msra.mxu0 %v572
    %v574 = vand.u32 %v51, 4294901760
    %575 = vmatpush.msra.mxu0 %v574
    %v576 = vand.u32 %v50, 4294901760
    %577 = vmatpush.msra.mxu0 %v576
    %v578 = vand.u32 %v49, 4294901760
    %579 = vmatpush.msra.mxu0 %v578
    %v580 = vand.u32 %v555, 4294901760
    %v581 = vsub.f32 %v555, %v580
    %v582 = vand.u32 %v581, 4294901760
    %v583 = vsub.f32 %v581, %v582
    %v584 = vand.u32 %v583, 4294901760
    %585 = vmatmul.f32.gmra.mxu0 %v584
    %v586 = vpop.f32.mrf.mxu0
    %v587 = vadd.f32 0.0, %v586
    %v588 = vand.u32 %v558, 4294901760
    %v589 = vsub.f32 %v558, %v588
    %v590 = vand.u32 %v589, 4294901760
    %v591 = vsub.f32 %v589, %v590
    %v592 = vand.u32 %v591, 4294901760
    %593 = vmatmul.f32.gmra.mxu0 %v592
    %v594 = vpop.f32.mrf.mxu0
    %v595 = vadd.f32 0.0, %v594
    %596 = vdwg.mxu0
    %597 = vmatpush.msra.mxu0 0.0
    %598 = vmatpush.msra.mxu0 0.0
    %599 = vmatpush.msra.mxu0 0.0
    %600 = vmatpush.msra.mxu0 0.0
    %601 = vmatpush.msra.mxu0 0.0
    %602 = vmatpush.msra.mxu0 0.0
    %603 = vmatpush.msra.mxu0 0.0
    %604 = vmatpush.msra.mxu0 0.0
    %605 = vmatpush.msra.mxu0 0.0
    %606 = vmatpush.msra.mxu0 0.0
    %607 = vmatpush.msra.mxu0 0.0
    %608 = vmatpush.msra.mxu0 0.0
    %v609 = vand.u32 %v52, 4294901760
    %v610 = vsub.f32 %v52, %v609
    %v611 = vand.u32 %v610, 4294901760
    %v612 = vsub.f32 %v610, %v611
    %v613 = vand.u32 %v612, 4294901760
    %614 = vmatpush.msra.mxu0 %v613
    %v615 = vand.u32 %v51, 4294901760
    %v616 = vsub.f32 %v51, %v615
    %v617 = vand.u32 %v616, 4294901760
    %v618 = vsub.f32 %v616, %v617
    %v619 = vand.u32 %v618, 4294901760
    %620 = vmatpush.msra.mxu0 %v619
    %v621 = vand.u32 %v50, 4294901760
    %v622 = vsub.f32 %v50, %v621
    %v623 = vand.u32 %v622, 4294901760
    %v624 = vsub.f32 %v622, %v623
    %v625 = vand.u32 %v624, 4294901760
    %626 = vmatpush.msra.mxu0 %v625
    %v627 = vand.u32 %v49, 4294901760
    %v628 = vsub.f32 %v49, %v627
    %v629 = vand.u32 %v628, 4294901760
    %v630 = vsub.f32 %v628, %v629
    %v631 = vand.u32 %v630, 4294901760
    %632 = vmatpush.msra.mxu0 %v631
    %v633 = vand.u32 %v555, 4294901760
    %634 = vmatmul.f32.gmra.mxu0 %v633
    %v635 = vpop.f32.mrf.mxu0
    %v636 = vadd.f32 %v587, %v635
    %v637 = vand.u32 %v558, 4294901760
    %638 = vmatmul.f32.gmra.mxu0 %v637
    %v639 = vpop.f32.mrf.mxu0
    %v640 = vadd.f32 %v595, %v639
    %641 = vdwg.mxu0
    %642 = vmatpush.msra.mxu0 0.0
    %643 = vmatpush.msra.mxu0 0.0
    %644 = vmatpush.msra.mxu0 0.0
    %645 = vmatpush.msra.mxu0 0.0
    %646 = vmatpush.msra.mxu0 0.0
    %647 = vmatpush.msra.mxu0 0.0
    %648 = vmatpush.msra.mxu0 0.0
    %649 = vmatpush.msra.mxu0 0.0
    %650 = vmatpush.msra.mxu0 0.0
    %651 = vmatpush.msra.mxu0 0.0
    %652 = vmatpush.msra.mxu0 0.0
    %653 = vmatpush.msra.mxu0 0.0
    %v654 = vand.u32 %v52, 4294901760
    %v655 = vsub.f32 %v52, %v654
    %656 = vmatpush.msra.mxu0 %v655
    %v657 = vand.u32 %v51, 4294901760
    %v658 = vsub.f32 %v51, %v657
    %659 = vmatpush.msra.mxu0 %v658
    %v660 = vand.u32 %v50, 4294901760
    %v661 = vsub.f32 %v50, %v660
    %662 = vmatpush.msra.mxu0 %v661
    %v663 = vand.u32 %v49, 4294901760
    %v664 = vsub.f32 %v49, %v663
    %665 = vmatpush.msra.mxu0 %v664
    %v666 = vand.u32 %v555, 4294901760
    %v667 = vsub.f32 %v555, %v666
    %668 = vmatmul.f32.gmra.mxu0 %v667
    %v669 = vpop.f32.mrf.mxu0
    %v670 = vadd.f32 %v636, %v669
    %v671 = vand.u32 %v558, 4294901760
    %v672 = vsub.f32 %v558, %v671
    %673 = vmatmul.f32.gmra.mxu0 %v672
    %v674 = vpop.f32.mrf.mxu0
    %v675 = vadd.f32 %v640, %v674
    %676 = vdwg.mxu0
    %677 = vmatpush.msra.mxu0 0.0
    %678 = vmatpush.msra.mxu0 0.0
    %679 = vmatpush.msra.mxu0 0.0
    %680 = vmatpush.msra.mxu0 0.0
    %681 = vmatpush.msra.mxu0 0.0
    %682 = vmatpush.msra.mxu0 0.0
    %683 = vmatpush.msra.mxu0 0.0
    %684 = vmatpush.msra.mxu0 0.0
    %685 = vmatpush.msra.mxu0 0.0
    %686 = vmatpush.msra.mxu0 0.0
    %687 = vmatpush.msra.mxu0 0.0
    %688 = vmatpush.msra.mxu0 0.0
    %v689 = vand.u32 %v52, 4294901760
    %690 = vmatpush.msra.mxu0 %v689
    %v691 = vand.u32 %v51, 4294901760
    %692 = vmatpush.msra.mxu0 %v691
    %v693 = vand.u32 %v50, 4294901760
    %694 = vmatpush.msra.mxu0 %v693
    %v695 = vand.u32 %v49, 4294901760
    %696 = vmatpush.msra.mxu0 %v695
    %v697 = vand.u32 %v555, 4294901760
    %v698 = vsub.f32 %v555, %v697
    %v699 = vand.u32 %v698, 4294901760
    %700 = vmatmul.f32.gmra.mxu0 %v699
    %v701 = vpop.f32.mrf.mxu0
    %v702 = vadd.f32 %v670, %v701
    %v703 = vand.u32 %v558, 4294901760
    %v704 = vsub.f32 %v558, %v703
    %v705 = vand.u32 %v704, 4294901760
    %706 = vmatmul.f32.gmra.mxu0 %v705
    %v707 = vpop.f32.mrf.mxu0
    %v708 = vadd.f32 %v675, %v707
    %709 = vdwg.mxu0
    %710 = vmatpush.msra.mxu0 0.0
    %711 = vmatpush.msra.mxu0 0.0
    %712 = vmatpush.msra.mxu0 0.0
    %713 = vmatpush.msra.mxu0 0.0
    %714 = vmatpush.msra.mxu0 0.0
    %715 = vmatpush.msra.mxu0 0.0
    %716 = vmatpush.msra.mxu0 0.0
    %717 = vmatpush.msra.mxu0 0.0
    %718 = vmatpush.msra.mxu0 0.0
    %719 = vmatpush.msra.mxu0 0.0
    %720 = vmatpush.msra.mxu0 0.0
    %721 = vmatpush.msra.mxu0 0.0
    %v722 = vand.u32 %v52, 4294901760
    %v723 = vsub.f32 %v52, %v722
    %v724 = vand.u32 %v723, 4294901760
    %725 = vmatpush.msra.mxu0 %v724
    %v726 = vand.u32 %v51, 4294901760
    %v727 = vsub.f32 %v51, %v726
    %v728 = vand.u32 %v727, 4294901760
    %729 = vmatpush.msra.mxu0 %v728
    %v730 = vand.u32 %v50, 4294901760
    %v731 = vsub.f32 %v50, %v730
    %v732 = vand.u32 %v731, 4294901760
    %733 = vmatpush.msra.mxu0 %v732
    %v734 = vand.u32 %v49, 4294901760
    %v735 = vsub.f32 %v49, %v734
    %v736 = vand.u32 %v735, 4294901760
    %737 = vmatpush.msra.mxu0 %v736
    %v738 = vand.u32 %v555, 4294901760
    %739 = vmatmul.f32.gmra.mxu0 %v738
    %v740 = vpop.f32.mrf.mxu0
    %v741 = vadd.f32 %v702, %v740
    %v742 = vand.u32 %v558, 4294901760
    %743 = vmatmul.f32.gmra.mxu0 %v742
    %v744 = vpop.f32.mrf.mxu0
    %v745 = vadd.f32 %v708, %v744
    %746 = vdwg.mxu0
    %747 = vmatpush.msra.mxu0 0.0
    %748 = vmatpush.msra.mxu0 0.0
    %749 = vmatpush.msra.mxu0 0.0
    %750 = vmatpush.msra.mxu0 0.0
    %751 = vmatpush.msra.mxu0 0.0
    %752 = vmatpush.msra.mxu0 0.0
    %753 = vmatpush.msra.mxu0 0.0
    %754 = vmatpush.msra.mxu0 0.0
    %755 = vmatpush.msra.mxu0 0.0
    %756 = vmatpush.msra.mxu0 0.0
    %757 = vmatpush.msra.mxu0 0.0
    %758 = vmatpush.msra.mxu0 0.0
    %v759 = vand.u32 %v52, 4294901760
    %760 = vmatpush.msra.mxu0 %v759
    %v761 = vand.u32 %v51, 4294901760
    %762 = vmatpush.msra.mxu0 %v761
    %v763 = vand.u32 %v50, 4294901760
    %764 = vmatpush.msra.mxu0 %v763
    %v765 = vand.u32 %v49, 4294901760
    %766 = vmatpush.msra.mxu0 %v765
    %v767 = vand.u32 %v555, 4294901760
    %768 = vmatmul.f32.gmra.mxu0 %v767
    %v769 = vpop.f32.mrf.mxu0
    %v770 = vadd.f32 %v741, %v769
    %v771 = vand.u32 %v558, 4294901760
    %772 = vmatmul.f32.gmra.mxu0 %v771
    %v773 = vpop.f32.mrf.mxu0
    %v774 = vadd.f32 %v745, %v773
    %775 = vdwg.mxu0
    %776 = vmatpush.msra.mxu0 0.0
    %777 = vmatpush.msra.mxu0 0.0
    %778 = vmatpush.msra.mxu0 0.0
    %779 = vmatpush.msra.mxu0 0.0
    %780 = vmatpush.msra.mxu0 0.0
    %781 = vmatpush.msra.mxu0 0.0
    %782 = vmatpush.msra.mxu0 0.0
    %783 = vmatpush.msra.mxu0 0.0
    %784 = vmatpush.msra.mxu0 0.0
    %785 = vmatpush.msra.mxu0 0.0
    %786 = vmatpush.msra.mxu0 0.0
    %787 = vmatpush.msra.mxu0 0.0
    %v788 = vand.u32 %v56, 4294901760
    %789 = vmatpush.msra.mxu0 %v788
    %v790 = vand.u32 %v55, 4294901760
    %791 = vmatpush.msra.mxu0 %v790
    %v792 = vand.u32 %v54, 4294901760
    %793 = vmatpush.msra.mxu0 %v792
    %v794 = vand.u32 %v53, 4294901760
    %795 = vmatpush.msra.mxu0 %v794
    %v796 = vand.u32 %v555, 4294901760
    %v797 = vsub.f32 %v555, %v796
    %v798 = vand.u32 %v797, 4294901760
    %v799 = vsub.f32 %v797, %v798
    %v800 = vand.u32 %v799, 4294901760
    %801 = vmatmul.f32.gmra.mxu0 %v800
    %v802 = vpop.f32.mrf.mxu0
    %v803 = vadd.f32 0.0, %v802
    %v804 = vand.u32 %v558, 4294901760
    %v805 = vsub.f32 %v558, %v804
    %v806 = vand.u32 %v805, 4294901760
    %v807 = vsub.f32 %v805, %v806
    %v808 = vand.u32 %v807, 4294901760
    %809 = vmatmul.f32.gmra.mxu0 %v808
    %v810 = vpop.f32.mrf.mxu0
    %v811 = vadd.f32 0.0, %v810
    %812 = vdwg.mxu0
    %813 = vmatpush.msra.mxu0 0.0
    %814 = vmatpush.msra.mxu0 0.0
    %815 = vmatpush.msra.mxu0 0.0
    %816 = vmatpush.msra.mxu0 0.0
    %817 = vmatpush.msra.mxu0 0.0
    %818 = vmatpush.msra.mxu0 0.0
    %819 = vmatpush.msra.mxu0 0.0
    %820 = vmatpush.msra.mxu0 0.0
    %821 = vmatpush.msra.mxu0 0.0
    %822 = vmatpush.msra.mxu0 0.0
    %823 = vmatpush.msra.mxu0 0.0
    %824 = vmatpush.msra.mxu0 0.0
    %v825 = vand.u32 %v56, 4294901760
    %v826 = vsub.f32 %v56, %v825
    %v827 = vand.u32 %v826, 4294901760
    %v828 = vsub.f32 %v826, %v827
    %v829 = vand.u32 %v828, 4294901760
    %830 = vmatpush.msra.mxu0 %v829
    %v831 = vand.u32 %v55, 4294901760
    %v832 = vsub.f32 %v55, %v831
    %v833 = vand.u32 %v832, 4294901760
    %v834 = vsub.f32 %v832, %v833
    %v835 = vand.u32 %v834, 4294901760
    %836 = vmatpush.msra.mxu0 %v835
    %v837 = vand.u32 %v54, 4294901760
    %v838 = vsub.f32 %v54, %v837
    %v839 = vand.u32 %v838, 4294901760
    %v840 = vsub.f32 %v838, %v839
    %v841 = vand.u32 %v840, 4294901760
    %842 = vmatpush.msra.mxu0 %v841
    %v843 = vand.u32 %v53, 4294901760
    %v844 = vsub.f32 %v53, %v843
    %v845 = vand.u32 %v844, 4294901760
    %v846 = vsub.f32 %v844, %v845
    %v847 = vand.u32 %v846, 4294901760
    %848 = vmatpush.msra.mxu0 %v847
    %v849 = vand.u32 %v555, 4294901760
    %850 = vmatmul.f32.gmra.mxu0 %v849
    %v851 = vpop.f32.mrf.mxu0
    %v852 = vadd.f32 %v803, %v851
    %v853 = vand.u32 %v558, 4294901760
    %854 = vmatmul.f32.gmra.mxu0 %v853
    %v855 = vpop.f32.mrf.mxu0
    %v856 = vadd.f32 %v811, %v855
    %857 = vdwg.mxu0
    %858 = vmatpush.msra.mxu0 0.0
    %859 = vmatpush.msra.mxu0 0.0
    %860 = vmatpush.msra.mxu0 0.0
    %861 = vmatpush.msra.mxu0 0.0
    %862 = vmatpush.msra.mxu0 0.0
    %863 = vmatpush.msra.mxu0 0.0
    %864 = vmatpush.msra.mxu0 0.0
    %865 = vmatpush.msra.mxu0 0.0
    %866 = vmatpush.msra.mxu0 0.0
    %867 = vmatpush.msra.mxu0 0.0
    %868 = vmatpush.msra.mxu0 0.0
    %869 = vmatpush.msra.mxu0 0.0
    %v870 = vand.u32 %v56, 4294901760
    %v871 = vsub.f32 %v56, %v870
    %872 = vmatpush.msra.mxu0 %v871
    %v873 = vand.u32 %v55, 4294901760
    %v874 = vsub.f32 %v55, %v873
    %875 = vmatpush.msra.mxu0 %v874
    %v876 = vand.u32 %v54, 4294901760
    %v877 = vsub.f32 %v54, %v876
    %878 = vmatpush.msra.mxu0 %v877
    %v879 = vand.u32 %v53, 4294901760
    %v880 = vsub.f32 %v53, %v879
    %881 = vmatpush.msra.mxu0 %v880
    %v882 = vand.u32 %v555, 4294901760
    %v883 = vsub.f32 %v555, %v882
    %884 = vmatmul.f32.gmra.mxu0 %v883
    %v885 = vpop.f32.mrf.mxu0
    %v886 = vadd.f32 %v852, %v885
    %v887 = vand.u32 %v558, 4294901760
    %v888 = vsub.f32 %v558, %v887
    %889 = vmatmul.f32.gmra.mxu0 %v888
    %v890 = vpop.f32.mrf.mxu0
    %v891 = vadd.f32 %v856, %v890
    %892 = vdwg.mxu0
    %893 = vmatpush.msra.mxu0 0.0
    %894 = vmatpush.msra.mxu0 0.0
    %895 = vmatpush.msra.mxu0 0.0
    %896 = vmatpush.msra.mxu0 0.0
    %897 = vmatpush.msra.mxu0 0.0
    %898 = vmatpush.msra.mxu0 0.0
    %899 = vmatpush.msra.mxu0 0.0
    %900 = vmatpush.msra.mxu0 0.0
    %901 = vmatpush.msra.mxu0 0.0
    %902 = vmatpush.msra.mxu0 0.0
    %903 = vmatpush.msra.mxu0 0.0
    %904 = vmatpush.msra.mxu0 0.0
    %v905 = vand.u32 %v56, 4294901760
    %906 = vmatpush.msra.mxu0 %v905
    %v907 = vand.u32 %v55, 4294901760
    %908 = vmatpush.msra.mxu0 %v907
    %v909 = vand.u32 %v54, 4294901760
    %910 = vmatpush.msra.mxu0 %v909
    %v911 = vand.u32 %v53, 4294901760
    %912 = vmatpush.msra.mxu0 %v911
    %v913 = vand.u32 %v555, 4294901760
    %v914 = vsub.f32 %v555, %v913
    %v915 = vand.u32 %v914, 4294901760
    %916 = vmatmul.f32.gmra.mxu0 %v915
    %v917 = vpop.f32.mrf.mxu0
    %v918 = vadd.f32 %v886, %v917
    %v919 = vand.u32 %v558, 4294901760
    %v920 = vsub.f32 %v558, %v919
    %v921 = vand.u32 %v920, 4294901760
    %922 = vmatmul.f32.gmra.mxu0 %v921
    %v923 = vpop.f32.mrf.mxu0
    %v924 = vadd.f32 %v891, %v923
    %925 = vdwg.mxu0
    %926 = vmatpush.msra.mxu0 0.0
    %927 = vmatpush.msra.mxu0 0.0
    %928 = vmatpush.msra.mxu0 0.0
    %929 = vmatpush.msra.mxu0 0.0
    %930 = vmatpush.msra.mxu0 0.0
    %931 = vmatpush.msra.mxu0 0.0
    %932 = vmatpush.msra.mxu0 0.0
    %933 = vmatpush.msra.mxu0 0.0
    %934 = vmatpush.msra.mxu0 0.0
    %935 = vmatpush.msra.mxu0 0.0
    %936 = vmatpush.msra.mxu0 0.0
    %937 = vmatpush.msra.mxu0 0.0
    %v938 = vand.u32 %v56, 4294901760
    %v939 = vsub.f32 %v56, %v938
    %v940 = vand.u32 %v939, 4294901760
    %941 = vmatpush.msra.mxu0 %v940
    %v942 = vand.u32 %v55, 4294901760
    %v943 = vsub.f32 %v55, %v942
    %v944 = vand.u32 %v943, 4294901760
    %945 = vmatpush.msra.mxu0 %v944
    %v946 = vand.u32 %v54, 4294901760
    %v947 = vsub.f32 %v54, %v946
    %v948 = vand.u32 %v947, 4294901760
    %949 = vmatpush.msra.mxu0 %v948
    %v950 = vand.u32 %v53, 4294901760
    %v951 = vsub.f32 %v53, %v950
    %v952 = vand.u32 %v951, 4294901760
    %953 = vmatpush.msra.mxu0 %v952
    %v954 = vand.u32 %v555, 4294901760
    %955 = vmatmul.f32.gmra.mxu0 %v954
    %v956 = vpop.f32.mrf.mxu0
    %v957 = vadd.f32 %v918, %v956
    %v958 = vand.u32 %v558, 4294901760
    %959 = vmatmul.f32.gmra.mxu0 %v958
    %v960 = vpop.f32.mrf.mxu0
    %v961 = vadd.f32 %v924, %v960
    %962 = vdwg.mxu0
    %963 = vmatpush.msra.mxu0 0.0
    %964 = vmatpush.msra.mxu0 0.0
    %965 = vmatpush.msra.mxu0 0.0
    %966 = vmatpush.msra.mxu0 0.0
    %967 = vmatpush.msra.mxu0 0.0
    %968 = vmatpush.msra.mxu0 0.0
    %969 = vmatpush.msra.mxu0 0.0
    %970 = vmatpush.msra.mxu0 0.0
    %971 = vmatpush.msra.mxu0 0.0
    %972 = vmatpush.msra.mxu0 0.0
    %973 = vmatpush.msra.mxu0 0.0
    %974 = vmatpush.msra.mxu0 0.0
    %v975 = vand.u32 %v56, 4294901760
    %976 = vmatpush.msra.mxu0 %v975
    %v977 = vand.u32 %v55, 4294901760
    %978 = vmatpush.msra.mxu0 %v977
    %v979 = vand.u32 %v54, 4294901760
    %980 = vmatpush.msra.mxu0 %v979
    %v981 = vand.u32 %v53, 4294901760
    %982 = vmatpush.msra.mxu0 %v981
    %v983 = vand.u32 %v555, 4294901760
    %984 = vmatmul.f32.gmra.mxu0 %v983
    %v985 = vpop.f32.mrf.mxu0
    %v986 = vadd.f32 %v957, %v985
    %v987 = vand.u32 %v558, 4294901760
    %988 = vmatmul.f32.gmra.mxu0 %v987
    %v989 = vpop.f32.mrf.mxu0
    %v990 = vadd.f32 %v961, %v989
    %991 = vdwg.mxu0
    %992 = vmatpush.msra.mxu0 0.0
    %993 = vmatpush.msra.mxu0 0.0
    %994 = vmatpush.msra.mxu0 0.0
    %995 = vmatpush.msra.mxu0 0.0
    %996 = vmatpush.msra.mxu0 0.0
    %997 = vmatpush.msra.mxu0 0.0
    %998 = vmatpush.msra.mxu0 0.0
    %999 = vmatpush.msra.mxu0 0.0
    %1000 = vmatpush.msra.mxu0 0.0
    %1001 = vmatpush.msra.mxu0 0.0
    %1002 = vmatpush.msra.mxu0 0.0
    %1003 = vmatpush.msra.mxu0 0.0
    %v1004 = vand.u32 %v60, 4294901760
    %1005 = vmatpush.msra.mxu0 %v1004
    %v1006 = vand.u32 %v59, 4294901760
    %1007 = vmatpush.msra.mxu0 %v1006
    %v1008 = vand.u32 %v58, 4294901760
    %1009 = vmatpush.msra.mxu0 %v1008
    %v1010 = vand.u32 %v57, 4294901760
    %1011 = vmatpush.msra.mxu0 %v1010
    %v1012 = vand.u32 %v555, 4294901760
    %v1013 = vsub.f32 %v555, %v1012
    %v1014 = vand.u32 %v1013, 4294901760
    %v1015 = vsub.f32 %v1013, %v1014
    %v1016 = vand.u32 %v1015, 4294901760
    %1017 = vmatmul.f32.gmra.mxu0 %v1016
    %v1018 = vpop.f32.mrf.mxu0
    %v1019 = vadd.f32 0.0, %v1018
    %v1020 = vand.u32 %v558, 4294901760
    %v1021 = vsub.f32 %v558, %v1020
    %v1022 = vand.u32 %v1021, 4294901760
    %v1023 = vsub.f32 %v1021, %v1022
    %v1024 = vand.u32 %v1023, 4294901760
    %1025 = vmatmul.f32.gmra.mxu0 %v1024
    %v1026 = vpop.f32.mrf.mxu0
    %v1027 = vadd.f32 0.0, %v1026
    %1028 = vdwg.mxu0
    %1029 = vmatpush.msra.mxu0 0.0
    %1030 = vmatpush.msra.mxu0 0.0
    %1031 = vmatpush.msra.mxu0 0.0
    %1032 = vmatpush.msra.mxu0 0.0
    %1033 = vmatpush.msra.mxu0 0.0
    %1034 = vmatpush.msra.mxu0 0.0
    %1035 = vmatpush.msra.mxu0 0.0
    %1036 = vmatpush.msra.mxu0 0.0
    %1037 = vmatpush.msra.mxu0 0.0
    %1038 = vmatpush.msra.mxu0 0.0
    %1039 = vmatpush.msra.mxu0 0.0
    %1040 = vmatpush.msra.mxu0 0.0
    %v1041 = vand.u32 %v60, 4294901760
    %v1042 = vsub.f32 %v60, %v1041
    %v1043 = vand.u32 %v1042, 4294901760
    %v1044 = vsub.f32 %v1042, %v1043
    %v1045 = vand.u32 %v1044, 4294901760
    %1046 = vmatpush.msra.mxu0 %v1045
    %v1047 = vand.u32 %v59, 4294901760
    %v1048 = vsub.f32 %v59, %v1047
    %v1049 = vand.u32 %v1048, 4294901760
    %v1050 = vsub.f32 %v1048, %v1049
    %v1051 = vand.u32 %v1050, 4294901760
    %1052 = vmatpush.msra.mxu0 %v1051
    %v1053 = vand.u32 %v58, 4294901760
    %v1054 = vsub.f32 %v58, %v1053
    %v1055 = vand.u32 %v1054, 4294901760
    %v1056 = vsub.f32 %v1054, %v1055
    %v1057 = vand.u32 %v1056, 4294901760
    %1058 = vmatpush.msra.mxu0 %v1057
    %v1059 = vand.u32 %v57, 4294901760
    %v1060 = vsub.f32 %v57, %v1059
    %v1061 = vand.u32 %v1060, 4294901760
    %v1062 = vsub.f32 %v1060, %v1061
    %v1063 = vand.u32 %v1062, 4294901760
    %1064 = vmatpush.msra.mxu0 %v1063
    %v1065 = vand.u32 %v555, 4294901760
    %1066 = vmatmul.f32.gmra.mxu0 %v1065
    %v1067 = vpop.f32.mrf.mxu0
    %v1068 = vadd.f32 %v1019, %v1067
    %v1069 = vand.u32 %v558, 4294901760
    %1070 = vmatmul.f32.gmra.mxu0 %v1069
    %v1071 = vpop.f32.mrf.mxu0
    %v1072 = vadd.f32 %v1027, %v1071
    %1073 = vdwg.mxu0
    %1074 = vmatpush.msra.mxu0 0.0
    %1075 = vmatpush.msra.mxu0 0.0
    %1076 = vmatpush.msra.mxu0 0.0
    %1077 = vmatpush.msra.mxu0 0.0
    %1078 = vmatpush.msra.mxu0 0.0
    %1079 = vmatpush.msra.mxu0 0.0
    %1080 = vmatpush.msra.mxu0 0.0
    %1081 = vmatpush.msra.mxu0 0.0
    %1082 = vmatpush.msra.mxu0 0.0
    %1083 = vmatpush.msra.mxu0 0.0
    %1084 = vmatpush.msra.mxu0 0.0
    %1085 = vmatpush.msra.mxu0 0.0
    %v1086 = vand.u32 %v60, 4294901760
    %v1087 = vsub.f32 %v60, %v1086
    %1088 = vmatpush.msra.mxu0 %v1087
    %v1089 = vand.u32 %v59, 4294901760
    %v1090 = vsub.f32 %v59, %v1089
    %1091 = vmatpush.msra.mxu0 %v1090
    %v1092 = vand.u32 %v58, 4294901760
    %v1093 = vsub.f32 %v58, %v1092
    %1094 = vmatpush.msra.mxu0 %v1093
    %v1095 = vand.u32 %v57, 4294901760
    %v1096 = vsub.f32 %v57, %v1095
    %1097 = vmatpush.msra.mxu0 %v1096
    %v1098 = vand.u32 %v555, 4294901760
    %v1099 = vsub.f32 %v555, %v1098
    %1100 = vmatmul.f32.gmra.mxu0 %v1099
    %v1101 = vpop.f32.mrf.mxu0
    %v1102 = vadd.f32 %v1068, %v1101
    %v1103 = vand.u32 %v558, 4294901760
    %v1104 = vsub.f32 %v558, %v1103
    %1105 = vmatmul.f32.gmra.mxu0 %v1104
    %v1106 = vpop.f32.mrf.mxu0
    %v1107 = vadd.f32 %v1072, %v1106
    %1108 = vdwg.mxu0
    %1109 = vmatpush.msra.mxu0 0.0
    %1110 = vmatpush.msra.mxu0 0.0
    %1111 = vmatpush.msra.mxu0 0.0
    %1112 = vmatpush.msra.mxu0 0.0
    %1113 = vmatpush.msra.mxu0 0.0
    %1114 = vmatpush.msra.mxu0 0.0
    %1115 = vmatpush.msra.mxu0 0.0
    %1116 = vmatpush.msra.mxu0 0.0
    %1117 = vmatpush.msra.mxu0 0.0
    %1118 = vmatpush.msra.mxu0 0.0
    %1119 = vmatpush.msra.mxu0 0.0
    %1120 = vmatpush.msra.mxu0 0.0
    %v1121 = vand.u32 %v60, 4294901760
    %1122 = vmatpush.msra.mxu0 %v1121
    %v1123 = vand.u32 %v59, 4294901760
    %1124 = vmatpush.msra.mxu0 %v1123
    %v1125 = vand.u32 %v58, 4294901760
    %1126 = vmatpush.msra.mxu0 %v1125
    %v1127 = vand.u32 %v57, 4294901760
    %1128 = vmatpush.msra.mxu0 %v1127
    %v1129 = vand.u32 %v555, 4294901760
    %v1130 = vsub.f32 %v555, %v1129
    %v1131 = vand.u32 %v1130, 4294901760
    %1132 = vmatmul.f32.gmra.mxu0 %v1131
    %v1133 = vpop.f32.mrf.mxu0
    %v1134 = vadd.f32 %v1102, %v1133
    %v1135 = vand.u32 %v558, 4294901760
    %v1136 = vsub.f32 %v558, %v1135
    %v1137 = vand.u32 %v1136, 4294901760
    %1138 = vmatmul.f32.gmra.mxu0 %v1137
    %v1139 = vpop.f32.mrf.mxu0
    %v1140 = vadd.f32 %v1107, %v1139
    %1141 = vdwg.mxu0
    %1142 = vmatpush.msra.mxu0 0.0
    %1143 = vmatpush.msra.mxu0 0.0
    %1144 = vmatpush.msra.mxu0 0.0
    %1145 = vmatpush.msra.mxu0 0.0
    %1146 = vmatpush.msra.mxu0 0.0
    %1147 = vmatpush.msra.mxu0 0.0
    %1148 = vmatpush.msra.mxu0 0.0
    %1149 = vmatpush.msra.mxu0 0.0
    %1150 = vmatpush.msra.mxu0 0.0
    %1151 = vmatpush.msra.mxu0 0.0
    %1152 = vmatpush.msra.mxu0 0.0
    %1153 = vmatpush.msra.mxu0 0.0
    %v1154 = vand.u32 %v60, 4294901760
    %v1155 = vsub.f32 %v60, %v1154
    %v1156 = vand.u32 %v1155, 4294901760
    %1157 = vmatpush.msra.mxu0 %v1156
    %v1158 = vand.u32 %v59, 4294901760
    %v1159 = vsub.f32 %v59, %v1158
    %v1160 = vand.u32 %v1159, 4294901760
    %1161 = vmatpush.msra.mxu0 %v1160
    %v1162 = vand.u32 %v58, 4294901760
    %v1163 = vsub.f32 %v58, %v1162
    %v1164 = vand.u32 %v1163, 4294901760
    %1165 = vmatpush.msra.mxu0 %v1164
    %v1166 = vand.u32 %v57, 4294901760
    %v1167 = vsub.f32 %v57, %v1166
    %v1168 = vand.u32 %v1167, 4294901760
    %1169 = vmatpush.msra.mxu0 %v1168
    %v1170 = vand.u32 %v555, 4294901760
    %1171 = vmatmul.f32.gmra.mxu0 %v1170
    %v1172 = vpop.f32.mrf.mxu0
    %v1173 = vadd.f32 %v1134, %v1172
    %v1174 = vand.u32 %v558, 4294901760
    %1175 = vmatmul.f32.gmra.mxu0 %v1174
    %v1176 = vpop.f32.mrf.mxu0
    %v1177 = vadd.f32 %v1140, %v1176
    %1178 = vdwg.mxu0
    %1179 = vmatpush.msra.mxu0 0.0
    %1180 = vmatpush.msra.mxu0 0.0
    %1181 = vmatpush.msra.mxu0 0.0
    %1182 = vmatpush.msra.mxu0 0.0
    %1183 = vmatpush.msra.mxu0 0.0
    %1184 = vmatpush.msra.mxu0 0.0
    %1185 = vmatpush.msra.mxu0 0.0
    %1186 = vmatpush.msra.mxu0 0.0
    %1187 = vmatpush.msra.mxu0 0.0
    %1188 = vmatpush.msra.mxu0 0.0
    %1189 = vmatpush.msra.mxu0 0.0
    %1190 = vmatpush.msra.mxu0 0.0
    %v1191 = vand.u32 %v60, 4294901760
    %1192 = vmatpush.msra.mxu0 %v1191
    %v1193 = vand.u32 %v59, 4294901760
    %1194 = vmatpush.msra.mxu0 %v1193
    %v1195 = vand.u32 %v58, 4294901760
    %1196 = vmatpush.msra.mxu0 %v1195
    %v1197 = vand.u32 %v57, 4294901760
    %1198 = vmatpush.msra.mxu0 %v1197
    %v1199 = vand.u32 %v555, 4294901760
    %1200 = vmatmul.f32.gmra.mxu0 %v1199
    %v1201 = vpop.f32.mrf.mxu0
    %v1202 = vadd.f32 %v1173, %v1201
    %v1203 = vand.u32 %v558, 4294901760
    %1204 = vmatmul.f32.gmra.mxu0 %v1203
    %v1205 = vpop.f32.mrf.mxu0
    %v1206 = vadd.f32 %v1177, %v1205
    %1207 = vdwg.mxu0
    %v1210 = vrot.slane %v770, 1
    %v1211 = vrot.slane %v770, 2
    %v1212 = vrot.slane %v770, 3
    %v1213 = vrot.slane %v770, 4
    %v1214 = vrot.slane %v770, 5
    %v1215 = vrot.slane %v770, 6
    %v1216 = vrot.slane %v770, 7
    %v1217 = vrot.slane %v774, 1
    %v1218 = vrot.slane %v774, 2
    %v1219 = vrot.slane %v774, 3
    %v1220 = vrot.slane %v774, 4
    %v1221 = vrot.slane %v774, 5
    %v1222 = vrot.slane %v774, 6
    %v1223 = vrot.slane %v774, 7
    %v1224 = vperm.slane %v770, 0
    %v1225 = vperm.slane %v1210, 0
    %v1226 = vperm.slane %v1211, 0
    %v1227 = vperm.slane %v1212, 0
    %v1228 = vperm.slane %v1213, 0
    %v1229 = vperm.slane %v1214, 0
    %v1230 = vperm.slane %v1215, 0
    %v1231 = vperm.slane %v1216, 0
    %v1232 = vperm.slane %v774, 0
    %v1233 = vperm.slane %v1217, 0
    %v1234 = vperm.slane %v1218, 0
    %v1235 = vperm.slane %v1219, 0
    %v1236 = vperm.slane %v1220, 0
    %v1237 = vperm.slane %v1221, 0
    %v1238 = vperm.slane %v1222, 0
    %v1239 = vperm.slane %v1223, 0
    %v1256 = vmul.f32 %v1224, %v986
    %v1257 = vmul.f32 %v1225, %v986
    %v1258 = vmul.f32 %v1226, %v986
    %v1259 = vmul.f32 %v1227, %v986
    %v1260 = vmul.f32 %v1228, %v986
    %v1261 = vmul.f32 %v1229, %v986
    %v1262 = vmul.f32 %v1230, %v986
    %v1263 = vmul.f32 %v1231, %v986
    %v1264 = vmul.f32 %v1232, %v990
    %v1265 = vmul.f32 %v1233, %v990
    %v1266 = vmul.f32 %v1234, %v990
    %v1267 = vmul.f32 %v1235, %v990
    %v1268 = vmul.f32 %v1236, %v990
    %v1269 = vmul.f32 %v1237, %v990
    %v1270 = vmul.f32 %v1238, %v990
    %v1271 = vmul.f32 %v1239, %v990
    %v1273 = vsel %vm496, %v1256, 0
    %v1276 = vsel %vm496, %v1257, 0
    %v1279 = vsel %vm496, %v1258, 0
    %v1282 = vsel %vm496, %v1259, 0
    %v1285 = vsel %vm496, %v1260, 0
    %v1288 = vsel %vm496, %v1261, 0
    %v1291 = vsel %vm496, %v1262, 0
    %v1294 = vsel %vm496, %v1263, 0
    %v1297 = vsel %vm496, %v1264, 0
    %v1300 = vsel %vm496, %v1265, 0
    %v1303 = vsel %vm496, %v1266, 0
    %v1306 = vsel %vm496, %v1267, 0
    %v1309 = vsel %vm496, %v1268, 0
    %v1312 = vsel %vm496, %v1269, 0
    %v1315 = vsel %vm496, %v1270, 0
    %v1318 = vsel %vm496, %v1271, 0
    %1320 = vmatpush.msra.mxu0 0.0
    %1321 = vmatpush.msra.mxu0 0.0
    %1322 = vmatpush.msra.mxu0 0.0
    %1323 = vmatpush.msra.mxu0 0.0
    %1324 = vmatpush.msra.mxu0 0.0
    %1325 = vmatpush.msra.mxu0 0.0
    %1326 = vmatpush.msra.mxu0 0.0
    %1327 = vmatpush.msra.mxu0 0.0
    %1328 = vmatpush.msra.mxu0 0.0
    %1329 = vmatpush.msra.mxu0 0.0
    %1330 = vmatpush.msra.mxu0 0.0
    %1331 = vmatpush.msra.mxu0 0.0
    %v1332 = vand.u32 %v92, 4294901760
    %1333 = vmatpush.msra.mxu0 %v1332
    %v1334 = vand.u32 %v91, 4294901760
    %1335 = vmatpush.msra.mxu0 %v1334
    %v1336 = vand.u32 %v90, 4294901760
    %1337 = vmatpush.msra.mxu0 %v1336
    %v1338 = vand.u32 %v89, 4294901760
    %1339 = vmatpush.msra.mxu0 %v1338
    %v1340 = vand.u32 %v1273, 4294901760
    %v1341 = vsub.f32 %v1273, %v1340
    %v1342 = vand.u32 %v1341, 4294901760
    %v1343 = vsub.f32 %v1341, %v1342
    %v1344 = vand.u32 %v1343, 4294901760
    %1345 = vmatmul.f32.gmra.mxu0 %v1344
    %v1346 = vpop.f32.mrf.mxu0
    %v1347 = vadd.f32 0.0, %v1346
    %v1348 = vand.u32 %v1276, 4294901760
    %v1349 = vsub.f32 %v1276, %v1348
    %v1350 = vand.u32 %v1349, 4294901760
    %v1351 = vsub.f32 %v1349, %v1350
    %v1352 = vand.u32 %v1351, 4294901760
    %1353 = vmatmul.f32.gmra.mxu0 %v1352
    %v1354 = vpop.f32.mrf.mxu0
    %v1355 = vadd.f32 0.0, %v1354
    %v1356 = vand.u32 %v1279, 4294901760
    %v1357 = vsub.f32 %v1279, %v1356
    %v1358 = vand.u32 %v1357, 4294901760
    %v1359 = vsub.f32 %v1357, %v1358
    %v1360 = vand.u32 %v1359, 4294901760
    %1361 = vmatmul.f32.gmra.mxu0 %v1360
    %v1362 = vpop.f32.mrf.mxu0
    %v1363 = vadd.f32 0.0, %v1362
    %v1364 = vand.u32 %v1282, 4294901760
    %v1365 = vsub.f32 %v1282, %v1364
    %v1366 = vand.u32 %v1365, 4294901760
    %v1367 = vsub.f32 %v1365, %v1366
    %v1368 = vand.u32 %v1367, 4294901760
    %1369 = vmatmul.f32.gmra.mxu0 %v1368
    %v1370 = vpop.f32.mrf.mxu0
    %v1371 = vadd.f32 0.0, %v1370
    %v1372 = vand.u32 %v1285, 4294901760
    %v1373 = vsub.f32 %v1285, %v1372
    %v1374 = vand.u32 %v1373, 4294901760
    %v1375 = vsub.f32 %v1373, %v1374
    %v1376 = vand.u32 %v1375, 4294901760
    %1377 = vmatmul.f32.gmra.mxu0 %v1376
    %v1378 = vpop.f32.mrf.mxu0
    %v1379 = vadd.f32 0.0, %v1378
    %v1380 = vand.u32 %v1288, 4294901760
    %v1381 = vsub.f32 %v1288, %v1380
    %v1382 = vand.u32 %v1381, 4294901760
    %v1383 = vsub.f32 %v1381, %v1382
    %v1384 = vand.u32 %v1383, 4294901760
    %1385 = vmatmul.f32.gmra.mxu0 %v1384
    %v1386 = vpop.f32.mrf.mxu0
    %v1387 = vadd.f32 0.0, %v1386
    %v1388 = vand.u32 %v1291, 4294901760
    %v1389 = vsub.f32 %v1291, %v1388
    %v1390 = vand.u32 %v1389, 4294901760
    %v1391 = vsub.f32 %v1389, %v1390
    %v1392 = vand.u32 %v1391, 4294901760
    %1393 = vmatmul.f32.gmra.mxu0 %v1392
    %v1394 = vpop.f32.mrf.mxu0
    %v1395 = vadd.f32 0.0, %v1394
    %v1396 = vand.u32 %v1294, 4294901760
    %v1397 = vsub.f32 %v1294, %v1396
    %v1398 = vand.u32 %v1397, 4294901760
    %v1399 = vsub.f32 %v1397, %v1398
    %v1400 = vand.u32 %v1399, 4294901760
    %1401 = vmatmul.f32.gmra.mxu0 %v1400
    %v1402 = vpop.f32.mrf.mxu0
    %v1403 = vadd.f32 0.0, %v1402
    %v1404 = vand.u32 %v1297, 4294901760
    %v1405 = vsub.f32 %v1297, %v1404
    %v1406 = vand.u32 %v1405, 4294901760
    %v1407 = vsub.f32 %v1405, %v1406
    %v1408 = vand.u32 %v1407, 4294901760
    %1409 = vmatmul.f32.gmra.mxu0 %v1408
    %v1410 = vpop.f32.mrf.mxu0
    %v1411 = vadd.f32 0.0, %v1410
    %v1412 = vand.u32 %v1300, 4294901760
    %v1413 = vsub.f32 %v1300, %v1412
    %v1414 = vand.u32 %v1413, 4294901760
    %v1415 = vsub.f32 %v1413, %v1414
    %v1416 = vand.u32 %v1415, 4294901760
    %1417 = vmatmul.f32.gmra.mxu0 %v1416
    %v1418 = vpop.f32.mrf.mxu0
    %v1419 = vadd.f32 0.0, %v1418
    %v1420 = vand.u32 %v1303, 4294901760
    %v1421 = vsub.f32 %v1303, %v1420
    %v1422 = vand.u32 %v1421, 4294901760
    %v1423 = vsub.f32 %v1421, %v1422
    %v1424 = vand.u32 %v1423, 4294901760
    %1425 = vmatmul.f32.gmra.mxu0 %v1424
    %v1426 = vpop.f32.mrf.mxu0
    %v1427 = vadd.f32 0.0, %v1426
    %v1428 = vand.u32 %v1306, 4294901760
    %v1429 = vsub.f32 %v1306, %v1428
    %v1430 = vand.u32 %v1429, 4294901760
    %v1431 = vsub.f32 %v1429, %v1430
    %v1432 = vand.u32 %v1431, 4294901760
    %1433 = vmatmul.f32.gmra.mxu0 %v1432
    %v1434 = vpop.f32.mrf.mxu0
    %v1435 = vadd.f32 0.0, %v1434
    %v1436 = vand.u32 %v1309, 4294901760
    %v1437 = vsub.f32 %v1309, %v1436
    %v1438 = vand.u32 %v1437, 4294901760
    %v1439 = vsub.f32 %v1437, %v1438
    %v1440 = vand.u32 %v1439, 4294901760
    %1441 = vmatmul.f32.gmra.mxu0 %v1440
    %v1442 = vpop.f32.mrf.mxu0
    %v1443 = vadd.f32 0.0, %v1442
    %v1444 = vand.u32 %v1312, 4294901760
    %v1445 = vsub.f32 %v1312, %v1444
    %v1446 = vand.u32 %v1445, 4294901760
    %v1447 = vsub.f32 %v1445, %v1446
    %v1448 = vand.u32 %v1447, 4294901760
    %1449 = vmatmul.f32.gmra.mxu0 %v1448
    %v1450 = vpop.f32.mrf.mxu0
    %v1451 = vadd.f32 0.0, %v1450
    %v1452 = vand.u32 %v1315, 4294901760
    %v1453 = vsub.f32 %v1315, %v1452
    %v1454 = vand.u32 %v1453, 4294901760
    %v1455 = vsub.f32 %v1453, %v1454
    %v1456 = vand.u32 %v1455, 4294901760
    %1457 = vmatmul.f32.gmra.mxu0 %v1456
    %v1458 = vpop.f32.mrf.mxu0
    %v1459 = vadd.f32 0.0, %v1458
    %v1460 = vand.u32 %v1318, 4294901760
    %v1461 = vsub.f32 %v1318, %v1460
    %v1462 = vand.u32 %v1461, 4294901760
    %v1463 = vsub.f32 %v1461, %v1462
    %v1464 = vand.u32 %v1463, 4294901760
    %1465 = vmatmul.f32.gmra.mxu0 %v1464
    %v1466 = vpop.f32.mrf.mxu0
    %v1467 = vadd.f32 0.0, %v1466
    %1468 = vdwg.mxu0
    %1469 = vmatpush.msra.mxu0 0.0
    %1470 = vmatpush.msra.mxu0 0.0
    %1471 = vmatpush.msra.mxu0 0.0
    %1472 = vmatpush.msra.mxu0 0.0
    %1473 = vmatpush.msra.mxu0 0.0
    %1474 = vmatpush.msra.mxu0 0.0
    %1475 = vmatpush.msra.mxu0 0.0
    %1476 = vmatpush.msra.mxu0 0.0
    %1477 = vmatpush.msra.mxu0 0.0
    %1478 = vmatpush.msra.mxu0 0.0
    %1479 = vmatpush.msra.mxu0 0.0
    %1480 = vmatpush.msra.mxu0 0.0
    %v1481 = vand.u32 %v92, 4294901760
    %v1482 = vsub.f32 %v92, %v1481
    %v1483 = vand.u32 %v1482, 4294901760
    %v1484 = vsub.f32 %v1482, %v1483
    %v1485 = vand.u32 %v1484, 4294901760
    %1486 = vmatpush.msra.mxu0 %v1485
    %v1487 = vand.u32 %v91, 4294901760
    %v1488 = vsub.f32 %v91, %v1487
    %v1489 = vand.u32 %v1488, 4294901760
    %v1490 = vsub.f32 %v1488, %v1489
    %v1491 = vand.u32 %v1490, 4294901760
    %1492 = vmatpush.msra.mxu0 %v1491
    %v1493 = vand.u32 %v90, 4294901760
    %v1494 = vsub.f32 %v90, %v1493
    %v1495 = vand.u32 %v1494, 4294901760
    %v1496 = vsub.f32 %v1494, %v1495
    %v1497 = vand.u32 %v1496, 4294901760
    %1498 = vmatpush.msra.mxu0 %v1497
    %v1499 = vand.u32 %v89, 4294901760
    %v1500 = vsub.f32 %v89, %v1499
    %v1501 = vand.u32 %v1500, 4294901760
    %v1502 = vsub.f32 %v1500, %v1501
    %v1503 = vand.u32 %v1502, 4294901760
    %1504 = vmatpush.msra.mxu0 %v1503
    %v1505 = vand.u32 %v1273, 4294901760
    %1506 = vmatmul.f32.gmra.mxu0 %v1505
    %v1507 = vpop.f32.mrf.mxu0
    %v1508 = vadd.f32 %v1347, %v1507
    %v1509 = vand.u32 %v1276, 4294901760
    %1510 = vmatmul.f32.gmra.mxu0 %v1509
    %v1511 = vpop.f32.mrf.mxu0
    %v1512 = vadd.f32 %v1355, %v1511
    %v1513 = vand.u32 %v1279, 4294901760
    %1514 = vmatmul.f32.gmra.mxu0 %v1513
    %v1515 = vpop.f32.mrf.mxu0
    %v1516 = vadd.f32 %v1363, %v1515
    %v1517 = vand.u32 %v1282, 4294901760
    %1518 = vmatmul.f32.gmra.mxu0 %v1517
    %v1519 = vpop.f32.mrf.mxu0
    %v1520 = vadd.f32 %v1371, %v1519
    %v1521 = vand.u32 %v1285, 4294901760
    %1522 = vmatmul.f32.gmra.mxu0 %v1521
    %v1523 = vpop.f32.mrf.mxu0
    %v1524 = vadd.f32 %v1379, %v1523
    %v1525 = vand.u32 %v1288, 4294901760
    %1526 = vmatmul.f32.gmra.mxu0 %v1525
    %v1527 = vpop.f32.mrf.mxu0
    %v1528 = vadd.f32 %v1387, %v1527
    %v1529 = vand.u32 %v1291, 4294901760
    %1530 = vmatmul.f32.gmra.mxu0 %v1529
    %v1531 = vpop.f32.mrf.mxu0
    %v1532 = vadd.f32 %v1395, %v1531
    %v1533 = vand.u32 %v1294, 4294901760
    %1534 = vmatmul.f32.gmra.mxu0 %v1533
    %v1535 = vpop.f32.mrf.mxu0
    %v1536 = vadd.f32 %v1403, %v1535
    %v1537 = vand.u32 %v1297, 4294901760
    %1538 = vmatmul.f32.gmra.mxu0 %v1537
    %v1539 = vpop.f32.mrf.mxu0
    %v1540 = vadd.f32 %v1411, %v1539
    %v1541 = vand.u32 %v1300, 4294901760
    %1542 = vmatmul.f32.gmra.mxu0 %v1541
    %v1543 = vpop.f32.mrf.mxu0
    %v1544 = vadd.f32 %v1419, %v1543
    %v1545 = vand.u32 %v1303, 4294901760
    %1546 = vmatmul.f32.gmra.mxu0 %v1545
    %v1547 = vpop.f32.mrf.mxu0
    %v1548 = vadd.f32 %v1427, %v1547
    %v1549 = vand.u32 %v1306, 4294901760
    %1550 = vmatmul.f32.gmra.mxu0 %v1549
    %v1551 = vpop.f32.mrf.mxu0
    %v1552 = vadd.f32 %v1435, %v1551
    %v1553 = vand.u32 %v1309, 4294901760
    %1554 = vmatmul.f32.gmra.mxu0 %v1553
    %v1555 = vpop.f32.mrf.mxu0
    %v1556 = vadd.f32 %v1443, %v1555
    %v1557 = vand.u32 %v1312, 4294901760
    %1558 = vmatmul.f32.gmra.mxu0 %v1557
    %v1559 = vpop.f32.mrf.mxu0
    %v1560 = vadd.f32 %v1451, %v1559
    %v1561 = vand.u32 %v1315, 4294901760
    %1562 = vmatmul.f32.gmra.mxu0 %v1561
    %v1563 = vpop.f32.mrf.mxu0
    %v1564 = vadd.f32 %v1459, %v1563
    %v1565 = vand.u32 %v1318, 4294901760
    %1566 = vmatmul.f32.gmra.mxu0 %v1565
    %v1567 = vpop.f32.mrf.mxu0
    %v1568 = vadd.f32 %v1467, %v1567
    %1569 = vdwg.mxu0
    %1570 = vmatpush.msra.mxu0 0.0
    %1571 = vmatpush.msra.mxu0 0.0
    %1572 = vmatpush.msra.mxu0 0.0
    %1573 = vmatpush.msra.mxu0 0.0
    %1574 = vmatpush.msra.mxu0 0.0
    %1575 = vmatpush.msra.mxu0 0.0
    %1576 = vmatpush.msra.mxu0 0.0
    %1577 = vmatpush.msra.mxu0 0.0
    %1578 = vmatpush.msra.mxu0 0.0
    %1579 = vmatpush.msra.mxu0 0.0
    %1580 = vmatpush.msra.mxu0 0.0
    %1581 = vmatpush.msra.mxu0 0.0
    %v1582 = vand.u32 %v92, 4294901760
    %v1583 = vsub.f32 %v92, %v1582
    %1584 = vmatpush.msra.mxu0 %v1583
    %v1585 = vand.u32 %v91, 4294901760
    %v1586 = vsub.f32 %v91, %v1585
    %1587 = vmatpush.msra.mxu0 %v1586
    %v1588 = vand.u32 %v90, 4294901760
    %v1589 = vsub.f32 %v90, %v1588
    %1590 = vmatpush.msra.mxu0 %v1589
    %v1591 = vand.u32 %v89, 4294901760
    %v1592 = vsub.f32 %v89, %v1591
    %1593 = vmatpush.msra.mxu0 %v1592
    %v1594 = vand.u32 %v1273, 4294901760
    %v1595 = vsub.f32 %v1273, %v1594
    %1596 = vmatmul.f32.gmra.mxu0 %v1595
    %v1597 = vpop.f32.mrf.mxu0
    %v1598 = vadd.f32 %v1508, %v1597
    %v1599 = vand.u32 %v1276, 4294901760
    %v1600 = vsub.f32 %v1276, %v1599
    %1601 = vmatmul.f32.gmra.mxu0 %v1600
    %v1602 = vpop.f32.mrf.mxu0
    %v1603 = vadd.f32 %v1512, %v1602
    %v1604 = vand.u32 %v1279, 4294901760
    %v1605 = vsub.f32 %v1279, %v1604
    %1606 = vmatmul.f32.gmra.mxu0 %v1605
    %v1607 = vpop.f32.mrf.mxu0
    %v1608 = vadd.f32 %v1516, %v1607
    %v1609 = vand.u32 %v1282, 4294901760
    %v1610 = vsub.f32 %v1282, %v1609
    %1611 = vmatmul.f32.gmra.mxu0 %v1610
    %v1612 = vpop.f32.mrf.mxu0
    %v1613 = vadd.f32 %v1520, %v1612
    %v1614 = vand.u32 %v1285, 4294901760
    %v1615 = vsub.f32 %v1285, %v1614
    %1616 = vmatmul.f32.gmra.mxu0 %v1615
    %v1617 = vpop.f32.mrf.mxu0
    %v1618 = vadd.f32 %v1524, %v1617
    %v1619 = vand.u32 %v1288, 4294901760
    %v1620 = vsub.f32 %v1288, %v1619
    %1621 = vmatmul.f32.gmra.mxu0 %v1620
    %v1622 = vpop.f32.mrf.mxu0
    %v1623 = vadd.f32 %v1528, %v1622
    %v1624 = vand.u32 %v1291, 4294901760
    %v1625 = vsub.f32 %v1291, %v1624
    %1626 = vmatmul.f32.gmra.mxu0 %v1625
    %v1627 = vpop.f32.mrf.mxu0
    %v1628 = vadd.f32 %v1532, %v1627
    %v1629 = vand.u32 %v1294, 4294901760
    %v1630 = vsub.f32 %v1294, %v1629
    %1631 = vmatmul.f32.gmra.mxu0 %v1630
    %v1632 = vpop.f32.mrf.mxu0
    %v1633 = vadd.f32 %v1536, %v1632
    %v1634 = vand.u32 %v1297, 4294901760
    %v1635 = vsub.f32 %v1297, %v1634
    %1636 = vmatmul.f32.gmra.mxu0 %v1635
    %v1637 = vpop.f32.mrf.mxu0
    %v1638 = vadd.f32 %v1540, %v1637
    %v1639 = vand.u32 %v1300, 4294901760
    %v1640 = vsub.f32 %v1300, %v1639
    %1641 = vmatmul.f32.gmra.mxu0 %v1640
    %v1642 = vpop.f32.mrf.mxu0
    %v1643 = vadd.f32 %v1544, %v1642
    %v1644 = vand.u32 %v1303, 4294901760
    %v1645 = vsub.f32 %v1303, %v1644
    %1646 = vmatmul.f32.gmra.mxu0 %v1645
    %v1647 = vpop.f32.mrf.mxu0
    %v1648 = vadd.f32 %v1548, %v1647
    %v1649 = vand.u32 %v1306, 4294901760
    %v1650 = vsub.f32 %v1306, %v1649
    %1651 = vmatmul.f32.gmra.mxu0 %v1650
    %v1652 = vpop.f32.mrf.mxu0
    %v1653 = vadd.f32 %v1552, %v1652
    %v1654 = vand.u32 %v1309, 4294901760
    %v1655 = vsub.f32 %v1309, %v1654
    %1656 = vmatmul.f32.gmra.mxu0 %v1655
    %v1657 = vpop.f32.mrf.mxu0
    %v1658 = vadd.f32 %v1556, %v1657
    %v1659 = vand.u32 %v1312, 4294901760
    %v1660 = vsub.f32 %v1312, %v1659
    %1661 = vmatmul.f32.gmra.mxu0 %v1660
    %v1662 = vpop.f32.mrf.mxu0
    %v1663 = vadd.f32 %v1560, %v1662
    %v1664 = vand.u32 %v1315, 4294901760
    %v1665 = vsub.f32 %v1315, %v1664
    %1666 = vmatmul.f32.gmra.mxu0 %v1665
    %v1667 = vpop.f32.mrf.mxu0
    %v1668 = vadd.f32 %v1564, %v1667
    %v1669 = vand.u32 %v1318, 4294901760
    %v1670 = vsub.f32 %v1318, %v1669
    %1671 = vmatmul.f32.gmra.mxu0 %v1670
    %v1672 = vpop.f32.mrf.mxu0
    %v1673 = vadd.f32 %v1568, %v1672
    %1674 = vdwg.mxu0
    %1675 = vmatpush.msra.mxu0 0.0
    %1676 = vmatpush.msra.mxu0 0.0
    %1677 = vmatpush.msra.mxu0 0.0
    %1678 = vmatpush.msra.mxu0 0.0
    %1679 = vmatpush.msra.mxu0 0.0
    %1680 = vmatpush.msra.mxu0 0.0
    %1681 = vmatpush.msra.mxu0 0.0
    %1682 = vmatpush.msra.mxu0 0.0
    %1683 = vmatpush.msra.mxu0 0.0
    %1684 = vmatpush.msra.mxu0 0.0
    %1685 = vmatpush.msra.mxu0 0.0
    %1686 = vmatpush.msra.mxu0 0.0
    %v1687 = vand.u32 %v92, 4294901760
    %1688 = vmatpush.msra.mxu0 %v1687
    %v1689 = vand.u32 %v91, 4294901760
    %1690 = vmatpush.msra.mxu0 %v1689
    %v1691 = vand.u32 %v90, 4294901760
    %1692 = vmatpush.msra.mxu0 %v1691
    %v1693 = vand.u32 %v89, 4294901760
    %1694 = vmatpush.msra.mxu0 %v1693
    %v1695 = vand.u32 %v1273, 4294901760
    %v1696 = vsub.f32 %v1273, %v1695
    %v1697 = vand.u32 %v1696, 4294901760
    %1698 = vmatmul.f32.gmra.mxu0 %v1697
    %v1699 = vpop.f32.mrf.mxu0
    %v1700 = vadd.f32 %v1598, %v1699
    %v1701 = vand.u32 %v1276, 4294901760
    %v1702 = vsub.f32 %v1276, %v1701
    %v1703 = vand.u32 %v1702, 4294901760
    %1704 = vmatmul.f32.gmra.mxu0 %v1703
    %v1705 = vpop.f32.mrf.mxu0
    %v1706 = vadd.f32 %v1603, %v1705
    %v1707 = vand.u32 %v1279, 4294901760
    %v1708 = vsub.f32 %v1279, %v1707
    %v1709 = vand.u32 %v1708, 4294901760
    %1710 = vmatmul.f32.gmra.mxu0 %v1709
    %v1711 = vpop.f32.mrf.mxu0
    %v1712 = vadd.f32 %v1608, %v1711
    %v1713 = vand.u32 %v1282, 4294901760
    %v1714 = vsub.f32 %v1282, %v1713
    %v1715 = vand.u32 %v1714, 4294901760
    %1716 = vmatmul.f32.gmra.mxu0 %v1715
    %v1717 = vpop.f32.mrf.mxu0
    %v1718 = vadd.f32 %v1613, %v1717
    %v1719 = vand.u32 %v1285, 4294901760
    %v1720 = vsub.f32 %v1285, %v1719
    %v1721 = vand.u32 %v1720, 4294901760
    %1722 = vmatmul.f32.gmra.mxu0 %v1721
    %v1723 = vpop.f32.mrf.mxu0
    %v1724 = vadd.f32 %v1618, %v1723
    %v1725 = vand.u32 %v1288, 4294901760
    %v1726 = vsub.f32 %v1288, %v1725
    %v1727 = vand.u32 %v1726, 4294901760
    %1728 = vmatmul.f32.gmra.mxu0 %v1727
    %v1729 = vpop.f32.mrf.mxu0
    %v1730 = vadd.f32 %v1623, %v1729
    %v1731 = vand.u32 %v1291, 4294901760
    %v1732 = vsub.f32 %v1291, %v1731
    %v1733 = vand.u32 %v1732, 4294901760
    %1734 = vmatmul.f32.gmra.mxu0 %v1733
    %v1735 = vpop.f32.mrf.mxu0
    %v1736 = vadd.f32 %v1628, %v1735
    %v1737 = vand.u32 %v1294, 4294901760
    %v1738 = vsub.f32 %v1294, %v1737
    %v1739 = vand.u32 %v1738, 4294901760
    %1740 = vmatmul.f32.gmra.mxu0 %v1739
    %v1741 = vpop.f32.mrf.mxu0
    %v1742 = vadd.f32 %v1633, %v1741
    %v1743 = vand.u32 %v1297, 4294901760
    %v1744 = vsub.f32 %v1297, %v1743
    %v1745 = vand.u32 %v1744, 4294901760
    %1746 = vmatmul.f32.gmra.mxu0 %v1745
    %v1747 = vpop.f32.mrf.mxu0
    %v1748 = vadd.f32 %v1638, %v1747
    %v1749 = vand.u32 %v1300, 4294901760
    %v1750 = vsub.f32 %v1300, %v1749
    %v1751 = vand.u32 %v1750, 4294901760
    %1752 = vmatmul.f32.gmra.mxu0 %v1751
    %v1753 = vpop.f32.mrf.mxu0
    %v1754 = vadd.f32 %v1643, %v1753
    %v1755 = vand.u32 %v1303, 4294901760
    %v1756 = vsub.f32 %v1303, %v1755
    %v1757 = vand.u32 %v1756, 4294901760
    %1758 = vmatmul.f32.gmra.mxu0 %v1757
    %v1759 = vpop.f32.mrf.mxu0
    %v1760 = vadd.f32 %v1648, %v1759
    %v1761 = vand.u32 %v1306, 4294901760
    %v1762 = vsub.f32 %v1306, %v1761
    %v1763 = vand.u32 %v1762, 4294901760
    %1764 = vmatmul.f32.gmra.mxu0 %v1763
    %v1765 = vpop.f32.mrf.mxu0
    %v1766 = vadd.f32 %v1653, %v1765
    %v1767 = vand.u32 %v1309, 4294901760
    %v1768 = vsub.f32 %v1309, %v1767
    %v1769 = vand.u32 %v1768, 4294901760
    %1770 = vmatmul.f32.gmra.mxu0 %v1769
    %v1771 = vpop.f32.mrf.mxu0
    %v1772 = vadd.f32 %v1658, %v1771
    %v1773 = vand.u32 %v1312, 4294901760
    %v1774 = vsub.f32 %v1312, %v1773
    %v1775 = vand.u32 %v1774, 4294901760
    %1776 = vmatmul.f32.gmra.mxu0 %v1775
    %v1777 = vpop.f32.mrf.mxu0
    %v1778 = vadd.f32 %v1663, %v1777
    %v1779 = vand.u32 %v1315, 4294901760
    %v1780 = vsub.f32 %v1315, %v1779
    %v1781 = vand.u32 %v1780, 4294901760
    %1782 = vmatmul.f32.gmra.mxu0 %v1781
    %v1783 = vpop.f32.mrf.mxu0
    %v1784 = vadd.f32 %v1668, %v1783
    %v1785 = vand.u32 %v1318, 4294901760
    %v1786 = vsub.f32 %v1318, %v1785
    %v1787 = vand.u32 %v1786, 4294901760
    %1788 = vmatmul.f32.gmra.mxu0 %v1787
    %v1789 = vpop.f32.mrf.mxu0
    %v1790 = vadd.f32 %v1673, %v1789
    %1791 = vdwg.mxu0
    %1792 = vmatpush.msra.mxu0 0.0
    %1793 = vmatpush.msra.mxu0 0.0
    %1794 = vmatpush.msra.mxu0 0.0
    %1795 = vmatpush.msra.mxu0 0.0
    %1796 = vmatpush.msra.mxu0 0.0
    %1797 = vmatpush.msra.mxu0 0.0
    %1798 = vmatpush.msra.mxu0 0.0
    %1799 = vmatpush.msra.mxu0 0.0
    %1800 = vmatpush.msra.mxu0 0.0
    %1801 = vmatpush.msra.mxu0 0.0
    %1802 = vmatpush.msra.mxu0 0.0
    %1803 = vmatpush.msra.mxu0 0.0
    %v1804 = vand.u32 %v92, 4294901760
    %v1805 = vsub.f32 %v92, %v1804
    %v1806 = vand.u32 %v1805, 4294901760
    %1807 = vmatpush.msra.mxu0 %v1806
    %v1808 = vand.u32 %v91, 4294901760
    %v1809 = vsub.f32 %v91, %v1808
    %v1810 = vand.u32 %v1809, 4294901760
    %1811 = vmatpush.msra.mxu0 %v1810
    %v1812 = vand.u32 %v90, 4294901760
    %v1813 = vsub.f32 %v90, %v1812
    %v1814 = vand.u32 %v1813, 4294901760
    %1815 = vmatpush.msra.mxu0 %v1814
    %v1816 = vand.u32 %v89, 4294901760
    %v1817 = vsub.f32 %v89, %v1816
    %v1818 = vand.u32 %v1817, 4294901760
    %1819 = vmatpush.msra.mxu0 %v1818
    %v1820 = vand.u32 %v1273, 4294901760
    %1821 = vmatmul.f32.gmra.mxu0 %v1820
    %v1822 = vpop.f32.mrf.mxu0
    %v1823 = vadd.f32 %v1700, %v1822
    %v1824 = vand.u32 %v1276, 4294901760
    %1825 = vmatmul.f32.gmra.mxu0 %v1824
    %v1826 = vpop.f32.mrf.mxu0
    %v1827 = vadd.f32 %v1706, %v1826
    %v1828 = vand.u32 %v1279, 4294901760
    %1829 = vmatmul.f32.gmra.mxu0 %v1828
    %v1830 = vpop.f32.mrf.mxu0
    %v1831 = vadd.f32 %v1712, %v1830
    %v1832 = vand.u32 %v1282, 4294901760
    %1833 = vmatmul.f32.gmra.mxu0 %v1832
    %v1834 = vpop.f32.mrf.mxu0
    %v1835 = vadd.f32 %v1718, %v1834
    %v1836 = vand.u32 %v1285, 4294901760
    %1837 = vmatmul.f32.gmra.mxu0 %v1836
    %v1838 = vpop.f32.mrf.mxu0
    %v1839 = vadd.f32 %v1724, %v1838
    %v1840 = vand.u32 %v1288, 4294901760
    %1841 = vmatmul.f32.gmra.mxu0 %v1840
    %v1842 = vpop.f32.mrf.mxu0
    %v1843 = vadd.f32 %v1730, %v1842
    %v1844 = vand.u32 %v1291, 4294901760
    %1845 = vmatmul.f32.gmra.mxu0 %v1844
    %v1846 = vpop.f32.mrf.mxu0
    %v1847 = vadd.f32 %v1736, %v1846
    %v1848 = vand.u32 %v1294, 4294901760
    %1849 = vmatmul.f32.gmra.mxu0 %v1848
    %v1850 = vpop.f32.mrf.mxu0
    %v1851 = vadd.f32 %v1742, %v1850
    %v1852 = vand.u32 %v1297, 4294901760
    %1853 = vmatmul.f32.gmra.mxu0 %v1852
    %v1854 = vpop.f32.mrf.mxu0
    %v1855 = vadd.f32 %v1748, %v1854
    %v1856 = vand.u32 %v1300, 4294901760
    %1857 = vmatmul.f32.gmra.mxu0 %v1856
    %v1858 = vpop.f32.mrf.mxu0
    %v1859 = vadd.f32 %v1754, %v1858
    %v1860 = vand.u32 %v1303, 4294901760
    %1861 = vmatmul.f32.gmra.mxu0 %v1860
    %v1862 = vpop.f32.mrf.mxu0
    %v1863 = vadd.f32 %v1760, %v1862
    %v1864 = vand.u32 %v1306, 4294901760
    %1865 = vmatmul.f32.gmra.mxu0 %v1864
    %v1866 = vpop.f32.mrf.mxu0
    %v1867 = vadd.f32 %v1766, %v1866
    %v1868 = vand.u32 %v1309, 4294901760
    %1869 = vmatmul.f32.gmra.mxu0 %v1868
    %v1870 = vpop.f32.mrf.mxu0
    %v1871 = vadd.f32 %v1772, %v1870
    %v1872 = vand.u32 %v1312, 4294901760
    %1873 = vmatmul.f32.gmra.mxu0 %v1872
    %v1874 = vpop.f32.mrf.mxu0
    %v1875 = vadd.f32 %v1778, %v1874
    %v1876 = vand.u32 %v1315, 4294901760
    %1877 = vmatmul.f32.gmra.mxu0 %v1876
    %v1878 = vpop.f32.mrf.mxu0
    %v1879 = vadd.f32 %v1784, %v1878
    %v1880 = vand.u32 %v1318, 4294901760
    %1881 = vmatmul.f32.gmra.mxu0 %v1880
    %v1882 = vpop.f32.mrf.mxu0
    %v1883 = vadd.f32 %v1790, %v1882
    %1884 = vdwg.mxu0
    %1885 = vmatpush.msra.mxu0 0.0
    %1886 = vmatpush.msra.mxu0 0.0
    %1887 = vmatpush.msra.mxu0 0.0
    %1888 = vmatpush.msra.mxu0 0.0
    %1889 = vmatpush.msra.mxu0 0.0
    %1890 = vmatpush.msra.mxu0 0.0
    %1891 = vmatpush.msra.mxu0 0.0
    %1892 = vmatpush.msra.mxu0 0.0
    %1893 = vmatpush.msra.mxu0 0.0
    %1894 = vmatpush.msra.mxu0 0.0
    %1895 = vmatpush.msra.mxu0 0.0
    %1896 = vmatpush.msra.mxu0 0.0
    %v1897 = vand.u32 %v92, 4294901760
    %1898 = vmatpush.msra.mxu0 %v1897
    %v1899 = vand.u32 %v91, 4294901760
    %1900 = vmatpush.msra.mxu0 %v1899
    %v1901 = vand.u32 %v90, 4294901760
    %1902 = vmatpush.msra.mxu0 %v1901
    %v1903 = vand.u32 %v89, 4294901760
    %1904 = vmatpush.msra.mxu0 %v1903
    %v1905 = vand.u32 %v1273, 4294901760
    %1906 = vmatmul.f32.gmra.mxu0 %v1905
    %v1907 = vpop.f32.mrf.mxu0
    %v1908 = vadd.f32 %v1823, %v1907
    %v1909 = vand.u32 %v1276, 4294901760
    %1910 = vmatmul.f32.gmra.mxu0 %v1909
    %v1911 = vpop.f32.mrf.mxu0
    %v1912 = vadd.f32 %v1827, %v1911
    %v1913 = vand.u32 %v1279, 4294901760
    %1914 = vmatmul.f32.gmra.mxu0 %v1913
    %v1915 = vpop.f32.mrf.mxu0
    %v1916 = vadd.f32 %v1831, %v1915
    %v1917 = vand.u32 %v1282, 4294901760
    %1918 = vmatmul.f32.gmra.mxu0 %v1917
    %v1919 = vpop.f32.mrf.mxu0
    %v1920 = vadd.f32 %v1835, %v1919
    %v1921 = vand.u32 %v1285, 4294901760
    %1922 = vmatmul.f32.gmra.mxu0 %v1921
    %v1923 = vpop.f32.mrf.mxu0
    %v1924 = vadd.f32 %v1839, %v1923
    %v1925 = vand.u32 %v1288, 4294901760
    %1926 = vmatmul.f32.gmra.mxu0 %v1925
    %v1927 = vpop.f32.mrf.mxu0
    %v1928 = vadd.f32 %v1843, %v1927
    %v1929 = vand.u32 %v1291, 4294901760
    %1930 = vmatmul.f32.gmra.mxu0 %v1929
    %v1931 = vpop.f32.mrf.mxu0
    %v1932 = vadd.f32 %v1847, %v1931
    %v1933 = vand.u32 %v1294, 4294901760
    %1934 = vmatmul.f32.gmra.mxu0 %v1933
    %v1935 = vpop.f32.mrf.mxu0
    %v1936 = vadd.f32 %v1851, %v1935
    %v1937 = vand.u32 %v1297, 4294901760
    %1938 = vmatmul.f32.gmra.mxu0 %v1937
    %v1939 = vpop.f32.mrf.mxu0
    %v1940 = vadd.f32 %v1855, %v1939
    %v1941 = vand.u32 %v1300, 4294901760
    %1942 = vmatmul.f32.gmra.mxu0 %v1941
    %v1943 = vpop.f32.mrf.mxu0
    %v1944 = vadd.f32 %v1859, %v1943
    %v1945 = vand.u32 %v1303, 4294901760
    %1946 = vmatmul.f32.gmra.mxu0 %v1945
    %v1947 = vpop.f32.mrf.mxu0
    %v1948 = vadd.f32 %v1863, %v1947
    %v1949 = vand.u32 %v1306, 4294901760
    %1950 = vmatmul.f32.gmra.mxu0 %v1949
    %v1951 = vpop.f32.mrf.mxu0
    %v1952 = vadd.f32 %v1867, %v1951
    %v1953 = vand.u32 %v1309, 4294901760
    %1954 = vmatmul.f32.gmra.mxu0 %v1953
    %v1955 = vpop.f32.mrf.mxu0
    %v1956 = vadd.f32 %v1871, %v1955
    %v1957 = vand.u32 %v1312, 4294901760
    %1958 = vmatmul.f32.gmra.mxu0 %v1957
    %v1959 = vpop.f32.mrf.mxu0
    %v1960 = vadd.f32 %v1875, %v1959
    %v1961 = vand.u32 %v1315, 4294901760
    %1962 = vmatmul.f32.gmra.mxu0 %v1961
    %v1963 = vpop.f32.mrf.mxu0
    %v1964 = vadd.f32 %v1879, %v1963
    %v1965 = vand.u32 %v1318, 4294901760
    %1966 = vmatmul.f32.gmra.mxu0 %v1965
    %v1967 = vpop.f32.mrf.mxu0
    %v1968 = vadd.f32 %v1883, %v1967
    %1969 = vdwg.mxu0
    %v1970 = vmul.f32 %v1908, 1.442695
    %v1971 = vpow.pop %v1970
    %v1972 = vmul.f32 %v1912, 1.442695
    %v1973 = vpow.pop %v1972
    %v1974 = vmul.f32 %v1916, 1.442695
    %v1975 = vpow.pop %v1974
    %v1976 = vmul.f32 %v1920, 1.442695
    %v1977 = vpow.pop %v1976
    %v1978 = vmul.f32 %v1924, 1.442695
    %v1979 = vpow.pop %v1978
    %v1980 = vmul.f32 %v1928, 1.442695
    %v1981 = vpow.pop %v1980
    %v1982 = vmul.f32 %v1932, 1.442695
    %v1983 = vpow.pop %v1982
    %v1984 = vmul.f32 %v1936, 1.442695
    %v1985 = vpow.pop %v1984
    %v1986 = vmul.f32 %v1940, 1.442695
    %v1987 = vpow.pop %v1986
    %v1988 = vmul.f32 %v1944, 1.442695
    %v1989 = vpow.pop %v1988
    %v1990 = vmul.f32 %v1948, 1.442695
    %v1991 = vpow.pop %v1990
    %v1992 = vmul.f32 %v1952, 1.442695
    %v1993 = vpow.pop %v1992
    %v1994 = vmul.f32 %v1956, 1.442695
    %v1995 = vpow.pop %v1994
    %v1996 = vmul.f32 %v1960, 1.442695
    %v1997 = vpow.pop %v1996
    %v1998 = vmul.f32 %v1964, 1.442695
    %v1999 = vpow.pop %v1998
    %v2000 = vmul.f32 %v1968, 1.442695
    %v2001 = vpow.pop %v2000
    %vm2002 = vcmask 64512
    %v2003 = vsel %vm2002, %v1971, 0.0
    %v2004 = vrot.slane %v2003, 4
    %v2005 = vadd.f32 %v2003, %v2004
    %v2006 = vrot.slane %v2005, 2
    %v2007 = vadd.f32 %v2005, %v2006
    %v2008 = vrot.slane %v2007, 1
    %v2009 = vadd.f32 %v2007, %v2008
    %v2010 = vsel %vm2002, %v1973, 0.0
    %v2011 = vrot.slane %v2010, 4
    %v2012 = vadd.f32 %v2010, %v2011
    %v2013 = vrot.slane %v2012, 2
    %v2014 = vadd.f32 %v2012, %v2013
    %v2015 = vrot.slane %v2014, 1
    %v2016 = vadd.f32 %v2014, %v2015
    %v2017 = vsel %vm2002, %v1975, 0.0
    %v2018 = vrot.slane %v2017, 4
    %v2019 = vadd.f32 %v2017, %v2018
    %v2020 = vrot.slane %v2019, 2
    %v2021 = vadd.f32 %v2019, %v2020
    %v2022 = vrot.slane %v2021, 1
    %v2023 = vadd.f32 %v2021, %v2022
    %v2024 = vsel %vm2002, %v1977, 0.0
    %v2025 = vrot.slane %v2024, 4
    %v2026 = vadd.f32 %v2024, %v2025
    %v2027 = vrot.slane %v2026, 2
    %v2028 = vadd.f32 %v2026, %v2027
    %v2029 = vrot.slane %v2028, 1
    %v2030 = vadd.f32 %v2028, %v2029
    %v2031 = vsel %vm2002, %v1979, 0.0
    %v2032 = vrot.slane %v2031, 4
    %v2033 = vadd.f32 %v2031, %v2032
    %v2034 = vrot.slane %v2033, 2
    %v2035 = vadd.f32 %v2033, %v2034
    %v2036 = vrot.slane %v2035, 1
    %v2037 = vadd.f32 %v2035, %v2036
    %v2038 = vsel %vm2002, %v1981, 0.0
    %v2039 = vrot.slane %v2038, 4
    %v2040 = vadd.f32 %v2038, %v2039
    %v2041 = vrot.slane %v2040, 2
    %v2042 = vadd.f32 %v2040, %v2041
    %v2043 = vrot.slane %v2042, 1
    %v2044 = vadd.f32 %v2042, %v2043
    %v2045 = vsel %vm2002, %v1983, 0.0
    %v2046 = vrot.slane %v2045, 4
    %v2047 = vadd.f32 %v2045, %v2046
    %v2048 = vrot.slane %v2047, 2
    %v2049 = vadd.f32 %v2047, %v2048
    %v2050 = vrot.slane %v2049, 1
    %v2051 = vadd.f32 %v2049, %v2050
    %v2052 = vsel %vm2002, %v1985, 0.0
    %v2053 = vrot.slane %v2052, 4
    %v2054 = vadd.f32 %v2052, %v2053
    %v2055 = vrot.slane %v2054, 2
    %v2056 = vadd.f32 %v2054, %v2055
    %v2057 = vrot.slane %v2056, 1
    %v2058 = vadd.f32 %v2056, %v2057
    %v2059 = vsel %vm2002, %v1987, 0.0
    %v2060 = vrot.slane %v2059, 4
    %v2061 = vadd.f32 %v2059, %v2060
    %v2062 = vrot.slane %v2061, 2
    %v2063 = vadd.f32 %v2061, %v2062
    %v2064 = vrot.slane %v2063, 1
    %v2065 = vadd.f32 %v2063, %v2064
    %v2066 = vsel %vm2002, %v1989, 0.0
    %v2067 = vrot.slane %v2066, 4
    %v2068 = vadd.f32 %v2066, %v2067
    %v2069 = vrot.slane %v2068, 2
    %v2070 = vadd.f32 %v2068, %v2069
    %v2071 = vrot.slane %v2070, 1
    %v2072 = vadd.f32 %v2070, %v2071
    %v2073 = vsel %vm2002, %v1991, 0.0
    %v2074 = vrot.slane %v2073, 4
    %v2075 = vadd.f32 %v2073, %v2074
    %v2076 = vrot.slane %v2075, 2
    %v2077 = vadd.f32 %v2075, %v2076
    %v2078 = vrot.slane %v2077, 1
    %v2079 = vadd.f32 %v2077, %v2078
    %v2080 = vsel %vm2002, %v1993, 0.0
    %v2081 = vrot.slane %v2080, 4
    %v2082 = vadd.f32 %v2080, %v2081
    %v2083 = vrot.slane %v2082, 2
    %v2084 = vadd.f32 %v2082, %v2083
    %v2085 = vrot.slane %v2084, 1
    %v2086 = vadd.f32 %v2084, %v2085
    %v2087 = vsel %vm2002, %v1995, 0.0
    %v2088 = vrot.slane %v2087, 4
    %v2089 = vadd.f32 %v2087, %v2088
    %v2090 = vrot.slane %v2089, 2
    %v2091 = vadd.f32 %v2089, %v2090
    %v2092 = vrot.slane %v2091, 1
    %v2093 = vadd.f32 %v2091, %v2092
    %v2094 = vsel %vm2002, %v1997, 0.0
    %v2095 = vrot.slane %v2094, 4
    %v2096 = vadd.f32 %v2094, %v2095
    %v2097 = vrot.slane %v2096, 2
    %v2098 = vadd.f32 %v2096, %v2097
    %v2099 = vrot.slane %v2098, 1
    %v2100 = vadd.f32 %v2098, %v2099
    %v2101 = vsel %vm2002, %v1999, 0.0
    %v2102 = vrot.slane %v2101, 4
    %v2103 = vadd.f32 %v2101, %v2102
    %v2104 = vrot.slane %v2103, 2
    %v2105 = vadd.f32 %v2103, %v2104
    %v2106 = vrot.slane %v2105, 1
    %v2107 = vadd.f32 %v2105, %v2106
    %v2108 = vsel %vm2002, %v2001, 0.0
    %v2109 = vrot.slane %v2108, 4
    %v2110 = vadd.f32 %v2108, %v2109
    %v2111 = vrot.slane %v2110, 2
    %v2112 = vadd.f32 %v2110, %v2111
    %v2113 = vrot.slane %v2112, 1
    %v2114 = vadd.f32 %v2112, %v2113
    %v2115 = vrcp.pop %v2009
    %v2116 = vmul.f32 %v2009, %v2115
    %v2117 = vsub.f32 1.0, %v2116
    %v2118 = vmul.f32 %v2115, %v2117
    %v2119 = vadd.f32 %v2115, %v2118
    %vm2120 = vweird.f32 %v2009
    %vm2121 = vweird.f32 %v2115
    %vm2122 = vmor %vm2120, %vm2121
    %v2123 = vsel %vm2122, %v2115, %v2119
    %v2124 = vand.u32 2147483647, %v2009
    %vm2125 = vcmp.eq.f32.partialorder %v2124, 8.507059e+37
    %v2126 = vand.u32 %v2009, 2147483648
    %v2127 = vor.u32 1.1754944e-38, %v2126
    %v2128 = vsel %vm2125, %v2127, %v2123
    %v2129 = vmul.f32 %v1971, %v2128
    %v2130 = vrcp.pop %v2016
    %v2131 = vmul.f32 %v2016, %v2130
    %v2132 = vsub.f32 1.0, %v2131
    %v2133 = vmul.f32 %v2130, %v2132
    %v2134 = vadd.f32 %v2130, %v2133
    %vm2135 = vweird.f32 %v2016
    %vm2136 = vweird.f32 %v2130
    %vm2137 = vmor %vm2135, %vm2136
    %v2138 = vsel %vm2137, %v2130, %v2134
    %v2139 = vand.u32 2147483647, %v2016
    %vm2140 = vcmp.eq.f32.partialorder %v2139, 8.507059e+37
    %v2141 = vand.u32 %v2016, 2147483648
    %v2142 = vor.u32 1.1754944e-38, %v2141
    %v2143 = vsel %vm2140, %v2142, %v2138
    %v2144 = vmul.f32 %v1973, %v2143
    %v2145 = vrcp.pop %v2023
    %v2146 = vmul.f32 %v2023, %v2145
    %v2147 = vsub.f32 1.0, %v2146
    %v2148 = vmul.f32 %v2145, %v2147
    %v2149 = vadd.f32 %v2145, %v2148
    %vm2150 = vweird.f32 %v2023
    %vm2151 = vweird.f32 %v2145
    %vm2152 = vmor %vm2150, %vm2151
    %v2153 = vsel %vm2152, %v2145, %v2149
    %v2154 = vand.u32 2147483647, %v2023
    %vm2155 = vcmp.eq.f32.partialorder %v2154, 8.507059e+37
    %v2156 = vand.u32 %v2023, 2147483648
    %v2157 = vor.u32 1.1754944e-38, %v2156
    %v2158 = vsel %vm2155, %v2157, %v2153
    %v2159 = vmul.f32 %v1975, %v2158
    %v2160 = vrcp.pop %v2030
    %v2161 = vmul.f32 %v2030, %v2160
    %v2162 = vsub.f32 1.0, %v2161
    %v2163 = vmul.f32 %v2160, %v2162
    %v2164 = vadd.f32 %v2160, %v2163
    %vm2165 = vweird.f32 %v2030
    %vm2166 = vweird.f32 %v2160
    %vm2167 = vmor %vm2165, %vm2166
    %v2168 = vsel %vm2167, %v2160, %v2164
    %v2169 = vand.u32 2147483647, %v2030
    %vm2170 = vcmp.eq.f32.partialorder %v2169, 8.507059e+37
    %v2171 = vand.u32 %v2030, 2147483648
    %v2172 = vor.u32 1.1754944e-38, %v2171
    %v2173 = vsel %vm2170, %v2172, %v2168
    %v2174 = vmul.f32 %v1977, %v2173
    %v2175 = vrcp.pop %v2037
    %v2176 = vmul.f32 %v2037, %v2175
    %v2177 = vsub.f32 1.0, %v2176
    %v2178 = vmul.f32 %v2175, %v2177
    %v2179 = vadd.f32 %v2175, %v2178
    %vm2180 = vweird.f32 %v2037
    %vm2181 = vweird.f32 %v2175
    %vm2182 = vmor %vm2180, %vm2181
    %v2183 = vsel %vm2182, %v2175, %v2179
    %v2184 = vand.u32 2147483647, %v2037
    %vm2185 = vcmp.eq.f32.partialorder %v2184, 8.507059e+37
    %v2186 = vand.u32 %v2037, 2147483648
    %v2187 = vor.u32 1.1754944e-38, %v2186
    %v2188 = vsel %vm2185, %v2187, %v2183
    %v2189 = vmul.f32 %v1979, %v2188
    %v2190 = vrcp.pop %v2044
    %v2191 = vmul.f32 %v2044, %v2190
    %v2192 = vsub.f32 1.0, %v2191
    %v2193 = vmul.f32 %v2190, %v2192
    %v2194 = vadd.f32 %v2190, %v2193
    %vm2195 = vweird.f32 %v2044
    %vm2196 = vweird.f32 %v2190
    %vm2197 = vmor %vm2195, %vm2196
    %v2198 = vsel %vm2197, %v2190, %v2194
    %v2199 = vand.u32 2147483647, %v2044
    %vm2200 = vcmp.eq.f32.partialorder %v2199, 8.507059e+37
    %v2201 = vand.u32 %v2044, 2147483648
    %v2202 = vor.u32 1.1754944e-38, %v2201
    %v2203 = vsel %vm2200, %v2202, %v2198
    %v2204 = vmul.f32 %v1981, %v2203
    %v2205 = vrcp.pop %v2051
    %v2206 = vmul.f32 %v2051, %v2205
    %v2207 = vsub.f32 1.0, %v2206
    %v2208 = vmul.f32 %v2205, %v2207
    %v2209 = vadd.f32 %v2205, %v2208
    %vm2210 = vweird.f32 %v2051
    %vm2211 = vweird.f32 %v2205
    %vm2212 = vmor %vm2210, %vm2211
    %v2213 = vsel %vm2212, %v2205, %v2209
    %v2214 = vand.u32 2147483647, %v2051
    %vm2215 = vcmp.eq.f32.partialorder %v2214, 8.507059e+37
    %v2216 = vand.u32 %v2051, 2147483648
    %v2217 = vor.u32 1.1754944e-38, %v2216
    %v2218 = vsel %vm2215, %v2217, %v2213
    %v2219 = vmul.f32 %v1983, %v2218
    %v2220 = vrcp.pop %v2058
    %v2221 = vmul.f32 %v2058, %v2220
    %v2222 = vsub.f32 1.0, %v2221
    %v2223 = vmul.f32 %v2220, %v2222
    %v2224 = vadd.f32 %v2220, %v2223
    %vm2225 = vweird.f32 %v2058
    %vm2226 = vweird.f32 %v2220
    %vm2227 = vmor %vm2225, %vm2226
    %v2228 = vsel %vm2227, %v2220, %v2224
    %v2229 = vand.u32 2147483647, %v2058
    %vm2230 = vcmp.eq.f32.partialorder %v2229, 8.507059e+37
    %v2231 = vand.u32 %v2058, 2147483648
    %v2232 = vor.u32 1.1754944e-38, %v2231
    %v2233 = vsel %vm2230, %v2232, %v2228
    %v2234 = vmul.f32 %v1985, %v2233
    %v2235 = vrcp.pop %v2065
    %v2236 = vmul.f32 %v2065, %v2235
    %v2237 = vsub.f32 1.0, %v2236
    %v2238 = vmul.f32 %v2235, %v2237
    %v2239 = vadd.f32 %v2235, %v2238
    %vm2240 = vweird.f32 %v2065
    %vm2241 = vweird.f32 %v2235
    %vm2242 = vmor %vm2240, %vm2241
    %v2243 = vsel %vm2242, %v2235, %v2239
    %v2244 = vand.u32 2147483647, %v2065
    %vm2245 = vcmp.eq.f32.partialorder %v2244, 8.507059e+37
    %v2246 = vand.u32 %v2065, 2147483648
    %v2247 = vor.u32 1.1754944e-38, %v2246
    %v2248 = vsel %vm2245, %v2247, %v2243
    %v2249 = vmul.f32 %v1987, %v2248
    %v2250 = vrcp.pop %v2072
    %v2251 = vmul.f32 %v2072, %v2250
    %v2252 = vsub.f32 1.0, %v2251
    %v2253 = vmul.f32 %v2250, %v2252
    %v2254 = vadd.f32 %v2250, %v2253
    %vm2255 = vweird.f32 %v2072
    %vm2256 = vweird.f32 %v2250
    %vm2257 = vmor %vm2255, %vm2256
    %v2258 = vsel %vm2257, %v2250, %v2254
    %v2259 = vand.u32 2147483647, %v2072
    %vm2260 = vcmp.eq.f32.partialorder %v2259, 8.507059e+37
    %v2261 = vand.u32 %v2072, 2147483648
    %v2262 = vor.u32 1.1754944e-38, %v2261
    %v2263 = vsel %vm2260, %v2262, %v2258
    %v2264 = vmul.f32 %v1989, %v2263
    %v2265 = vrcp.pop %v2079
    %v2266 = vmul.f32 %v2079, %v2265
    %v2267 = vsub.f32 1.0, %v2266
    %v2268 = vmul.f32 %v2265, %v2267
    %v2269 = vadd.f32 %v2265, %v2268
    %vm2270 = vweird.f32 %v2079
    %vm2271 = vweird.f32 %v2265
    %vm2272 = vmor %vm2270, %vm2271
    %v2273 = vsel %vm2272, %v2265, %v2269
    %v2274 = vand.u32 2147483647, %v2079
    %vm2275 = vcmp.eq.f32.partialorder %v2274, 8.507059e+37
    %v2276 = vand.u32 %v2079, 2147483648
    %v2277 = vor.u32 1.1754944e-38, %v2276
    %v2278 = vsel %vm2275, %v2277, %v2273
    %v2279 = vmul.f32 %v1991, %v2278
    %v2280 = vrcp.pop %v2086
    %v2281 = vmul.f32 %v2086, %v2280
    %v2282 = vsub.f32 1.0, %v2281
    %v2283 = vmul.f32 %v2280, %v2282
    %v2284 = vadd.f32 %v2280, %v2283
    %vm2285 = vweird.f32 %v2086
    %vm2286 = vweird.f32 %v2280
    %vm2287 = vmor %vm2285, %vm2286
    %v2288 = vsel %vm2287, %v2280, %v2284
    %v2289 = vand.u32 2147483647, %v2086
    %vm2290 = vcmp.eq.f32.partialorder %v2289, 8.507059e+37
    %v2291 = vand.u32 %v2086, 2147483648
    %v2292 = vor.u32 1.1754944e-38, %v2291
    %v2293 = vsel %vm2290, %v2292, %v2288
    %v2294 = vmul.f32 %v1993, %v2293
    %v2295 = vrcp.pop %v2093
    %v2296 = vmul.f32 %v2093, %v2295
    %v2297 = vsub.f32 1.0, %v2296
    %v2298 = vmul.f32 %v2295, %v2297
    %v2299 = vadd.f32 %v2295, %v2298
    %vm2300 = vweird.f32 %v2093
    %vm2301 = vweird.f32 %v2295
    %vm2302 = vmor %vm2300, %vm2301
    %v2303 = vsel %vm2302, %v2295, %v2299
    %v2304 = vand.u32 2147483647, %v2093
    %vm2305 = vcmp.eq.f32.partialorder %v2304, 8.507059e+37
    %v2306 = vand.u32 %v2093, 2147483648
    %v2307 = vor.u32 1.1754944e-38, %v2306
    %v2308 = vsel %vm2305, %v2307, %v2303
    %v2309 = vmul.f32 %v1995, %v2308
    %v2310 = vrcp.pop %v2100
    %v2311 = vmul.f32 %v2100, %v2310
    %v2312 = vsub.f32 1.0, %v2311
    %v2313 = vmul.f32 %v2310, %v2312
    %v2314 = vadd.f32 %v2310, %v2313
    %vm2315 = vweird.f32 %v2100
    %vm2316 = vweird.f32 %v2310
    %vm2317 = vmor %vm2315, %vm2316
    %v2318 = vsel %vm2317, %v2310, %v2314
    %v2319 = vand.u32 2147483647, %v2100
    %vm2320 = vcmp.eq.f32.partialorder %v2319, 8.507059e+37
    %v2321 = vand.u32 %v2100, 2147483648
    %v2322 = vor.u32 1.1754944e-38, %v2321
    %v2323 = vsel %vm2320, %v2322, %v2318
    %v2324 = vmul.f32 %v1997, %v2323
    %v2325 = vrcp.pop %v2107
    %v2326 = vmul.f32 %v2107, %v2325
    %v2327 = vsub.f32 1.0, %v2326
    %v2328 = vmul.f32 %v2325, %v2327
    %v2329 = vadd.f32 %v2325, %v2328
    %vm2330 = vweird.f32 %v2107
    %vm2331 = vweird.f32 %v2325
    %vm2332 = vmor %vm2330, %vm2331
    %v2333 = vsel %vm2332, %v2325, %v2329
    %v2334 = vand.u32 2147483647, %v2107
    %vm2335 = vcmp.eq.f32.partialorder %v2334, 8.507059e+37
    %v2336 = vand.u32 %v2107, 2147483648
    %v2337 = vor.u32 1.1754944e-38, %v2336
    %v2338 = vsel %vm2335, %v2337, %v2333
    %v2339 = vmul.f32 %v1999, %v2338
    %v2340 = vrcp.pop %v2114
    %v2341 = vmul.f32 %v2114, %v2340
    %v2342 = vsub.f32 1.0, %v2341
    %v2343 = vmul.f32 %v2340, %v2342
    %v2344 = vadd.f32 %v2340, %v2343
    %vm2345 = vweird.f32 %v2114
    %vm2346 = vweird.f32 %v2340
    %vm2347 = vmor %vm2345, %vm2346
    %v2348 = vsel %vm2347, %v2340, %v2344
    %v2349 = vand.u32 2147483647, %v2114
    %vm2350 = vcmp.eq.f32.partialorder %v2349, 8.507059e+37
    %v2351 = vand.u32 %v2114, 2147483648
    %v2352 = vor.u32 1.1754944e-38, %v2351
    %v2353 = vsel %vm2350, %v2352, %v2348
    %v2354 = vmul.f32 %v2001, %v2353
    %v2356 = vsel %vm2002, %v2129, 0
    %v2359 = vsel %vm2002, %v2144, 0
    %v2362 = vsel %vm2002, %v2159, 0
    %v2365 = vsel %vm2002, %v2174, 0
    %v2368 = vsel %vm2002, %v2189, 0
    %v2371 = vsel %vm2002, %v2204, 0
    %v2374 = vsel %vm2002, %v2219, 0
    %v2377 = vsel %vm2002, %v2234, 0
    %v2380 = vsel %vm2002, %v2249, 0
    %v2383 = vsel %vm2002, %v2264, 0
    %v2386 = vsel %vm2002, %v2279, 0
    %v2389 = vsel %vm2002, %v2294, 0
    %v2392 = vsel %vm2002, %v2309, 0
    %v2395 = vsel %vm2002, %v2324, 0
    %v2398 = vsel %vm2002, %v2339, 0
    %v2401 = vsel %vm2002, %v2354, 0
    %2403 = vmatpush.msra.mxu0 0.0
    %2404 = vmatpush.msra.mxu0 0.0
    %2405 = vmatpush.msra.mxu0 0.0
    %2406 = vmatpush.msra.mxu0 0.0
    %2407 = vmatpush.msra.mxu0 0.0
    %2408 = vmatpush.msra.mxu0 0.0
    %2409 = vmatpush.msra.mxu0 0.0
    %2410 = vmatpush.msra.mxu0 0.0
    %2411 = vmatpush.msra.mxu0 0.0
    %2412 = vmatpush.msra.mxu0 0.0
    %2413 = vmatpush.msra.mxu0 0.0
    %2414 = vmatpush.msra.mxu0 0.0
    %2415 = vmatpush.msra.mxu0 0.0
    %2416 = vmatpush.msra.mxu0 0.0
    %2417 = vmatpush.msra.mxu0 0.0
    %v2418 = vand.u32 %v93, 4294901760
    %2419 = vmatpush.msra.mxu0 %v2418
    %v2420 = vand.u32 %v2356, 4294901760
    %v2421 = vsub.f32 %v2356, %v2420
    %v2422 = vand.u32 %v2421, 4294901760
    %v2423 = vsub.f32 %v2421, %v2422
    %v2424 = vand.u32 %v2423, 4294901760
    %2425 = vmatmul.f32.gmra.mxu0 %v2424
    %v2426 = vpop.f32.mrf.mxu0
    %v2427 = vadd.f32 0.0, %v2426
    %v2428 = vand.u32 %v2359, 4294901760
    %v2429 = vsub.f32 %v2359, %v2428
    %v2430 = vand.u32 %v2429, 4294901760
    %v2431 = vsub.f32 %v2429, %v2430
    %v2432 = vand.u32 %v2431, 4294901760
    %2433 = vmatmul.f32.gmra.mxu0 %v2432
    %v2434 = vpop.f32.mrf.mxu0
    %v2435 = vadd.f32 0.0, %v2434
    %v2436 = vand.u32 %v2362, 4294901760
    %v2437 = vsub.f32 %v2362, %v2436
    %v2438 = vand.u32 %v2437, 4294901760
    %v2439 = vsub.f32 %v2437, %v2438
    %v2440 = vand.u32 %v2439, 4294901760
    %2441 = vmatmul.f32.gmra.mxu0 %v2440
    %v2442 = vpop.f32.mrf.mxu0
    %v2443 = vadd.f32 0.0, %v2442
    %v2444 = vand.u32 %v2365, 4294901760
    %v2445 = vsub.f32 %v2365, %v2444
    %v2446 = vand.u32 %v2445, 4294901760
    %v2447 = vsub.f32 %v2445, %v2446
    %v2448 = vand.u32 %v2447, 4294901760
    %2449 = vmatmul.f32.gmra.mxu0 %v2448
    %v2450 = vpop.f32.mrf.mxu0
    %v2451 = vadd.f32 0.0, %v2450
    %v2452 = vand.u32 %v2368, 4294901760
    %v2453 = vsub.f32 %v2368, %v2452
    %v2454 = vand.u32 %v2453, 4294901760
    %v2455 = vsub.f32 %v2453, %v2454
    %v2456 = vand.u32 %v2455, 4294901760
    %2457 = vmatmul.f32.gmra.mxu0 %v2456
    %v2458 = vpop.f32.mrf.mxu0
    %v2459 = vadd.f32 0.0, %v2458
    %v2460 = vand.u32 %v2371, 4294901760
    %v2461 = vsub.f32 %v2371, %v2460
    %v2462 = vand.u32 %v2461, 4294901760
    %v2463 = vsub.f32 %v2461, %v2462
    %v2464 = vand.u32 %v2463, 4294901760
    %2465 = vmatmul.f32.gmra.mxu0 %v2464
    %v2466 = vpop.f32.mrf.mxu0
    %v2467 = vadd.f32 0.0, %v2466
    %v2468 = vand.u32 %v2374, 4294901760
    %v2469 = vsub.f32 %v2374, %v2468
    %v2470 = vand.u32 %v2469, 4294901760
    %v2471 = vsub.f32 %v2469, %v2470
    %v2472 = vand.u32 %v2471, 4294901760
    %2473 = vmatmul.f32.gmra.mxu0 %v2472
    %v2474 = vpop.f32.mrf.mxu0
    %v2475 = vadd.f32 0.0, %v2474
    %v2476 = vand.u32 %v2377, 4294901760
    %v2477 = vsub.f32 %v2377, %v2476
    %v2478 = vand.u32 %v2477, 4294901760
    %v2479 = vsub.f32 %v2477, %v2478
    %v2480 = vand.u32 %v2479, 4294901760
    %2481 = vmatmul.f32.gmra.mxu0 %v2480
    %v2482 = vpop.f32.mrf.mxu0
    %v2483 = vadd.f32 0.0, %v2482
    %v2484 = vand.u32 %v2380, 4294901760
    %v2485 = vsub.f32 %v2380, %v2484
    %v2486 = vand.u32 %v2485, 4294901760
    %v2487 = vsub.f32 %v2485, %v2486
    %v2488 = vand.u32 %v2487, 4294901760
    %2489 = vmatmul.f32.gmra.mxu0 %v2488
    %v2490 = vpop.f32.mrf.mxu0
    %v2491 = vadd.f32 0.0, %v2490
    %v2492 = vand.u32 %v2383, 4294901760
    %v2493 = vsub.f32 %v2383, %v2492
    %v2494 = vand.u32 %v2493, 4294901760
    %v2495 = vsub.f32 %v2493, %v2494
    %v2496 = vand.u32 %v2495, 4294901760
    %2497 = vmatmul.f32.gmra.mxu0 %v2496
    %v2498 = vpop.f32.mrf.mxu0
    %v2499 = vadd.f32 0.0, %v2498
    %v2500 = vand.u32 %v2386, 4294901760
    %v2501 = vsub.f32 %v2386, %v2500
    %v2502 = vand.u32 %v2501, 4294901760
    %v2503 = vsub.f32 %v2501, %v2502
    %v2504 = vand.u32 %v2503, 4294901760
    %2505 = vmatmul.f32.gmra.mxu0 %v2504
    %v2506 = vpop.f32.mrf.mxu0
    %v2507 = vadd.f32 0.0, %v2506
    %v2508 = vand.u32 %v2389, 4294901760
    %v2509 = vsub.f32 %v2389, %v2508
    %v2510 = vand.u32 %v2509, 4294901760
    %v2511 = vsub.f32 %v2509, %v2510
    %v2512 = vand.u32 %v2511, 4294901760
    %2513 = vmatmul.f32.gmra.mxu0 %v2512
    %v2514 = vpop.f32.mrf.mxu0
    %v2515 = vadd.f32 0.0, %v2514
    %v2516 = vand.u32 %v2392, 4294901760
    %v2517 = vsub.f32 %v2392, %v2516
    %v2518 = vand.u32 %v2517, 4294901760
    %v2519 = vsub.f32 %v2517, %v2518
    %v2520 = vand.u32 %v2519, 4294901760
    %2521 = vmatmul.f32.gmra.mxu0 %v2520
    %v2522 = vpop.f32.mrf.mxu0
    %v2523 = vadd.f32 0.0, %v2522
    %v2524 = vand.u32 %v2395, 4294901760
    %v2525 = vsub.f32 %v2395, %v2524
    %v2526 = vand.u32 %v2525, 4294901760
    %v2527 = vsub.f32 %v2525, %v2526
    %v2528 = vand.u32 %v2527, 4294901760
    %2529 = vmatmul.f32.gmra.mxu0 %v2528
    %v2530 = vpop.f32.mrf.mxu0
    %v2531 = vadd.f32 0.0, %v2530
    %v2532 = vand.u32 %v2398, 4294901760
    %v2533 = vsub.f32 %v2398, %v2532
    %v2534 = vand.u32 %v2533, 4294901760
    %v2535 = vsub.f32 %v2533, %v2534
    %v2536 = vand.u32 %v2535, 4294901760
    %2537 = vmatmul.f32.gmra.mxu0 %v2536
    %v2538 = vpop.f32.mrf.mxu0
    %v2539 = vadd.f32 0.0, %v2538
    %v2540 = vand.u32 %v2401, 4294901760
    %v2541 = vsub.f32 %v2401, %v2540
    %v2542 = vand.u32 %v2541, 4294901760
    %v2543 = vsub.f32 %v2541, %v2542
    %v2544 = vand.u32 %v2543, 4294901760
    %2545 = vmatmul.f32.gmra.mxu0 %v2544
    %v2546 = vpop.f32.mrf.mxu0
    %v2547 = vadd.f32 0.0, %v2546
    %2548 = vdwg.mxu0
    %2549 = vmatpush.msra.mxu0 0.0
    %2550 = vmatpush.msra.mxu0 0.0
    %2551 = vmatpush.msra.mxu0 0.0
    %2552 = vmatpush.msra.mxu0 0.0
    %2553 = vmatpush.msra.mxu0 0.0
    %2554 = vmatpush.msra.mxu0 0.0
    %2555 = vmatpush.msra.mxu0 0.0
    %2556 = vmatpush.msra.mxu0 0.0
    %2557 = vmatpush.msra.mxu0 0.0
    %2558 = vmatpush.msra.mxu0 0.0
    %2559 = vmatpush.msra.mxu0 0.0
    %2560 = vmatpush.msra.mxu0 0.0
    %2561 = vmatpush.msra.mxu0 0.0
    %2562 = vmatpush.msra.mxu0 0.0
    %2563 = vmatpush.msra.mxu0 0.0
    %v2564 = vand.u32 %v93, 4294901760
    %v2565 = vsub.f32 %v93, %v2564
    %v2566 = vand.u32 %v2565, 4294901760
    %v2567 = vsub.f32 %v2565, %v2566
    %v2568 = vand.u32 %v2567, 4294901760
    %2569 = vmatpush.msra.mxu0 %v2568
    %v2570 = vand.u32 %v2356, 4294901760
    %2571 = vmatmul.f32.gmra.mxu0 %v2570
    %v2572 = vpop.f32.mrf.mxu0
    %v2573 = vadd.f32 %v2427, %v2572
    %v2574 = vand.u32 %v2359, 4294901760
    %2575 = vmatmul.f32.gmra.mxu0 %v2574
    %v2576 = vpop.f32.mrf.mxu0
    %v2577 = vadd.f32 %v2435, %v2576
    %v2578 = vand.u32 %v2362, 4294901760
    %2579 = vmatmul.f32.gmra.mxu0 %v2578
    %v2580 = vpop.f32.mrf.mxu0
    %v2581 = vadd.f32 %v2443, %v2580
    %v2582 = vand.u32 %v2365, 4294901760
    %2583 = vmatmul.f32.gmra.mxu0 %v2582
    %v2584 = vpop.f32.mrf.mxu0
    %v2585 = vadd.f32 %v2451, %v2584
    %v2586 = vand.u32 %v2368, 4294901760
    %2587 = vmatmul.f32.gmra.mxu0 %v2586
    %v2588 = vpop.f32.mrf.mxu0
    %v2589 = vadd.f32 %v2459, %v2588
    %v2590 = vand.u32 %v2371, 4294901760
    %2591 = vmatmul.f32.gmra.mxu0 %v2590
    %v2592 = vpop.f32.mrf.mxu0
    %v2593 = vadd.f32 %v2467, %v2592
    %v2594 = vand.u32 %v2374, 4294901760
    %2595 = vmatmul.f32.gmra.mxu0 %v2594
    %v2596 = vpop.f32.mrf.mxu0
    %v2597 = vadd.f32 %v2475, %v2596
    %v2598 = vand.u32 %v2377, 4294901760
    %2599 = vmatmul.f32.gmra.mxu0 %v2598
    %v2600 = vpop.f32.mrf.mxu0
    %v2601 = vadd.f32 %v2483, %v2600
    %v2602 = vand.u32 %v2380, 4294901760
    %2603 = vmatmul.f32.gmra.mxu0 %v2602
    %v2604 = vpop.f32.mrf.mxu0
    %v2605 = vadd.f32 %v2491, %v2604
    %v2606 = vand.u32 %v2383, 4294901760
    %2607 = vmatmul.f32.gmra.mxu0 %v2606
    %v2608 = vpop.f32.mrf.mxu0
    %v2609 = vadd.f32 %v2499, %v2608
    %v2610 = vand.u32 %v2386, 4294901760
    %2611 = vmatmul.f32.gmra.mxu0 %v2610
    %v2612 = vpop.f32.mrf.mxu0
    %v2613 = vadd.f32 %v2507, %v2612
    %v2614 = vand.u32 %v2389, 4294901760
    %2615 = vmatmul.f32.gmra.mxu0 %v2614
    %v2616 = vpop.f32.mrf.mxu0
    %v2617 = vadd.f32 %v2515, %v2616
    %v2618 = vand.u32 %v2392, 4294901760
    %2619 = vmatmul.f32.gmra.mxu0 %v2618
    %v2620 = vpop.f32.mrf.mxu0
    %v2621 = vadd.f32 %v2523, %v2620
    %v2622 = vand.u32 %v2395, 4294901760
    %2623 = vmatmul.f32.gmra.mxu0 %v2622
    %v2624 = vpop.f32.mrf.mxu0
    %v2625 = vadd.f32 %v2531, %v2624
    %v2626 = vand.u32 %v2398, 4294901760
    %2627 = vmatmul.f32.gmra.mxu0 %v2626
    %v2628 = vpop.f32.mrf.mxu0
    %v2629 = vadd.f32 %v2539, %v2628
    %v2630 = vand.u32 %v2401, 4294901760
    %2631 = vmatmul.f32.gmra.mxu0 %v2630
    %v2632 = vpop.f32.mrf.mxu0
    %v2633 = vadd.f32 %v2547, %v2632
    %2634 = vdwg.mxu0
    %2635 = vmatpush.msra.mxu0 0.0
    %2636 = vmatpush.msra.mxu0 0.0
    %2637 = vmatpush.msra.mxu0 0.0
    %2638 = vmatpush.msra.mxu0 0.0
    %2639 = vmatpush.msra.mxu0 0.0
    %2640 = vmatpush.msra.mxu0 0.0
    %2641 = vmatpush.msra.mxu0 0.0
    %2642 = vmatpush.msra.mxu0 0.0
    %2643 = vmatpush.msra.mxu0 0.0
    %2644 = vmatpush.msra.mxu0 0.0
    %2645 = vmatpush.msra.mxu0 0.0
    %2646 = vmatpush.msra.mxu0 0.0
    %2647 = vmatpush.msra.mxu0 0.0
    %2648 = vmatpush.msra.mxu0 0.0
    %2649 = vmatpush.msra.mxu0 0.0
    %v2650 = vand.u32 %v93, 4294901760
    %v2651 = vsub.f32 %v93, %v2650
    %2652 = vmatpush.msra.mxu0 %v2651
    %v2653 = vand.u32 %v2356, 4294901760
    %v2654 = vsub.f32 %v2356, %v2653
    %2655 = vmatmul.f32.gmra.mxu0 %v2654
    %v2656 = vpop.f32.mrf.mxu0
    %v2657 = vadd.f32 %v2573, %v2656
    %v2658 = vand.u32 %v2359, 4294901760
    %v2659 = vsub.f32 %v2359, %v2658
    %2660 = vmatmul.f32.gmra.mxu0 %v2659
    %v2661 = vpop.f32.mrf.mxu0
    %v2662 = vadd.f32 %v2577, %v2661
    %v2663 = vand.u32 %v2362, 4294901760
    %v2664 = vsub.f32 %v2362, %v2663
    %2665 = vmatmul.f32.gmra.mxu0 %v2664
    %v2666 = vpop.f32.mrf.mxu0
    %v2667 = vadd.f32 %v2581, %v2666
    %v2668 = vand.u32 %v2365, 4294901760
    %v2669 = vsub.f32 %v2365, %v2668
    %2670 = vmatmul.f32.gmra.mxu0 %v2669
    %v2671 = vpop.f32.mrf.mxu0
    %v2672 = vadd.f32 %v2585, %v2671
    %v2673 = vand.u32 %v2368, 4294901760
    %v2674 = vsub.f32 %v2368, %v2673
    %2675 = vmatmul.f32.gmra.mxu0 %v2674
    %v2676 = vpop.f32.mrf.mxu0
    %v2677 = vadd.f32 %v2589, %v2676
    %v2678 = vand.u32 %v2371, 4294901760
    %v2679 = vsub.f32 %v2371, %v2678
    %2680 = vmatmul.f32.gmra.mxu0 %v2679
    %v2681 = vpop.f32.mrf.mxu0
    %v2682 = vadd.f32 %v2593, %v2681
    %v2683 = vand.u32 %v2374, 4294901760
    %v2684 = vsub.f32 %v2374, %v2683
    %2685 = vmatmul.f32.gmra.mxu0 %v2684
    %v2686 = vpop.f32.mrf.mxu0
    %v2687 = vadd.f32 %v2597, %v2686
    %v2688 = vand.u32 %v2377, 4294901760
    %v2689 = vsub.f32 %v2377, %v2688
    %2690 = vmatmul.f32.gmra.mxu0 %v2689
    %v2691 = vpop.f32.mrf.mxu0
    %v2692 = vadd.f32 %v2601, %v2691
    %v2693 = vand.u32 %v2380, 4294901760
    %v2694 = vsub.f32 %v2380, %v2693
    %2695 = vmatmul.f32.gmra.mxu0 %v2694
    %v2696 = vpop.f32.mrf.mxu0
    %v2697 = vadd.f32 %v2605, %v2696
    %v2698 = vand.u32 %v2383, 4294901760
    %v2699 = vsub.f32 %v2383, %v2698
    %2700 = vmatmul.f32.gmra.mxu0 %v2699
    %v2701 = vpop.f32.mrf.mxu0
    %v2702 = vadd.f32 %v2609, %v2701
    %v2703 = vand.u32 %v2386, 4294901760
    %v2704 = vsub.f32 %v2386, %v2703
    %2705 = vmatmul.f32.gmra.mxu0 %v2704
    %v2706 = vpop.f32.mrf.mxu0
    %v2707 = vadd.f32 %v2613, %v2706
    %v2708 = vand.u32 %v2389, 4294901760
    %v2709 = vsub.f32 %v2389, %v2708
    %2710 = vmatmul.f32.gmra.mxu0 %v2709
    %v2711 = vpop.f32.mrf.mxu0
    %v2712 = vadd.f32 %v2617, %v2711
    %v2713 = vand.u32 %v2392, 4294901760
    %v2714 = vsub.f32 %v2392, %v2713
    %2715 = vmatmul.f32.gmra.mxu0 %v2714
    %v2716 = vpop.f32.mrf.mxu0
    %v2717 = vadd.f32 %v2621, %v2716
    %v2718 = vand.u32 %v2395, 4294901760
    %v2719 = vsub.f32 %v2395, %v2718
    %2720 = vmatmul.f32.gmra.mxu0 %v2719
    %v2721 = vpop.f32.mrf.mxu0
    %v2722 = vadd.f32 %v2625, %v2721
    %v2723 = vand.u32 %v2398, 4294901760
    %v2724 = vsub.f32 %v2398, %v2723
    %2725 = vmatmul.f32.gmra.mxu0 %v2724
    %v2726 = vpop.f32.mrf.mxu0
    %v2727 = vadd.f32 %v2629, %v2726
    %v2728 = vand.u32 %v2401, 4294901760
    %v2729 = vsub.f32 %v2401, %v2728
    %2730 = vmatmul.f32.gmra.mxu0 %v2729
    %v2731 = vpop.f32.mrf.mxu0
    %v2732 = vadd.f32 %v2633, %v2731
    %2733 = vdwg.mxu0
    %2734 = vmatpush.msra.mxu0 0.0
    %2735 = vmatpush.msra.mxu0 0.0
    %2736 = vmatpush.msra.mxu0 0.0
    %2737 = vmatpush.msra.mxu0 0.0
    %2738 = vmatpush.msra.mxu0 0.0
    %2739 = vmatpush.msra.mxu0 0.0
    %2740 = vmatpush.msra.mxu0 0.0
    %2741 = vmatpush.msra.mxu0 0.0
    %2742 = vmatpush.msra.mxu0 0.0
    %2743 = vmatpush.msra.mxu0 0.0
    %2744 = vmatpush.msra.mxu0 0.0
    %2745 = vmatpush.msra.mxu0 0.0
    %2746 = vmatpush.msra.mxu0 0.0
    %2747 = vmatpush.msra.mxu0 0.0
    %2748 = vmatpush.msra.mxu0 0.0
    %v2749 = vand.u32 %v93, 4294901760
    %2750 = vmatpush.msra.mxu0 %v2749
    %v2751 = vand.u32 %v2356, 4294901760
    %v2752 = vsub.f32 %v2356, %v2751
    %v2753 = vand.u32 %v2752, 4294901760
    %2754 = vmatmul.f32.gmra.mxu0 %v2753
    %v2755 = vpop.f32.mrf.mxu0
    %v2756 = vadd.f32 %v2657, %v2755
    %v2757 = vand.u32 %v2359, 4294901760
    %v2758 = vsub.f32 %v2359, %v2757
    %v2759 = vand.u32 %v2758, 4294901760
    %2760 = vmatmul.f32.gmra.mxu0 %v2759
    %v2761 = vpop.f32.mrf.mxu0
    %v2762 = vadd.f32 %v2662, %v2761
    %v2763 = vand.u32 %v2362, 4294901760
    %v2764 = vsub.f32 %v2362, %v2763
    %v2765 = vand.u32 %v2764, 4294901760
    %2766 = vmatmul.f32.gmra.mxu0 %v2765
    %v2767 = vpop.f32.mrf.mxu0
    %v2768 = vadd.f32 %v2667, %v2767
    %v2769 = vand.u32 %v2365, 4294901760
    %v2770 = vsub.f32 %v2365, %v2769
    %v2771 = vand.u32 %v2770, 4294901760
    %2772 = vmatmul.f32.gmra.mxu0 %v2771
    %v2773 = vpop.f32.mrf.mxu0
    %v2774 = vadd.f32 %v2672, %v2773
    %v2775 = vand.u32 %v2368, 4294901760
    %v2776 = vsub.f32 %v2368, %v2775
    %v2777 = vand.u32 %v2776, 4294901760
    %2778 = vmatmul.f32.gmra.mxu0 %v2777
    %v2779 = vpop.f32.mrf.mxu0
    %v2780 = vadd.f32 %v2677, %v2779
    %v2781 = vand.u32 %v2371, 4294901760
    %v2782 = vsub.f32 %v2371, %v2781
    %v2783 = vand.u32 %v2782, 4294901760
    %2784 = vmatmul.f32.gmra.mxu0 %v2783
    %v2785 = vpop.f32.mrf.mxu0
    %v2786 = vadd.f32 %v2682, %v2785
    %v2787 = vand.u32 %v2374, 4294901760
    %v2788 = vsub.f32 %v2374, %v2787
    %v2789 = vand.u32 %v2788, 4294901760
    %2790 = vmatmul.f32.gmra.mxu0 %v2789
    %v2791 = vpop.f32.mrf.mxu0
    %v2792 = vadd.f32 %v2687, %v2791
    %v2793 = vand.u32 %v2377, 4294901760
    %v2794 = vsub.f32 %v2377, %v2793
    %v2795 = vand.u32 %v2794, 4294901760
    %2796 = vmatmul.f32.gmra.mxu0 %v2795
    %v2797 = vpop.f32.mrf.mxu0
    %v2798 = vadd.f32 %v2692, %v2797
    %v2799 = vand.u32 %v2380, 4294901760
    %v2800 = vsub.f32 %v2380, %v2799
    %v2801 = vand.u32 %v2800, 4294901760
    %2802 = vmatmul.f32.gmra.mxu0 %v2801
    %v2803 = vpop.f32.mrf.mxu0
    %v2804 = vadd.f32 %v2697, %v2803
    %v2805 = vand.u32 %v2383, 4294901760
    %v2806 = vsub.f32 %v2383, %v2805
    %v2807 = vand.u32 %v2806, 4294901760
    %2808 = vmatmul.f32.gmra.mxu0 %v2807
    %v2809 = vpop.f32.mrf.mxu0
    %v2810 = vadd.f32 %v2702, %v2809
    %v2811 = vand.u32 %v2386, 4294901760
    %v2812 = vsub.f32 %v2386, %v2811
    %v2813 = vand.u32 %v2812, 4294901760
    %2814 = vmatmul.f32.gmra.mxu0 %v2813
    %v2815 = vpop.f32.mrf.mxu0
    %v2816 = vadd.f32 %v2707, %v2815
    %v2817 = vand.u32 %v2389, 4294901760
    %v2818 = vsub.f32 %v2389, %v2817
    %v2819 = vand.u32 %v2818, 4294901760
    %2820 = vmatmul.f32.gmra.mxu0 %v2819
    %v2821 = vpop.f32.mrf.mxu0
    %v2822 = vadd.f32 %v2712, %v2821
    %v2823 = vand.u32 %v2392, 4294901760
    %v2824 = vsub.f32 %v2392, %v2823
    %v2825 = vand.u32 %v2824, 4294901760
    %2826 = vmatmul.f32.gmra.mxu0 %v2825
    %v2827 = vpop.f32.mrf.mxu0
    %v2828 = vadd.f32 %v2717, %v2827
    %v2829 = vand.u32 %v2395, 4294901760
    %v2830 = vsub.f32 %v2395, %v2829
    %v2831 = vand.u32 %v2830, 4294901760
    %2832 = vmatmul.f32.gmra.mxu0 %v2831
    %v2833 = vpop.f32.mrf.mxu0
    %v2834 = vadd.f32 %v2722, %v2833
    %v2835 = vand.u32 %v2398, 4294901760
    %v2836 = vsub.f32 %v2398, %v2835
    %v2837 = vand.u32 %v2836, 4294901760
    %2838 = vmatmul.f32.gmra.mxu0 %v2837
    %v2839 = vpop.f32.mrf.mxu0
    %v2840 = vadd.f32 %v2727, %v2839
    %v2841 = vand.u32 %v2401, 4294901760
    %v2842 = vsub.f32 %v2401, %v2841
    %v2843 = vand.u32 %v2842, 4294901760
    %2844 = vmatmul.f32.gmra.mxu0 %v2843
    %v2845 = vpop.f32.mrf.mxu0
    %v2846 = vadd.f32 %v2732, %v2845
    %2847 = vdwg.mxu0
    %2848 = vmatpush.msra.mxu0 0.0
    %2849 = vmatpush.msra.mxu0 0.0
    %2850 = vmatpush.msra.mxu0 0.0
    %2851 = vmatpush.msra.mxu0 0.0
    %2852 = vmatpush.msra.mxu0 0.0
    %2853 = vmatpush.msra.mxu0 0.0
    %2854 = vmatpush.msra.mxu0 0.0
    %2855 = vmatpush.msra.mxu0 0.0
    %2856 = vmatpush.msra.mxu0 0.0
    %2857 = vmatpush.msra.mxu0 0.0
    %2858 = vmatpush.msra.mxu0 0.0
    %2859 = vmatpush.msra.mxu0 0.0
    %2860 = vmatpush.msra.mxu0 0.0
    %2861 = vmatpush.msra.mxu0 0.0
    %2862 = vmatpush.msra.mxu0 0.0
    %v2863 = vand.u32 %v93, 4294901760
    %v2864 = vsub.f32 %v93, %v2863
    %v2865 = vand.u32 %v2864, 4294901760
    %2866 = vmatpush.msra.mxu0 %v2865
    %v2867 = vand.u32 %v2356, 4294901760
    %2868 = vmatmul.f32.gmra.mxu0 %v2867
    %v2869 = vpop.f32.mrf.mxu0
    %v2870 = vadd.f32 %v2756, %v2869
    %v2871 = vand.u32 %v2359, 4294901760
    %2872 = vmatmul.f32.gmra.mxu0 %v2871
    %v2873 = vpop.f32.mrf.mxu0
    %v2874 = vadd.f32 %v2762, %v2873
    %v2875 = vand.u32 %v2362, 4294901760
    %2876 = vmatmul.f32.gmra.mxu0 %v2875
    %v2877 = vpop.f32.mrf.mxu0
    %v2878 = vadd.f32 %v2768, %v2877
    %v2879 = vand.u32 %v2365, 4294901760
    %2880 = vmatmul.f32.gmra.mxu0 %v2879
    %v2881 = vpop.f32.mrf.mxu0
    %v2882 = vadd.f32 %v2774, %v2881
    %v2883 = vand.u32 %v2368, 4294901760
    %2884 = vmatmul.f32.gmra.mxu0 %v2883
    %v2885 = vpop.f32.mrf.mxu0
    %v2886 = vadd.f32 %v2780, %v2885
    %v2887 = vand.u32 %v2371, 4294901760
    %2888 = vmatmul.f32.gmra.mxu0 %v2887
    %v2889 = vpop.f32.mrf.mxu0
    %v2890 = vadd.f32 %v2786, %v2889
    %v2891 = vand.u32 %v2374, 4294901760
    %2892 = vmatmul.f32.gmra.mxu0 %v2891
    %v2893 = vpop.f32.mrf.mxu0
    %v2894 = vadd.f32 %v2792, %v2893
    %v2895 = vand.u32 %v2377, 4294901760
    %2896 = vmatmul.f32.gmra.mxu0 %v2895
    %v2897 = vpop.f32.mrf.mxu0
    %v2898 = vadd.f32 %v2798, %v2897
    %v2899 = vand.u32 %v2380, 4294901760
    %2900 = vmatmul.f32.gmra.mxu0 %v2899
    %v2901 = vpop.f32.mrf.mxu0
    %v2902 = vadd.f32 %v2804, %v2901
    %v2903 = vand.u32 %v2383, 4294901760
    %2904 = vmatmul.f32.gmra.mxu0 %v2903
    %v2905 = vpop.f32.mrf.mxu0
    %v2906 = vadd.f32 %v2810, %v2905
    %v2907 = vand.u32 %v2386, 4294901760
    %2908 = vmatmul.f32.gmra.mxu0 %v2907
    %v2909 = vpop.f32.mrf.mxu0
    %v2910 = vadd.f32 %v2816, %v2909
    %v2911 = vand.u32 %v2389, 4294901760
    %2912 = vmatmul.f32.gmra.mxu0 %v2911
    %v2913 = vpop.f32.mrf.mxu0
    %v2914 = vadd.f32 %v2822, %v2913
    %v2915 = vand.u32 %v2392, 4294901760
    %2916 = vmatmul.f32.gmra.mxu0 %v2915
    %v2917 = vpop.f32.mrf.mxu0
    %v2918 = vadd.f32 %v2828, %v2917
    %v2919 = vand.u32 %v2395, 4294901760
    %2920 = vmatmul.f32.gmra.mxu0 %v2919
    %v2921 = vpop.f32.mrf.mxu0
    %v2922 = vadd.f32 %v2834, %v2921
    %v2923 = vand.u32 %v2398, 4294901760
    %2924 = vmatmul.f32.gmra.mxu0 %v2923
    %v2925 = vpop.f32.mrf.mxu0
    %v2926 = vadd.f32 %v2840, %v2925
    %v2927 = vand.u32 %v2401, 4294901760
    %2928 = vmatmul.f32.gmra.mxu0 %v2927
    %v2929 = vpop.f32.mrf.mxu0
    %v2930 = vadd.f32 %v2846, %v2929
    %2931 = vdwg.mxu0
    %2932 = vmatpush.msra.mxu0 0.0
    %2933 = vmatpush.msra.mxu0 0.0
    %2934 = vmatpush.msra.mxu0 0.0
    %2935 = vmatpush.msra.mxu0 0.0
    %2936 = vmatpush.msra.mxu0 0.0
    %2937 = vmatpush.msra.mxu0 0.0
    %2938 = vmatpush.msra.mxu0 0.0
    %2939 = vmatpush.msra.mxu0 0.0
    %2940 = vmatpush.msra.mxu0 0.0
    %2941 = vmatpush.msra.mxu0 0.0
    %2942 = vmatpush.msra.mxu0 0.0
    %2943 = vmatpush.msra.mxu0 0.0
    %2944 = vmatpush.msra.mxu0 0.0
    %2945 = vmatpush.msra.mxu0 0.0
    %2946 = vmatpush.msra.mxu0 0.0
    %v2947 = vand.u32 %v93, 4294901760
    %2948 = vmatpush.msra.mxu0 %v2947
    %v2949 = vand.u32 %v2356, 4294901760
    %2950 = vmatmul.f32.gmra.mxu0 %v2949
    %v2951 = vpop.f32.mrf.mxu0
    %v2952 = vadd.f32 %v2870, %v2951
    %v2953 = vand.u32 %v2359, 4294901760
    %2954 = vmatmul.f32.gmra.mxu0 %v2953
    %v2955 = vpop.f32.mrf.mxu0
    %v2956 = vadd.f32 %v2874, %v2955
    %v2957 = vand.u32 %v2362, 4294901760
    %2958 = vmatmul.f32.gmra.mxu0 %v2957
    %v2959 = vpop.f32.mrf.mxu0
    %v2960 = vadd.f32 %v2878, %v2959
    %v2961 = vand.u32 %v2365, 4294901760
    %2962 = vmatmul.f32.gmra.mxu0 %v2961
    %v2963 = vpop.f32.mrf.mxu0
    %v2964 = vadd.f32 %v2882, %v2963
    %v2965 = vand.u32 %v2368, 4294901760
    %2966 = vmatmul.f32.gmra.mxu0 %v2965
    %v2967 = vpop.f32.mrf.mxu0
    %v2968 = vadd.f32 %v2886, %v2967
    %v2969 = vand.u32 %v2371, 4294901760
    %2970 = vmatmul.f32.gmra.mxu0 %v2969
    %v2971 = vpop.f32.mrf.mxu0
    %v2972 = vadd.f32 %v2890, %v2971
    %v2973 = vand.u32 %v2374, 4294901760
    %2974 = vmatmul.f32.gmra.mxu0 %v2973
    %v2975 = vpop.f32.mrf.mxu0
    %v2976 = vadd.f32 %v2894, %v2975
    %v2977 = vand.u32 %v2377, 4294901760
    %2978 = vmatmul.f32.gmra.mxu0 %v2977
    %v2979 = vpop.f32.mrf.mxu0
    %v2980 = vadd.f32 %v2898, %v2979
    %v2981 = vand.u32 %v2380, 4294901760
    %2982 = vmatmul.f32.gmra.mxu0 %v2981
    %v2983 = vpop.f32.mrf.mxu0
    %v2984 = vadd.f32 %v2902, %v2983
    %v2985 = vand.u32 %v2383, 4294901760
    %2986 = vmatmul.f32.gmra.mxu0 %v2985
    %v2987 = vpop.f32.mrf.mxu0
    %v2988 = vadd.f32 %v2906, %v2987
    %v2989 = vand.u32 %v2386, 4294901760
    %2990 = vmatmul.f32.gmra.mxu0 %v2989
    %v2991 = vpop.f32.mrf.mxu0
    %v2992 = vadd.f32 %v2910, %v2991
    %v2993 = vand.u32 %v2389, 4294901760
    %2994 = vmatmul.f32.gmra.mxu0 %v2993
    %v2995 = vpop.f32.mrf.mxu0
    %v2996 = vadd.f32 %v2914, %v2995
    %v2997 = vand.u32 %v2392, 4294901760
    %2998 = vmatmul.f32.gmra.mxu0 %v2997
    %v2999 = vpop.f32.mrf.mxu0
    %v3000 = vadd.f32 %v2918, %v2999
    %v3001 = vand.u32 %v2395, 4294901760
    %3002 = vmatmul.f32.gmra.mxu0 %v3001
    %v3003 = vpop.f32.mrf.mxu0
    %v3004 = vadd.f32 %v2922, %v3003
    %v3005 = vand.u32 %v2398, 4294901760
    %3006 = vmatmul.f32.gmra.mxu0 %v3005
    %v3007 = vpop.f32.mrf.mxu0
    %v3008 = vadd.f32 %v2926, %v3007
    %v3009 = vand.u32 %v2401, 4294901760
    %3010 = vmatmul.f32.gmra.mxu0 %v3009
    %v3011 = vpop.f32.mrf.mxu0
    %v3012 = vadd.f32 %v2930, %v3011
    %3013 = vdwg.mxu0
    %v3014 = vmul.f32 %v2952, %v1202
    %v3015 = vmul.f32 %v2956, %v1202
    %v3016 = vmul.f32 %v2960, %v1202
    %v3017 = vmul.f32 %v2964, %v1202
    %v3018 = vmul.f32 %v2968, %v1202
    %v3019 = vmul.f32 %v2972, %v1202
    %v3020 = vmul.f32 %v2976, %v1202
    %v3021 = vmul.f32 %v2980, %v1202
    %v3022 = vmul.f32 %v2984, %v1206
    %v3023 = vmul.f32 %v2988, %v1206
    %v3024 = vmul.f32 %v2992, %v1206
    %v3025 = vmul.f32 %v2996, %v1206
    %v3026 = vmul.f32 %v3000, %v1206
    %v3027 = vmul.f32 %v3004, %v1206
    %v3028 = vmul.f32 %v3008, %v1206
    %v3029 = vmul.f32 %v3012, %v1206
    %v3030 = vsel %vm496, %v3014, 0.0
    %v3031 = vrot.slane %v3030, 4
    %v3032 = vadd.f32 %v3030, %v3031
    %v3033 = vrot.slane %v3032, 2
    %v3034 = vadd.f32 %v3032, %v3033
    %v3035 = vrot.slane %v3034, 1
    %v3036 = vadd.f32 %v3034, %v3035
    %v3037 = vsel %vm496, %v3015, 0.0
    %v3038 = vrot.slane %v3037, 4
    %v3039 = vadd.f32 %v3037, %v3038
    %v3040 = vrot.slane %v3039, 2
    %v3041 = vadd.f32 %v3039, %v3040
    %v3042 = vrot.slane %v3041, 1
    %v3043 = vadd.f32 %v3041, %v3042
    %v3044 = vsel %vm496, %v3016, 0.0
    %v3045 = vrot.slane %v3044, 4
    %v3046 = vadd.f32 %v3044, %v3045
    %v3047 = vrot.slane %v3046, 2
    %v3048 = vadd.f32 %v3046, %v3047
    %v3049 = vrot.slane %v3048, 1
    %v3050 = vadd.f32 %v3048, %v3049
    %v3051 = vsel %vm496, %v3017, 0.0
    %v3052 = vrot.slane %v3051, 4
    %v3053 = vadd.f32 %v3051, %v3052
    %v3054 = vrot.slane %v3053, 2
    %v3055 = vadd.f32 %v3053, %v3054
    %v3056 = vrot.slane %v3055, 1
    %v3057 = vadd.f32 %v3055, %v3056
    %v3058 = vsel %vm496, %v3018, 0.0
    %v3059 = vrot.slane %v3058, 4
    %v3060 = vadd.f32 %v3058, %v3059
    %v3061 = vrot.slane %v3060, 2
    %v3062 = vadd.f32 %v3060, %v3061
    %v3063 = vrot.slane %v3062, 1
    %v3064 = vadd.f32 %v3062, %v3063
    %v3065 = vsel %vm496, %v3019, 0.0
    %v3066 = vrot.slane %v3065, 4
    %v3067 = vadd.f32 %v3065, %v3066
    %v3068 = vrot.slane %v3067, 2
    %v3069 = vadd.f32 %v3067, %v3068
    %v3070 = vrot.slane %v3069, 1
    %v3071 = vadd.f32 %v3069, %v3070
    %v3072 = vsel %vm496, %v3020, 0.0
    %v3073 = vrot.slane %v3072, 4
    %v3074 = vadd.f32 %v3072, %v3073
    %v3075 = vrot.slane %v3074, 2
    %v3076 = vadd.f32 %v3074, %v3075
    %v3077 = vrot.slane %v3076, 1
    %v3078 = vadd.f32 %v3076, %v3077
    %v3079 = vsel %vm496, %v3021, 0.0
    %v3080 = vrot.slane %v3079, 4
    %v3081 = vadd.f32 %v3079, %v3080
    %v3082 = vrot.slane %v3081, 2
    %v3083 = vadd.f32 %v3081, %v3082
    %v3084 = vrot.slane %v3083, 1
    %v3085 = vadd.f32 %v3083, %v3084
    %v3086 = vsel %vm496, %v3022, 0.0
    %v3087 = vrot.slane %v3086, 4
    %v3088 = vadd.f32 %v3086, %v3087
    %v3089 = vrot.slane %v3088, 2
    %v3090 = vadd.f32 %v3088, %v3089
    %v3091 = vrot.slane %v3090, 1
    %v3092 = vadd.f32 %v3090, %v3091
    %v3093 = vsel %vm496, %v3023, 0.0
    %v3094 = vrot.slane %v3093, 4
    %v3095 = vadd.f32 %v3093, %v3094
    %v3096 = vrot.slane %v3095, 2
    %v3097 = vadd.f32 %v3095, %v3096
    %v3098 = vrot.slane %v3097, 1
    %v3099 = vadd.f32 %v3097, %v3098
    %v3100 = vsel %vm496, %v3024, 0.0
    %v3101 = vrot.slane %v3100, 4
    %v3102 = vadd.f32 %v3100, %v3101
    %v3103 = vrot.slane %v3102, 2
    %v3104 = vadd.f32 %v3102, %v3103
    %v3105 = vrot.slane %v3104, 1
    %v3106 = vadd.f32 %v3104, %v3105
    %v3107 = vsel %vm496, %v3025, 0.0
    %v3108 = vrot.slane %v3107, 4
    %v3109 = vadd.f32 %v3107, %v3108
    %v3110 = vrot.slane %v3109, 2
    %v3111 = vadd.f32 %v3109, %v3110
    %v3112 = vrot.slane %v3111, 1
    %v3113 = vadd.f32 %v3111, %v3112
    %v3114 = vsel %vm496, %v3026, 0.0
    %v3115 = vrot.slane %v3114, 4
    %v3116 = vadd.f32 %v3114, %v3115
    %v3117 = vrot.slane %v3116, 2
    %v3118 = vadd.f32 %v3116, %v3117
    %v3119 = vrot.slane %v3118, 1
    %v3120 = vadd.f32 %v3118, %v3119
    %v3121 = vsel %vm496, %v3027, 0.0
    %v3122 = vrot.slane %v3121, 4
    %v3123 = vadd.f32 %v3121, %v3122
    %v3124 = vrot.slane %v3123, 2
    %v3125 = vadd.f32 %v3123, %v3124
    %v3126 = vrot.slane %v3125, 1
    %v3127 = vadd.f32 %v3125, %v3126
    %v3128 = vsel %vm496, %v3028, 0.0
    %v3129 = vrot.slane %v3128, 4
    %v3130 = vadd.f32 %v3128, %v3129
    %v3131 = vrot.slane %v3130, 2
    %v3132 = vadd.f32 %v3130, %v3131
    %v3133 = vrot.slane %v3132, 1
    %v3134 = vadd.f32 %v3132, %v3133
    %v3135 = vsel %vm496, %v3029, 0.0
    %v3136 = vrot.slane %v3135, 4
    %v3137 = vadd.f32 %v3135, %v3136
    %v3138 = vrot.slane %v3137, 2
    %v3139 = vadd.f32 %v3137, %v3138
    %v3140 = vrot.slane %v3139, 1
    %v3141 = vadd.f32 %v3139, %v3140
    %vm3158 = vcmask 1041409
    %v3159 = vsel %vm3158, %v3043, %v3036
    %vm3160 = vcmask 1042434
    %v3161 = vsel %vm3160, %v3050, %v3159
    %vm3162 = vcmask 1043459
    %v3163 = vsel %vm3162, %v3057, %v3161
    %vm3164 = vcmask 1044484
    %v3165 = vsel %vm3164, %v3064, %v3163
    %vm3166 = vcmask 1045509
    %v3167 = vsel %vm3166, %v3071, %v3165
    %vm3168 = vcmask 1046534
    %v3169 = vsel %vm3168, %v3078, %v3167
    %vm3170 = vcmask 1047559
    %v3171 = vsel %vm3170, %v3085, %v3169
    %v3172 = vsel %vm3158, %v3099, %v3092
    %v3173 = vsel %vm3160, %v3106, %v3172
    %v3174 = vsel %vm3162, %v3113, %v3173
    %v3175 = vsel %vm3164, %v3120, %v3174
    %v3176 = vsel %vm3166, %v3127, %v3175
    %v3177 = vsel %vm3168, %v3134, %v3176
    %v3178 = vsel %vm3170, %v3141, %v3177
    %v3179 = vsel %vm496, %v3171, 0
    %v3181 = vsel %vm496, %v3178, 0
    %3183 = vmatpush.msra.mxu0 0.0
    %3184 = vmatpush.msra.mxu0 0.0
    %3185 = vmatpush.msra.mxu0 0.0
    %3186 = vmatpush.msra.mxu0 0.0
    %3187 = vmatpush.msra.mxu0 0.0
    %3188 = vmatpush.msra.mxu0 0.0
    %3189 = vmatpush.msra.mxu0 0.0
    %3190 = vmatpush.msra.mxu0 0.0
    %3191 = vmatpush.msra.mxu0 0.0
    %3192 = vmatpush.msra.mxu0 0.0
    %3193 = vmatpush.msra.mxu0 0.0
    %3194 = vmatpush.msra.mxu0 0.0
    %v3195 = vand.u32 %v64, 4294901760
    %3196 = vmatpush.msra.mxu0 %v3195
    %v3197 = vand.u32 %v63, 4294901760
    %3198 = vmatpush.msra.mxu0 %v3197
    %v3199 = vand.u32 %v62, 4294901760
    %3200 = vmatpush.msra.mxu0 %v3199
    %v3201 = vand.u32 %v61, 4294901760
    %3202 = vmatpush.msra.mxu0 %v3201
    %v3203 = vand.u32 %v3179, 4294901760
    %v3204 = vsub.f32 %v3179, %v3203
    %v3205 = vand.u32 %v3204, 4294901760
    %v3206 = vsub.f32 %v3204, %v3205
    %v3207 = vand.u32 %v3206, 4294901760
    %3208 = vmatmul.f32.gmra.mxu0 %v3207
    %v3209 = vpop.f32.mrf.mxu0
    %v3210 = vadd.f32 0.0, %v3209
    %v3211 = vand.u32 %v3181, 4294901760
    %v3212 = vsub.f32 %v3181, %v3211
    %v3213 = vand.u32 %v3212, 4294901760
    %v3214 = vsub.f32 %v3212, %v3213
    %v3215 = vand.u32 %v3214, 4294901760
    %3216 = vmatmul.f32.gmra.mxu0 %v3215
    %v3217 = vpop.f32.mrf.mxu0
    %v3218 = vadd.f32 0.0, %v3217
    %3219 = vdwg.mxu0
    %3220 = vmatpush.msra.mxu0 0.0
    %3221 = vmatpush.msra.mxu0 0.0
    %3222 = vmatpush.msra.mxu0 0.0
    %3223 = vmatpush.msra.mxu0 0.0
    %3224 = vmatpush.msra.mxu0 0.0
    %3225 = vmatpush.msra.mxu0 0.0
    %3226 = vmatpush.msra.mxu0 0.0
    %3227 = vmatpush.msra.mxu0 0.0
    %3228 = vmatpush.msra.mxu0 0.0
    %3229 = vmatpush.msra.mxu0 0.0
    %3230 = vmatpush.msra.mxu0 0.0
    %3231 = vmatpush.msra.mxu0 0.0
    %v3232 = vand.u32 %v64, 4294901760
    %v3233 = vsub.f32 %v64, %v3232
    %v3234 = vand.u32 %v3233, 4294901760
    %v3235 = vsub.f32 %v3233, %v3234
    %v3236 = vand.u32 %v3235, 4294901760
    %3237 = vmatpush.msra.mxu0 %v3236
    %v3238 = vand.u32 %v63, 4294901760
    %v3239 = vsub.f32 %v63, %v3238
    %v3240 = vand.u32 %v3239, 4294901760
    %v3241 = vsub.f32 %v3239, %v3240
    %v3242 = vand.u32 %v3241, 4294901760
    %3243 = vmatpush.msra.mxu0 %v3242
    %v3244 = vand.u32 %v62, 4294901760
    %v3245 = vsub.f32 %v62, %v3244
    %v3246 = vand.u32 %v3245, 4294901760
    %v3247 = vsub.f32 %v3245, %v3246
    %v3248 = vand.u32 %v3247, 4294901760
    %3249 = vmatpush.msra.mxu0 %v3248
    %v3250 = vand.u32 %v61, 4294901760
    %v3251 = vsub.f32 %v61, %v3250
    %v3252 = vand.u32 %v3251, 4294901760
    %v3253 = vsub.f32 %v3251, %v3252
    %v3254 = vand.u32 %v3253, 4294901760
    %3255 = vmatpush.msra.mxu0 %v3254
    %v3256 = vand.u32 %v3179, 4294901760
    %3257 = vmatmul.f32.gmra.mxu0 %v3256
    %v3258 = vpop.f32.mrf.mxu0
    %v3259 = vadd.f32 %v3210, %v3258
    %v3260 = vand.u32 %v3181, 4294901760
    %3261 = vmatmul.f32.gmra.mxu0 %v3260
    %v3262 = vpop.f32.mrf.mxu0
    %v3263 = vadd.f32 %v3218, %v3262
    %3264 = vdwg.mxu0
    %3265 = vmatpush.msra.mxu0 0.0
    %3266 = vmatpush.msra.mxu0 0.0
    %3267 = vmatpush.msra.mxu0 0.0
    %3268 = vmatpush.msra.mxu0 0.0
    %3269 = vmatpush.msra.mxu0 0.0
    %3270 = vmatpush.msra.mxu0 0.0
    %3271 = vmatpush.msra.mxu0 0.0
    %3272 = vmatpush.msra.mxu0 0.0
    %3273 = vmatpush.msra.mxu0 0.0
    %3274 = vmatpush.msra.mxu0 0.0
    %3275 = vmatpush.msra.mxu0 0.0
    %3276 = vmatpush.msra.mxu0 0.0
    %v3277 = vand.u32 %v64, 4294901760
    %v3278 = vsub.f32 %v64, %v3277
    %3279 = vmatpush.msra.mxu0 %v3278
    %v3280 = vand.u32 %v63, 4294901760
    %v3281 = vsub.f32 %v63, %v3280
    %3282 = vmatpush.msra.mxu0 %v3281
    %v3283 = vand.u32 %v62, 4294901760
    %v3284 = vsub.f32 %v62, %v3283
    %3285 = vmatpush.msra.mxu0 %v3284
    %v3286 = vand.u32 %v61, 4294901760
    %v3287 = vsub.f32 %v61, %v3286
    %3288 = vmatpush.msra.mxu0 %v3287
    %v3289 = vand.u32 %v3179, 4294901760
    %v3290 = vsub.f32 %v3179, %v3289
    %3291 = vmatmul.f32.gmra.mxu0 %v3290
    %v3292 = vpop.f32.mrf.mxu0
    %v3293 = vadd.f32 %v3259, %v3292
    %v3294 = vand.u32 %v3181, 4294901760
    %v3295 = vsub.f32 %v3181, %v3294
    %3296 = vmatmul.f32.gmra.mxu0 %v3295
    %v3297 = vpop.f32.mrf.mxu0
    %v3298 = vadd.f32 %v3263, %v3297
    %3299 = vdwg.mxu0
    %3300 = vmatpush.msra.mxu0 0.0
    %3301 = vmatpush.msra.mxu0 0.0
    %3302 = vmatpush.msra.mxu0 0.0
    %3303 = vmatpush.msra.mxu0 0.0
    %3304 = vmatpush.msra.mxu0 0.0
    %3305 = vmatpush.msra.mxu0 0.0
    %3306 = vmatpush.msra.mxu0 0.0
    %3307 = vmatpush.msra.mxu0 0.0
    %3308 = vmatpush.msra.mxu0 0.0
    %3309 = vmatpush.msra.mxu0 0.0
    %3310 = vmatpush.msra.mxu0 0.0
    %3311 = vmatpush.msra.mxu0 0.0
    %v3312 = vand.u32 %v64, 4294901760
    %3313 = vmatpush.msra.mxu0 %v3312
    %v3314 = vand.u32 %v63, 4294901760
    %3315 = vmatpush.msra.mxu0 %v3314
    %v3316 = vand.u32 %v62, 4294901760
    %3317 = vmatpush.msra.mxu0 %v3316
    %v3318 = vand.u32 %v61, 4294901760
    %3319 = vmatpush.msra.mxu0 %v3318
    %v3320 = vand.u32 %v3179, 4294901760
    %v3321 = vsub.f32 %v3179, %v3320
    %v3322 = vand.u32 %v3321, 4294901760
    %3323 = vmatmul.f32.gmra.mxu0 %v3322
    %v3324 = vpop.f32.mrf.mxu0
    %v3325 = vadd.f32 %v3293, %v3324
    %v3326 = vand.u32 %v3181, 4294901760
    %v3327 = vsub.f32 %v3181, %v3326
    %v3328 = vand.u32 %v3327, 4294901760
    %3329 = vmatmul.f32.gmra.mxu0 %v3328
    %v3330 = vpop.f32.mrf.mxu0
    %v3331 = vadd.f32 %v3298, %v3330
    %3332 = vdwg.mxu0
    %3333 = vmatpush.msra.mxu0 0.0
    %3334 = vmatpush.msra.mxu0 0.0
    %3335 = vmatpush.msra.mxu0 0.0
    %3336 = vmatpush.msra.mxu0 0.0
    %3337 = vmatpush.msra.mxu0 0.0
    %3338 = vmatpush.msra.mxu0 0.0
    %3339 = vmatpush.msra.mxu0 0.0
    %3340 = vmatpush.msra.mxu0 0.0
    %3341 = vmatpush.msra.mxu0 0.0
    %3342 = vmatpush.msra.mxu0 0.0
    %3343 = vmatpush.msra.mxu0 0.0
    %3344 = vmatpush.msra.mxu0 0.0
    %v3345 = vand.u32 %v64, 4294901760
    %v3346 = vsub.f32 %v64, %v3345
    %v3347 = vand.u32 %v3346, 4294901760
    %3348 = vmatpush.msra.mxu0 %v3347
    %v3349 = vand.u32 %v63, 4294901760
    %v3350 = vsub.f32 %v63, %v3349
    %v3351 = vand.u32 %v3350, 4294901760
    %3352 = vmatpush.msra.mxu0 %v3351
    %v3353 = vand.u32 %v62, 4294901760
    %v3354 = vsub.f32 %v62, %v3353
    %v3355 = vand.u32 %v3354, 4294901760
    %3356 = vmatpush.msra.mxu0 %v3355
    %v3357 = vand.u32 %v61, 4294901760
    %v3358 = vsub.f32 %v61, %v3357
    %v3359 = vand.u32 %v3358, 4294901760
    %3360 = vmatpush.msra.mxu0 %v3359
    %v3361 = vand.u32 %v3179, 4294901760
    %3362 = vmatmul.f32.gmra.mxu0 %v3361
    %v3363 = vpop.f32.mrf.mxu0
    %v3364 = vadd.f32 %v3325, %v3363
    %v3365 = vand.u32 %v3181, 4294901760
    %3366 = vmatmul.f32.gmra.mxu0 %v3365
    %v3367 = vpop.f32.mrf.mxu0
    %v3368 = vadd.f32 %v3331, %v3367
    %3369 = vdwg.mxu0
    %3370 = vmatpush.msra.mxu0 0.0
    %3371 = vmatpush.msra.mxu0 0.0
    %3372 = vmatpush.msra.mxu0 0.0
    %3373 = vmatpush.msra.mxu0 0.0
    %3374 = vmatpush.msra.mxu0 0.0
    %3375 = vmatpush.msra.mxu0 0.0
    %3376 = vmatpush.msra.mxu0 0.0
    %3377 = vmatpush.msra.mxu0 0.0
    %3378 = vmatpush.msra.mxu0 0.0
    %3379 = vmatpush.msra.mxu0 0.0
    %3380 = vmatpush.msra.mxu0 0.0
    %3381 = vmatpush.msra.mxu0 0.0
    %v3382 = vand.u32 %v64, 4294901760
    %3383 = vmatpush.msra.mxu0 %v3382
    %v3384 = vand.u32 %v63, 4294901760
    %3385 = vmatpush.msra.mxu0 %v3384
    %v3386 = vand.u32 %v62, 4294901760
    %3387 = vmatpush.msra.mxu0 %v3386
    %v3388 = vand.u32 %v61, 4294901760
    %3389 = vmatpush.msra.mxu0 %v3388
    %v3390 = vand.u32 %v3179, 4294901760
    %3391 = vmatmul.f32.gmra.mxu0 %v3390
    %v3392 = vpop.f32.mrf.mxu0
    %v3393 = vadd.f32 %v3364, %v3392
    %v3394 = vand.u32 %v3181, 4294901760
    %3395 = vmatmul.f32.gmra.mxu0 %v3394
    %v3396 = vpop.f32.mrf.mxu0
    %v3397 = vadd.f32 %v3368, %v3396
    %3398 = vdwg.mxu0
    %v3399 = vadd.f32 %v494, %v3393
    %v3400 = vadd.f32 %v495, %v3397
    %v3401 = vsel %vm496, %v3399, 0.0
    %3402 = vadd.xlane.f32.xlu0 %v3401
    %v3403 = vpop.xlane.xlu0 %3402
    %v3404 = vsel %vm496, %v3400, 0.0
    %3405 = vadd.xlane.f32.xlu0 %v3404
    %v3406 = vpop.xlane.xlu0 %3405
    %v3407 = vmul.f32 %v3403, %v509
    %v3408 = vmul.f32 %v3406, %v509
    %v3409 = vsub.f32 %v3399, %v3407
    %v3410 = vsub.f32 %v3400, %v3408
    %v3411 = vmul.f32 %v3409, %v3409
    %v3412 = vmul.f32 %v3410, %v3410
    %v3413 = vsel %vm496, %v3411, 0.0
    %3414 = vadd.xlane.f32.xlu0 %v3413
    %v3415 = vpop.xlane.xlu0 %3414
    %v3416 = vsel %vm496, %v3412, 0.0
    %3417 = vadd.xlane.f32.xlu0 %v3416
    %v3418 = vpop.xlane.xlu0 %3417
    %v3419 = vmul.f32 %v3415, %v509
    %v3420 = vmul.f32 %v3418, %v509
    %v3421 = vadd.f32 %v3419, 1e-05
    %v3422 = vadd.f32 %v3420, 1e-05
    %v3423 = vrsqrt.pop %v3421
    %v3424 = vmul.f32 %v3423, %v3421
    %v3425 = vmul.f32 %v3424, %v3423
    %v3426 = vmul.f32 0.5, %v3425
    %v3427 = vsub.f32 1.5, %v3426
    %v3428 = vmul.f32 %v3423, %v3427
    %vm3429 = vweird.f32 %v3421
    %vm3430 = vweird.f32 %v3423
    %vm3431 = vmor %vm3429, %vm3430
    %v3432 = vsel %vm3431, %v3423, %v3428
    %v3433 = vrsqrt.pop %v3422
    %v3434 = vmul.f32 %v3433, %v3422
    %v3435 = vmul.f32 %v3434, %v3433
    %v3436 = vmul.f32 0.5, %v3435
    %v3437 = vsub.f32 1.5, %v3436
    %v3438 = vmul.f32 %v3433, %v3437
    %vm3439 = vweird.f32 %v3422
    %vm3440 = vweird.f32 %v3433
    %vm3441 = vmor %vm3439, %vm3440
    %v3442 = vsel %vm3441, %v3433, %v3438
    %v3443 = vmul.f32 %v3409, %v3432
    %v3444 = vmul.f32 %v3410, %v3442
    %v3445 = vperm.slane %v96, 0
    %v3446 = vmul.f32 %v3443, %v3445
    %v3447 = vmul.f32 %v3444, %v3445
    %v3448 = vperm.slane %v97, 0
    %v3449 = vadd.f32 %v3446, %v3448
    %v3450 = vadd.f32 %v3447, %v3448
    %v3451 = vperm.slane %v98, 0
    %v3453 = vsel %vm496, %v3449, 0
    %v3456 = vsel %vm496, %v3450, 0
    %3458 = vmatpush.msra.mxu0 0.0
    %3459 = vmatpush.msra.mxu0 0.0
    %3460 = vmatpush.msra.mxu0 0.0
    %3461 = vmatpush.msra.mxu0 0.0
    %3462 = vmatpush.msra.mxu0 0.0
    %3463 = vmatpush.msra.mxu0 0.0
    %3464 = vmatpush.msra.mxu0 0.0
    %3465 = vmatpush.msra.mxu0 0.0
    %3466 = vmatpush.msra.mxu0 0.0
    %3467 = vmatpush.msra.mxu0 0.0
    %3468 = vmatpush.msra.mxu0 0.0
    %3469 = vmatpush.msra.mxu0 0.0
    %v3470 = vand.u32 %v68, 4294901760
    %3471 = vmatpush.msra.mxu0 %v3470
    %v3472 = vand.u32 %v67, 4294901760
    %3473 = vmatpush.msra.mxu0 %v3472
    %v3474 = vand.u32 %v66, 4294901760
    %3475 = vmatpush.msra.mxu0 %v3474
    %v3476 = vand.u32 %v65, 4294901760
    %3477 = vmatpush.msra.mxu0 %v3476
    %v3478 = vand.u32 %v3453, 4294901760
    %v3479 = vsub.f32 %v3453, %v3478
    %v3480 = vand.u32 %v3479, 4294901760
    %v3481 = vsub.f32 %v3479, %v3480
    %v3482 = vand.u32 %v3481, 4294901760
    %3483 = vmatmul.f32.gmra.mxu0 %v3482
    %v3484 = vpop.f32.mrf.mxu0
    %v3485 = vadd.f32 %v3451, %v3484
    %v3486 = vand.u32 %v3456, 4294901760
    %v3487 = vsub.f32 %v3456, %v3486
    %v3488 = vand.u32 %v3487, 4294901760
    %v3489 = vsub.f32 %v3487, %v3488
    %v3490 = vand.u32 %v3489, 4294901760
    %3491 = vmatmul.f32.gmra.mxu0 %v3490
    %v3492 = vpop.f32.mrf.mxu0
    %v3493 = vadd.f32 %v3451, %v3492
    %3494 = vdwg.mxu0
    %3495 = vmatpush.msra.mxu0 0.0
    %3496 = vmatpush.msra.mxu0 0.0
    %3497 = vmatpush.msra.mxu0 0.0
    %3498 = vmatpush.msra.mxu0 0.0
    %3499 = vmatpush.msra.mxu0 0.0
    %3500 = vmatpush.msra.mxu0 0.0
    %3501 = vmatpush.msra.mxu0 0.0
    %3502 = vmatpush.msra.mxu0 0.0
    %3503 = vmatpush.msra.mxu0 0.0
    %3504 = vmatpush.msra.mxu0 0.0
    %3505 = vmatpush.msra.mxu0 0.0
    %3506 = vmatpush.msra.mxu0 0.0
    %v3507 = vand.u32 %v68, 4294901760
    %v3508 = vsub.f32 %v68, %v3507
    %v3509 = vand.u32 %v3508, 4294901760
    %v3510 = vsub.f32 %v3508, %v3509
    %v3511 = vand.u32 %v3510, 4294901760
    %3512 = vmatpush.msra.mxu0 %v3511
    %v3513 = vand.u32 %v67, 4294901760
    %v3514 = vsub.f32 %v67, %v3513
    %v3515 = vand.u32 %v3514, 4294901760
    %v3516 = vsub.f32 %v3514, %v3515
    %v3517 = vand.u32 %v3516, 4294901760
    %3518 = vmatpush.msra.mxu0 %v3517
    %v3519 = vand.u32 %v66, 4294901760
    %v3520 = vsub.f32 %v66, %v3519
    %v3521 = vand.u32 %v3520, 4294901760
    %v3522 = vsub.f32 %v3520, %v3521
    %v3523 = vand.u32 %v3522, 4294901760
    %3524 = vmatpush.msra.mxu0 %v3523
    %v3525 = vand.u32 %v65, 4294901760
    %v3526 = vsub.f32 %v65, %v3525
    %v3527 = vand.u32 %v3526, 4294901760
    %v3528 = vsub.f32 %v3526, %v3527
    %v3529 = vand.u32 %v3528, 4294901760
    %3530 = vmatpush.msra.mxu0 %v3529
    %v3531 = vand.u32 %v3453, 4294901760
    %3532 = vmatmul.f32.gmra.mxu0 %v3531
    %v3533 = vpop.f32.mrf.mxu0
    %v3534 = vadd.f32 %v3485, %v3533
    %v3535 = vand.u32 %v3456, 4294901760
    %3536 = vmatmul.f32.gmra.mxu0 %v3535
    %v3537 = vpop.f32.mrf.mxu0
    %v3538 = vadd.f32 %v3493, %v3537
    %3539 = vdwg.mxu0
    %3540 = vmatpush.msra.mxu0 0.0
    %3541 = vmatpush.msra.mxu0 0.0
    %3542 = vmatpush.msra.mxu0 0.0
    %3543 = vmatpush.msra.mxu0 0.0
    %3544 = vmatpush.msra.mxu0 0.0
    %3545 = vmatpush.msra.mxu0 0.0
    %3546 = vmatpush.msra.mxu0 0.0
    %3547 = vmatpush.msra.mxu0 0.0
    %3548 = vmatpush.msra.mxu0 0.0
    %3549 = vmatpush.msra.mxu0 0.0
    %3550 = vmatpush.msra.mxu0 0.0
    %3551 = vmatpush.msra.mxu0 0.0
    %v3552 = vand.u32 %v68, 4294901760
    %v3553 = vsub.f32 %v68, %v3552
    %3554 = vmatpush.msra.mxu0 %v3553
    %v3555 = vand.u32 %v67, 4294901760
    %v3556 = vsub.f32 %v67, %v3555
    %3557 = vmatpush.msra.mxu0 %v3556
    %v3558 = vand.u32 %v66, 4294901760
    %v3559 = vsub.f32 %v66, %v3558
    %3560 = vmatpush.msra.mxu0 %v3559
    %v3561 = vand.u32 %v65, 4294901760
    %v3562 = vsub.f32 %v65, %v3561
    %3563 = vmatpush.msra.mxu0 %v3562
    %v3564 = vand.u32 %v3453, 4294901760
    %v3565 = vsub.f32 %v3453, %v3564
    %3566 = vmatmul.f32.gmra.mxu0 %v3565
    %v3567 = vpop.f32.mrf.mxu0
    %v3568 = vadd.f32 %v3534, %v3567
    %v3569 = vand.u32 %v3456, 4294901760
    %v3570 = vsub.f32 %v3456, %v3569
    %3571 = vmatmul.f32.gmra.mxu0 %v3570
    %v3572 = vpop.f32.mrf.mxu0
    %v3573 = vadd.f32 %v3538, %v3572
    %3574 = vdwg.mxu0
    %3575 = vmatpush.msra.mxu0 0.0
    %3576 = vmatpush.msra.mxu0 0.0
    %3577 = vmatpush.msra.mxu0 0.0
    %3578 = vmatpush.msra.mxu0 0.0
    %3579 = vmatpush.msra.mxu0 0.0
    %3580 = vmatpush.msra.mxu0 0.0
    %3581 = vmatpush.msra.mxu0 0.0
    %3582 = vmatpush.msra.mxu0 0.0
    %3583 = vmatpush.msra.mxu0 0.0
    %3584 = vmatpush.msra.mxu0 0.0
    %3585 = vmatpush.msra.mxu0 0.0
    %3586 = vmatpush.msra.mxu0 0.0
    %v3587 = vand.u32 %v68, 4294901760
    %3588 = vmatpush.msra.mxu0 %v3587
    %v3589 = vand.u32 %v67, 4294901760
    %3590 = vmatpush.msra.mxu0 %v3589
    %v3591 = vand.u32 %v66, 4294901760
    %3592 = vmatpush.msra.mxu0 %v3591
    %v3593 = vand.u32 %v65, 4294901760
    %3594 = vmatpush.msra.mxu0 %v3593
    %v3595 = vand.u32 %v3453, 4294901760
    %v3596 = vsub.f32 %v3453, %v3595
    %v3597 = vand.u32 %v3596, 4294901760
    %3598 = vmatmul.f32.gmra.mxu0 %v3597
    %v3599 = vpop.f32.mrf.mxu0
    %v3600 = vadd.f32 %v3568, %v3599
    %v3601 = vand.u32 %v3456, 4294901760
    %v3602 = vsub.f32 %v3456, %v3601
    %v3603 = vand.u32 %v3602, 4294901760
    %3604 = vmatmul.f32.gmra.mxu0 %v3603
    %v3605 = vpop.f32.mrf.mxu0
    %v3606 = vadd.f32 %v3573, %v3605
    %3607 = vdwg.mxu0
    %3608 = vmatpush.msra.mxu0 0.0
    %3609 = vmatpush.msra.mxu0 0.0
    %3610 = vmatpush.msra.mxu0 0.0
    %3611 = vmatpush.msra.mxu0 0.0
    %3612 = vmatpush.msra.mxu0 0.0
    %3613 = vmatpush.msra.mxu0 0.0
    %3614 = vmatpush.msra.mxu0 0.0
    %3615 = vmatpush.msra.mxu0 0.0
    %3616 = vmatpush.msra.mxu0 0.0
    %3617 = vmatpush.msra.mxu0 0.0
    %3618 = vmatpush.msra.mxu0 0.0
    %3619 = vmatpush.msra.mxu0 0.0
    %v3620 = vand.u32 %v68, 4294901760
    %v3621 = vsub.f32 %v68, %v3620
    %v3622 = vand.u32 %v3621, 4294901760
    %3623 = vmatpush.msra.mxu0 %v3622
    %v3624 = vand.u32 %v67, 4294901760
    %v3625 = vsub.f32 %v67, %v3624
    %v3626 = vand.u32 %v3625, 4294901760
    %3627 = vmatpush.msra.mxu0 %v3626
    %v3628 = vand.u32 %v66, 4294901760
    %v3629 = vsub.f32 %v66, %v3628
    %v3630 = vand.u32 %v3629, 4294901760
    %3631 = vmatpush.msra.mxu0 %v3630
    %v3632 = vand.u32 %v65, 4294901760
    %v3633 = vsub.f32 %v65, %v3632
    %v3634 = vand.u32 %v3633, 4294901760
    %3635 = vmatpush.msra.mxu0 %v3634
    %v3636 = vand.u32 %v3453, 4294901760
    %3637 = vmatmul.f32.gmra.mxu0 %v3636
    %v3638 = vpop.f32.mrf.mxu0
    %v3639 = vadd.f32 %v3600, %v3638
    %v3640 = vand.u32 %v3456, 4294901760
    %3641 = vmatmul.f32.gmra.mxu0 %v3640
    %v3642 = vpop.f32.mrf.mxu0
    %v3643 = vadd.f32 %v3606, %v3642
    %3644 = vdwg.mxu0
    %3645 = vmatpush.msra.mxu0 0.0
    %3646 = vmatpush.msra.mxu0 0.0
    %3647 = vmatpush.msra.mxu0 0.0
    %3648 = vmatpush.msra.mxu0 0.0
    %3649 = vmatpush.msra.mxu0 0.0
    %3650 = vmatpush.msra.mxu0 0.0
    %3651 = vmatpush.msra.mxu0 0.0
    %3652 = vmatpush.msra.mxu0 0.0
    %3653 = vmatpush.msra.mxu0 0.0
    %3654 = vmatpush.msra.mxu0 0.0
    %3655 = vmatpush.msra.mxu0 0.0
    %3656 = vmatpush.msra.mxu0 0.0
    %v3657 = vand.u32 %v68, 4294901760
    %3658 = vmatpush.msra.mxu0 %v3657
    %v3659 = vand.u32 %v67, 4294901760
    %3660 = vmatpush.msra.mxu0 %v3659
    %v3661 = vand.u32 %v66, 4294901760
    %3662 = vmatpush.msra.mxu0 %v3661
    %v3663 = vand.u32 %v65, 4294901760
    %3664 = vmatpush.msra.mxu0 %v3663
    %v3665 = vand.u32 %v3453, 4294901760
    %3666 = vmatmul.f32.gmra.mxu0 %v3665
    %v3667 = vpop.f32.mrf.mxu0
    %v3668 = vadd.f32 %v3639, %v3667
    %v3669 = vand.u32 %v3456, 4294901760
    %3670 = vmatmul.f32.gmra.mxu0 %v3669
    %v3671 = vpop.f32.mrf.mxu0
    %v3672 = vadd.f32 %v3643, %v3671
    %3673 = vdwg.mxu0
    %v3674 = vmul.f32 %v3668, 0.5
    %v3675 = vmul.f32 %v3672, 0.5
    %v3676 = vmul.f32 %v3668, 0.044715
    %v3677 = vmul.f32 %v3672, 0.044715
    %v3678 = vmul.f32 %v3676, %v3668
    %v3679 = vmul.f32 %v3677, %v3672
    %v3680 = vmul.f32 %v3678, %v3668
    %v3681 = vmul.f32 %v3679, %v3672
    %v3682 = vadd.f32 %v3668, %v3680
    %v3683 = vadd.f32 %v3672, %v3681
    %v3684 = vmul.f32 %v3682, 0.7978846
    %v3685 = vmul.f32 %v3683, 0.7978846
    %v3686 = vtanh.pop %v3684
    %v3687 = vtanh.pop %v3685
    %v3688 = vadd.f32 %v3686, 1.0
    %v3689 = vadd.f32 %v3687, 1.0
    %v3690 = vmul.f32 %v3674, %v3688
    %v3691 = vmul.f32 %v3675, %v3689
    %v3692 = vperm.slane %v99, 0
    %v3693 = vand.u32 %v84, 4294901760
    %3694 = vmatpush.msra.mxu0 %v3693
    %v3695 = vand.u32 %v83, 4294901760
    %3696 = vmatpush.msra.mxu0 %v3695
    %v3697 = vand.u32 %v82, 4294901760
    %3698 = vmatpush.msra.mxu0 %v3697
    %v3699 = vand.u32 %v81, 4294901760
    %3700 = vmatpush.msra.mxu0 %v3699
    %v3701 = vand.u32 %v80, 4294901760
    %3702 = vmatpush.msra.mxu0 %v3701
    %v3703 = vand.u32 %v79, 4294901760
    %3704 = vmatpush.msra.mxu0 %v3703
    %v3705 = vand.u32 %v78, 4294901760
    %3706 = vmatpush.msra.mxu0 %v3705
    %v3707 = vand.u32 %v77, 4294901760
    %3708 = vmatpush.msra.mxu0 %v3707
    %v3709 = vand.u32 %v76, 4294901760
    %3710 = vmatpush.msra.mxu0 %v3709
    %v3711 = vand.u32 %v75, 4294901760
    %3712 = vmatpush.msra.mxu0 %v3711
    %v3713 = vand.u32 %v74, 4294901760
    %3714 = vmatpush.msra.mxu0 %v3713
    %v3715 = vand.u32 %v73, 4294901760
    %3716 = vmatpush.msra.mxu0 %v3715
    %v3717 = vand.u32 %v72, 4294901760
    %3718 = vmatpush.msra.mxu0 %v3717
    %v3719 = vand.u32 %v71, 4294901760
    %3720 = vmatpush.msra.mxu0 %v3719
    %v3721 = vand.u32 %v70, 4294901760
    %3722 = vmatpush.msra.mxu0 %v3721
    %v3723 = vand.u32 %v69, 4294901760
    %3724 = vmatpush.msra.mxu0 %v3723
    %v3725 = vand.u32 %v3690, 4294901760
    %v3726 = vsub.f32 %v3690, %v3725
    %v3727 = vand.u32 %v3726, 4294901760
    %v3728 = vsub.f32 %v3726, %v3727
    %v3729 = vand.u32 %v3728, 4294901760
    %3730 = vmatmul.f32.gmra.mxu0 %v3729
    %v3731 = vpop.f32.mrf.mxu0
    %v3732 = vadd.f32 %v3692, %v3731
    %v3733 = vand.u32 %v3691, 4294901760
    %v3734 = vsub.f32 %v3691, %v3733
    %v3735 = vand.u32 %v3734, 4294901760
    %v3736 = vsub.f32 %v3734, %v3735
    %v3737 = vand.u32 %v3736, 4294901760
    %3738 = vmatmul.f32.gmra.mxu0 %v3737
    %v3739 = vpop.f32.mrf.mxu0
    %v3740 = vadd.f32 %v3692, %v3739
    %3741 = vdwg.mxu0
    %v3742 = vand.u32 %v84, 4294901760
    %v3743 = vsub.f32 %v84, %v3742
    %v3744 = vand.u32 %v3743, 4294901760
    %v3745 = vsub.f32 %v3743, %v3744
    %v3746 = vand.u32 %v3745, 4294901760
    %3747 = vmatpush.msra.mxu0 %v3746
    %v3748 = vand.u32 %v83, 4294901760
    %v3749 = vsub.f32 %v83, %v3748
    %v3750 = vand.u32 %v3749, 4294901760
    %v3751 = vsub.f32 %v3749, %v3750
    %v3752 = vand.u32 %v3751, 4294901760
    %3753 = vmatpush.msra.mxu0 %v3752
    %v3754 = vand.u32 %v82, 4294901760
    %v3755 = vsub.f32 %v82, %v3754
    %v3756 = vand.u32 %v3755, 4294901760
    %v3757 = vsub.f32 %v3755, %v3756
    %v3758 = vand.u32 %v3757, 4294901760
    %3759 = vmatpush.msra.mxu0 %v3758
    %v3760 = vand.u32 %v81, 4294901760
    %v3761 = vsub.f32 %v81, %v3760
    %v3762 = vand.u32 %v3761, 4294901760
    %v3763 = vsub.f32 %v3761, %v3762
    %v3764 = vand.u32 %v3763, 4294901760
    %3765 = vmatpush.msra.mxu0 %v3764
    %v3766 = vand.u32 %v80, 4294901760
    %v3767 = vsub.f32 %v80, %v3766
    %v3768 = vand.u32 %v3767, 4294901760
    %v3769 = vsub.f32 %v3767, %v3768
    %v3770 = vand.u32 %v3769, 4294901760
    %3771 = vmatpush.msra.mxu0 %v3770
    %v3772 = vand.u32 %v79, 4294901760
    %v3773 = vsub.f32 %v79, %v3772
    %v3774 = vand.u32 %v3773, 4294901760
    %v3775 = vsub.f32 %v3773, %v3774
    %v3776 = vand.u32 %v3775, 4294901760
    %3777 = vmatpush.msra.mxu0 %v3776
    %v3778 = vand.u32 %v78, 4294901760
    %v3779 = vsub.f32 %v78, %v3778
    %v3780 = vand.u32 %v3779, 4294901760
    %v3781 = vsub.f32 %v3779, %v3780
    %v3782 = vand.u32 %v3781, 4294901760
    %3783 = vmatpush.msra.mxu0 %v3782
    %v3784 = vand.u32 %v77, 4294901760
    %v3785 = vsub.f32 %v77, %v3784
    %v3786 = vand.u32 %v3785, 4294901760
    %v3787 = vsub.f32 %v3785, %v3786
    %v3788 = vand.u32 %v3787, 4294901760
    %3789 = vmatpush.msra.mxu0 %v3788
    %v3790 = vand.u32 %v76, 4294901760
    %v3791 = vsub.f32 %v76, %v3790
    %v3792 = vand.u32 %v3791, 4294901760
    %v3793 = vsub.f32 %v3791, %v3792
    %v3794 = vand.u32 %v3793, 4294901760
    %3795 = vmatpush.msra.mxu0 %v3794
    %v3796 = vand.u32 %v75, 4294901760
    %v3797 = vsub.f32 %v75, %v3796
    %v3798 = vand.u32 %v3797, 4294901760
    %v3799 = vsub.f32 %v3797, %v3798
    %v3800 = vand.u32 %v3799, 4294901760
    %3801 = vmatpush.msra.mxu0 %v3800
    %v3802 = vand.u32 %v74, 4294901760
    %v3803 = vsub.f32 %v74, %v3802
    %v3804 = vand.u32 %v3803, 4294901760
    %v3805 = vsub.f32 %v3803, %v3804
    %v3806 = vand.u32 %v3805, 4294901760
    %3807 = vmatpush.msra.mxu0 %v3806
    %v3808 = vand.u32 %v73, 4294901760
    %v3809 = vsub.f32 %v73, %v3808
    %v3810 = vand.u32 %v3809, 4294901760
    %v3811 = vsub.f32 %v3809, %v3810
    %v3812 = vand.u32 %v3811, 4294901760
    %3813 = vmatpush.msra.mxu0 %v3812
    %v3814 = vand.u32 %v72, 4294901760
    %v3815 = vsub.f32 %v72, %v3814
    %v3816 = vand.u32 %v3815, 4294901760
    %v3817 = vsub.f32 %v3815, %v3816
    %v3818 = vand.u32 %v3817, 4294901760
    %3819 = vmatpush.msra.mxu0 %v3818
    %v3820 = vand.u32 %v71, 4294901760
    %v3821 = vsub.f32 %v71, %v3820
    %v3822 = vand.u32 %v3821, 4294901760
    %v3823 = vsub.f32 %v3821, %v3822
    %v3824 = vand.u32 %v3823, 4294901760
    %3825 = vmatpush.msra.mxu0 %v3824
    %v3826 = vand.u32 %v70, 4294901760
    %v3827 = vsub.f32 %v70, %v3826
    %v3828 = vand.u32 %v3827, 4294901760
    %v3829 = vsub.f32 %v3827, %v3828
    %v3830 = vand.u32 %v3829, 4294901760
    %3831 = vmatpush.msra.mxu0 %v3830
    %v3832 = vand.u32 %v69, 4294901760
    %v3833 = vsub.f32 %v69, %v3832
    %v3834 = vand.u32 %v3833, 4294901760
    %v3835 = vsub.f32 %v3833, %v3834
    %v3836 = vand.u32 %v3835, 4294901760
    %3837 = vmatpush.msra.mxu0 %v3836
    %v3838 = vand.u32 %v3690, 4294901760
    %3839 = vmatmul.f32.gmra.mxu0 %v3838
    %v3840 = vpop.f32.mrf.mxu0
    %v3841 = vadd.f32 %v3732, %v3840
    %v3842 = vand.u32 %v3691, 4294901760
    %3843 = vmatmul.f32.gmra.mxu0 %v3842
    %v3844 = vpop.f32.mrf.mxu0
    %v3845 = vadd.f32 %v3740, %v3844
    %3846 = vdwg.mxu0
    %v3847 = vand.u32 %v84, 4294901760
    %v3848 = vsub.f32 %v84, %v3847
    %3849 = vmatpush.msra.mxu0 %v3848
    %v3850 = vand.u32 %v83, 4294901760
    %v3851 = vsub.f32 %v83, %v3850
    %3852 = vmatpush.msra.mxu0 %v3851
    %v3853 = vand.u32 %v82, 4294901760
    %v3854 = vsub.f32 %v82, %v3853
    %3855 = vmatpush.msra.mxu0 %v3854
    %v3856 = vand.u32 %v81, 4294901760
    %v3857 = vsub.f32 %v81, %v3856
    %3858 = vmatpush.msra.mxu0 %v3857
    %v3859 = vand.u32 %v80, 4294901760
    %v3860 = vsub.f32 %v80, %v3859
    %3861 = vmatpush.msra.mxu0 %v3860
    %v3862 = vand.u32 %v79, 4294901760
    %v3863 = vsub.f32 %v79, %v3862
    %3864 = vmatpush.msra.mxu0 %v3863
    %v3865 = vand.u32 %v78, 4294901760
    %v3866 = vsub.f32 %v78, %v3865
    %3867 = vmatpush.msra.mxu0 %v3866
    %v3868 = vand.u32 %v77, 4294901760
    %v3869 = vsub.f32 %v77, %v3868
    %3870 = vmatpush.msra.mxu0 %v3869
    %v3871 = vand.u32 %v76, 4294901760
    %v3872 = vsub.f32 %v76, %v3871
    %3873 = vmatpush.msra.mxu0 %v3872
    %v3874 = vand.u32 %v75, 4294901760
    %v3875 = vsub.f32 %v75, %v3874
    %3876 = vmatpush.msra.mxu0 %v3875
    %v3877 = vand.u32 %v74, 4294901760
    %v3878 = vsub.f32 %v74, %v3877
    %3879 = vmatpush.msra.mxu0 %v3878
    %v3880 = vand.u32 %v73, 4294901760
    %v3881 = vsub.f32 %v73, %v3880
    %3882 = vmatpush.msra.mxu0 %v3881
    %v3883 = vand.u32 %v72, 4294901760
    %v3884 = vsub.f32 %v72, %v3883
    %3885 = vmatpush.msra.mxu0 %v3884
    %v3886 = vand.u32 %v71, 4294901760
    %v3887 = vsub.f32 %v71, %v3886
    %3888 = vmatpush.msra.mxu0 %v3887
    %v3889 = vand.u32 %v70, 4294901760
    %v3890 = vsub.f32 %v70, %v3889
    %3891 = vmatpush.msra.mxu0 %v3890
    %v3892 = vand.u32 %v69, 4294901760
    %v3893 = vsub.f32 %v69, %v3892
    %3894 = vmatpush.msra.mxu0 %v3893
    %v3895 = vand.u32 %v3690, 4294901760
    %v3896 = vsub.f32 %v3690, %v3895
    %3897 = vmatmul.f32.gmra.mxu0 %v3896
    %v3898 = vpop.f32.mrf.mxu0
    %v3899 = vadd.f32 %v3841, %v3898
    %v3900 = vand.u32 %v3691, 4294901760
    %v3901 = vsub.f32 %v3691, %v3900
    %3902 = vmatmul.f32.gmra.mxu0 %v3901
    %v3903 = vpop.f32.mrf.mxu0
    %v3904 = vadd.f32 %v3845, %v3903
    %3905 = vdwg.mxu0
    %v3906 = vand.u32 %v84, 4294901760
    %3907 = vmatpush.msra.mxu0 %v3906
    %v3908 = vand.u32 %v83, 4294901760
    %3909 = vmatpush.msra.mxu0 %v3908
    %v3910 = vand.u32 %v82, 4294901760
    %3911 = vmatpush.msra.mxu0 %v3910
    %v3912 = vand.u32 %v81, 4294901760
    %3913 = vmatpush.msra.mxu0 %v3912
    %v3914 = vand.u32 %v80, 4294901760
    %3915 = vmatpush.msra.mxu0 %v3914
    %v3916 = vand.u32 %v79, 4294901760
    %3917 = vmatpush.msra.mxu0 %v3916
    %v3918 = vand.u32 %v78, 4294901760
    %3919 = vmatpush.msra.mxu0 %v3918
    %v3920 = vand.u32 %v77, 4294901760
    %3921 = vmatpush.msra.mxu0 %v3920
    %v3922 = vand.u32 %v76, 4294901760
    %3923 = vmatpush.msra.mxu0 %v3922
    %v3924 = vand.u32 %v75, 4294901760
    %3925 = vmatpush.msra.mxu0 %v3924
    %v3926 = vand.u32 %v74, 4294901760
    %3927 = vmatpush.msra.mxu0 %v3926
    %v3928 = vand.u32 %v73, 4294901760
    %3929 = vmatpush.msra.mxu0 %v3928
    %v3930 = vand.u32 %v72, 4294901760
    %3931 = vmatpush.msra.mxu0 %v3930
    %v3932 = vand.u32 %v71, 4294901760
    %3933 = vmatpush.msra.mxu0 %v3932
    %v3934 = vand.u32 %v70, 4294901760
    %3935 = vmatpush.msra.mxu0 %v3934
    %v3936 = vand.u32 %v69, 4294901760
    %3937 = vmatpush.msra.mxu0 %v3936
    %v3938 = vand.u32 %v3690, 4294901760
    %v3939 = vsub.f32 %v3690, %v3938
    %v3940 = vand.u32 %v3939, 4294901760
    %3941 = vmatmul.f32.gmra.mxu0 %v3940
    %v3942 = vpop.f32.mrf.mxu0
    %v3943 = vadd.f32 %v3899, %v3942
    %v3944 = vand.u32 %v3691, 4294901760
    %v3945 = vsub.f32 %v3691, %v3944
    %v3946 = vand.u32 %v3945, 4294901760
    %3947 = vmatmul.f32.gmra.mxu0 %v3946
    %v3948 = vpop.f32.mrf.mxu0
    %v3949 = vadd.f32 %v3904, %v3948
    %3950 = vdwg.mxu0
    %v3951 = vand.u32 %v84, 4294901760
    %v3952 = vsub.f32 %v84, %v3951
    %v3953 = vand.u32 %v3952, 4294901760
    %3954 = vmatpush.msra.mxu0 %v3953
    %v3955 = vand.u32 %v83, 4294901760
    %v3956 = vsub.f32 %v83, %v3955
    %v3957 = vand.u32 %v3956, 4294901760
    %3958 = vmatpush.msra.mxu0 %v3957
    %v3959 = vand.u32 %v82, 4294901760
    %v3960 = vsub.f32 %v82, %v3959
    %v3961 = vand.u32 %v3960, 4294901760
    %3962 = vmatpush.msra.mxu0 %v3961
    %v3963 = vand.u32 %v81, 4294901760
    %v3964 = vsub.f32 %v81, %v3963
    %v3965 = vand.u32 %v3964, 4294901760
    %3966 = vmatpush.msra.mxu0 %v3965
    %v3967 = vand.u32 %v80, 4294901760
    %v3968 = vsub.f32 %v80, %v3967
    %v3969 = vand.u32 %v3968, 4294901760
    %3970 = vmatpush.msra.mxu0 %v3969
    %v3971 = vand.u32 %v79, 4294901760
    %v3972 = vsub.f32 %v79, %v3971
    %v3973 = vand.u32 %v3972, 4294901760
    %3974 = vmatpush.msra.mxu0 %v3973
    %v3975 = vand.u32 %v78, 4294901760
    %v3976 = vsub.f32 %v78, %v3975
    %v3977 = vand.u32 %v3976, 4294901760
    %3978 = vmatpush.msra.mxu0 %v3977
    %v3979 = vand.u32 %v77, 4294901760
    %v3980 = vsub.f32 %v77, %v3979
    %v3981 = vand.u32 %v3980, 4294901760
    %3982 = vmatpush.msra.mxu0 %v3981
    %v3983 = vand.u32 %v76, 4294901760
    %v3984 = vsub.f32 %v76, %v3983
    %v3985 = vand.u32 %v3984, 4294901760
    %3986 = vmatpush.msra.mxu0 %v3985
    %v3987 = vand.u32 %v75, 4294901760
    %v3988 = vsub.f32 %v75, %v3987
    %v3989 = vand.u32 %v3988, 4294901760
    %3990 = vmatpush.msra.mxu0 %v3989
    %v3991 = vand.u32 %v74, 4294901760
    %v3992 = vsub.f32 %v74, %v3991
    %v3993 = vand.u32 %v3992, 4294901760
    %3994 = vmatpush.msra.mxu0 %v3993
    %v3995 = vand.u32 %v73, 4294901760
    %v3996 = vsub.f32 %v73, %v3995
    %v3997 = vand.u32 %v3996, 4294901760
    %3998 = vmatpush.msra.mxu0 %v3997
    %v3999 = vand.u32 %v72, 4294901760
    %v4000 = vsub.f32 %v72, %v3999
    %v4001 = vand.u32 %v4000, 4294901760
    %4002 = vmatpush.msra.mxu0 %v4001
    %v4003 = vand.u32 %v71, 4294901760
    %v4004 = vsub.f32 %v71, %v4003
    %v4005 = vand.u32 %v4004, 4294901760
    %4006 = vmatpush.msra.mxu0 %v4005
    %v4007 = vand.u32 %v70, 4294901760
    %v4008 = vsub.f32 %v70, %v4007
    %v4009 = vand.u32 %v4008, 4294901760
    %4010 = vmatpush.msra.mxu0 %v4009
    %v4011 = vand.u32 %v69, 4294901760
    %v4012 = vsub.f32 %v69, %v4011
    %v4013 = vand.u32 %v4012, 4294901760
    %4014 = vmatpush.msra.mxu0 %v4013
    %v4015 = vand.u32 %v3690, 4294901760
    %4016 = vmatmul.f32.gmra.mxu0 %v4015
    %v4017 = vpop.f32.mrf.mxu0
    %v4018 = vadd.f32 %v3943, %v4017
    %v4019 = vand.u32 %v3691, 4294901760
    %4020 = vmatmul.f32.gmra.mxu0 %v4019
    %v4021 = vpop.f32.mrf.mxu0
    %v4022 = vadd.f32 %v3949, %v4021
    %4023 = vdwg.mxu0
    %v4024 = vand.u32 %v84, 4294901760
    %4025 = vmatpush.msra.mxu0 %v4024
    %v4026 = vand.u32 %v83, 4294901760
    %4027 = vmatpush.msra.mxu0 %v4026
    %v4028 = vand.u32 %v82, 4294901760
    %4029 = vmatpush.msra.mxu0 %v4028
    %v4030 = vand.u32 %v81, 4294901760
    %4031 = vmatpush.msra.mxu0 %v4030
    %v4032 = vand.u32 %v80, 4294901760
    %4033 = vmatpush.msra.mxu0 %v4032
    %v4034 = vand.u32 %v79, 4294901760
    %4035 = vmatpush.msra.mxu0 %v4034
    %v4036 = vand.u32 %v78, 4294901760
    %4037 = vmatpush.msra.mxu0 %v4036
    %v4038 = vand.u32 %v77, 4294901760
    %4039 = vmatpush.msra.mxu0 %v4038
    %v4040 = vand.u32 %v76, 4294901760
    %4041 = vmatpush.msra.mxu0 %v4040
    %v4042 = vand.u32 %v75, 4294901760
    %4043 = vmatpush.msra.mxu0 %v4042
    %v4044 = vand.u32 %v74, 4294901760
    %4045 = vmatpush.msra.mxu0 %v4044
    %v4046 = vand.u32 %v73, 4294901760
    %4047 = vmatpush.msra.mxu0 %v4046
    %v4048 = vand.u32 %v72, 4294901760
    %4049 = vmatpush.msra.mxu0 %v4048
    %v4050 = vand.u32 %v71, 4294901760
    %4051 = vmatpush.msra.mxu0 %v4050
    %v4052 = vand.u32 %v70, 4294901760
    %4053 = vmatpush.msra.mxu0 %v4052
    %v4054 = vand.u32 %v69, 4294901760
    %4055 = vmatpush.msra.mxu0 %v4054
    %v4056 = vand.u32 %v3690, 4294901760
    %4057 = vmatmul.f32.gmra.mxu0 %v4056
    %v4058 = vpop.f32.mrf.mxu0
    %v4059 = vadd.f32 %v4018, %v4058
    %v4060 = vand.u32 %v3691, 4294901760
    %4061 = vmatmul.f32.gmra.mxu0 %v4060
    %v4062 = vpop.f32.mrf.mxu0
    %v4063 = vadd.f32 %v4022, %v4062
    %4064 = vdwg.mxu0
    %v4065 = vadd.f32 %v3399, %v4059
    %v4066 = vadd.f32 %v3400, %v4063
    %v4067 = vperm.slane %v100, 0
    %v4069 = vsel %vm496, %v4065, 0
    %v4072 = vsel %vm496, %v4066, 0
    %4074 = vmatpush.msra.mxu0 0.0
    %4075 = vmatpush.msra.mxu0 0.0
    %4076 = vmatpush.msra.mxu0 0.0
    %4077 = vmatpush.msra.mxu0 0.0
    %4078 = vmatpush.msra.mxu0 0.0
    %4079 = vmatpush.msra.mxu0 0.0
    %4080 = vmatpush.msra.mxu0 0.0
    %4081 = vmatpush.msra.mxu0 0.0
    %4082 = vmatpush.msra.mxu0 0.0
    %4083 = vmatpush.msra.mxu0 0.0
    %4084 = vmatpush.msra.mxu0 0.0
    %4085 = vmatpush.msra.mxu0 0.0
    %v4086 = vand.u32 %v88, 4294901760
    %4087 = vmatpush.msra.mxu0 %v4086
    %v4088 = vand.u32 %v87, 4294901760
    %4089 = vmatpush.msra.mxu0 %v4088
    %v4090 = vand.u32 %v86, 4294901760
    %4091 = vmatpush.msra.mxu0 %v4090
    %v4092 = vand.u32 %v85, 4294901760
    %4093 = vmatpush.msra.mxu0 %v4092
    %v4094 = vand.u32 %v4069, 4294901760
    %v4095 = vsub.f32 %v4069, %v4094
    %v4096 = vand.u32 %v4095, 4294901760
    %v4097 = vsub.f32 %v4095, %v4096
    %v4098 = vand.u32 %v4097, 4294901760
    %4099 = vmatmul.f32.gmra.mxu0 %v4098
    %v4100 = vpop.f32.mrf.mxu0
    %v4101 = vadd.f32 %v4067, %v4100
    %v4102 = vand.u32 %v4072, 4294901760
    %v4103 = vsub.f32 %v4072, %v4102
    %v4104 = vand.u32 %v4103, 4294901760
    %v4105 = vsub.f32 %v4103, %v4104
    %v4106 = vand.u32 %v4105, 4294901760
    %4107 = vmatmul.f32.gmra.mxu0 %v4106
    %v4108 = vpop.f32.mrf.mxu0
    %v4109 = vadd.f32 %v4067, %v4108
    %4110 = vdwg.mxu0
    %4111 = vmatpush.msra.mxu0 0.0
    %4112 = vmatpush.msra.mxu0 0.0
    %4113 = vmatpush.msra.mxu0 0.0
    %4114 = vmatpush.msra.mxu0 0.0
    %4115 = vmatpush.msra.mxu0 0.0
    %4116 = vmatpush.msra.mxu0 0.0
    %4117 = vmatpush.msra.mxu0 0.0
    %4118 = vmatpush.msra.mxu0 0.0
    %4119 = vmatpush.msra.mxu0 0.0
    %4120 = vmatpush.msra.mxu0 0.0
    %4121 = vmatpush.msra.mxu0 0.0
    %4122 = vmatpush.msra.mxu0 0.0
    %v4123 = vand.u32 %v88, 4294901760
    %v4124 = vsub.f32 %v88, %v4123
    %v4125 = vand.u32 %v4124, 4294901760
    %v4126 = vsub.f32 %v4124, %v4125
    %v4127 = vand.u32 %v4126, 4294901760
    %4128 = vmatpush.msra.mxu0 %v4127
    %v4129 = vand.u32 %v87, 4294901760
    %v4130 = vsub.f32 %v87, %v4129
    %v4131 = vand.u32 %v4130, 4294901760
    %v4132 = vsub.f32 %v4130, %v4131
    %v4133 = vand.u32 %v4132, 4294901760
    %4134 = vmatpush.msra.mxu0 %v4133
    %v4135 = vand.u32 %v86, 4294901760
    %v4136 = vsub.f32 %v86, %v4135
    %v4137 = vand.u32 %v4136, 4294901760
    %v4138 = vsub.f32 %v4136, %v4137
    %v4139 = vand.u32 %v4138, 4294901760
    %4140 = vmatpush.msra.mxu0 %v4139
    %v4141 = vand.u32 %v85, 4294901760
    %v4142 = vsub.f32 %v85, %v4141
    %v4143 = vand.u32 %v4142, 4294901760
    %v4144 = vsub.f32 %v4142, %v4143
    %v4145 = vand.u32 %v4144, 4294901760
    %4146 = vmatpush.msra.mxu0 %v4145
    %v4147 = vand.u32 %v4069, 4294901760
    %4148 = vmatmul.f32.gmra.mxu0 %v4147
    %v4149 = vpop.f32.mrf.mxu0
    %v4150 = vadd.f32 %v4101, %v4149
    %v4151 = vand.u32 %v4072, 4294901760
    %4152 = vmatmul.f32.gmra.mxu0 %v4151
    %v4153 = vpop.f32.mrf.mxu0
    %v4154 = vadd.f32 %v4109, %v4153
    %4155 = vdwg.mxu0
    %4156 = vmatpush.msra.mxu0 0.0
    %4157 = vmatpush.msra.mxu0 0.0
    %4158 = vmatpush.msra.mxu0 0.0
    %4159 = vmatpush.msra.mxu0 0.0
    %4160 = vmatpush.msra.mxu0 0.0
    %4161 = vmatpush.msra.mxu0 0.0
    %4162 = vmatpush.msra.mxu0 0.0
    %4163 = vmatpush.msra.mxu0 0.0
    %4164 = vmatpush.msra.mxu0 0.0
    %4165 = vmatpush.msra.mxu0 0.0
    %4166 = vmatpush.msra.mxu0 0.0
    %4167 = vmatpush.msra.mxu0 0.0
    %v4168 = vand.u32 %v88, 4294901760
    %v4169 = vsub.f32 %v88, %v4168
    %4170 = vmatpush.msra.mxu0 %v4169
    %v4171 = vand.u32 %v87, 4294901760
    %v4172 = vsub.f32 %v87, %v4171
    %4173 = vmatpush.msra.mxu0 %v4172
    %v4174 = vand.u32 %v86, 4294901760
    %v4175 = vsub.f32 %v86, %v4174
    %4176 = vmatpush.msra.mxu0 %v4175
    %v4177 = vand.u32 %v85, 4294901760
    %v4178 = vsub.f32 %v85, %v4177
    %4179 = vmatpush.msra.mxu0 %v4178
    %v4180 = vand.u32 %v4069, 4294901760
    %v4181 = vsub.f32 %v4069, %v4180
    %4182 = vmatmul.f32.gmra.mxu0 %v4181
    %v4183 = vpop.f32.mrf.mxu0
    %v4184 = vadd.f32 %v4150, %v4183
    %v4185 = vand.u32 %v4072, 4294901760
    %v4186 = vsub.f32 %v4072, %v4185
    %4187 = vmatmul.f32.gmra.mxu0 %v4186
    %v4188 = vpop.f32.mrf.mxu0
    %v4189 = vadd.f32 %v4154, %v4188
    %4190 = vdwg.mxu0
    %4191 = vmatpush.msra.mxu0 0.0
    %4192 = vmatpush.msra.mxu0 0.0
    %4193 = vmatpush.msra.mxu0 0.0
    %4194 = vmatpush.msra.mxu0 0.0
    %4195 = vmatpush.msra.mxu0 0.0
    %4196 = vmatpush.msra.mxu0 0.0
    %4197 = vmatpush.msra.mxu0 0.0
    %4198 = vmatpush.msra.mxu0 0.0
    %4199 = vmatpush.msra.mxu0 0.0
    %4200 = vmatpush.msra.mxu0 0.0
    %4201 = vmatpush.msra.mxu0 0.0
    %4202 = vmatpush.msra.mxu0 0.0
    %v4203 = vand.u32 %v88, 4294901760
    %4204 = vmatpush.msra.mxu0 %v4203
    %v4205 = vand.u32 %v87, 4294901760
    %4206 = vmatpush.msra.mxu0 %v4205
    %v4207 = vand.u32 %v86, 4294901760
    %4208 = vmatpush.msra.mxu0 %v4207
    %v4209 = vand.u32 %v85, 4294901760
    %4210 = vmatpush.msra.mxu0 %v4209
    %v4211 = vand.u32 %v4069, 4294901760
    %v4212 = vsub.f32 %v4069, %v4211
    %v4213 = vand.u32 %v4212, 4294901760
    %4214 = vmatmul.f32.gmra.mxu0 %v4213
    %v4215 = vpop.f32.mrf.mxu0
    %v4216 = vadd.f32 %v4184, %v4215
    %v4217 = vand.u32 %v4072, 4294901760
    %v4218 = vsub.f32 %v4072, %v4217
    %v4219 = vand.u32 %v4218, 4294901760
    %4220 = vmatmul.f32.gmra.mxu0 %v4219
    %v4221 = vpop.f32.mrf.mxu0
    %v4222 = vadd.f32 %v4189, %v4221
    %4223 = vdwg.mxu0
    %4224 = vmatpush.msra.mxu0 0.0
    %4225 = vmatpush.msra.mxu0 0.0
    %4226 = vmatpush.msra.mxu0 0.0
    %4227 = vmatpush.msra.mxu0 0.0
    %4228 = vmatpush.msra.mxu0 0.0
    %4229 = vmatpush.msra.mxu0 0.0
    %4230 = vmatpush.msra.mxu0 0.0
    %4231 = vmatpush.msra.mxu0 0.0
    %4232 = vmatpush.msra.mxu0 0.0
    %4233 = vmatpush.msra.mxu0 0.0
    %4234 = vmatpush.msra.mxu0 0.0
    %4235 = vmatpush.msra.mxu0 0.0
    %v4236 = vand.u32 %v88, 4294901760
    %v4237 = vsub.f32 %v88, %v4236
    %v4238 = vand.u32 %v4237, 4294901760
    %4239 = vmatpush.msra.mxu0 %v4238
    %v4240 = vand.u32 %v87, 4294901760
    %v4241 = vsub.f32 %v87, %v4240
    %v4242 = vand.u32 %v4241, 4294901760
    %4243 = vmatpush.msra.mxu0 %v4242
    %v4244 = vand.u32 %v86, 4294901760
    %v4245 = vsub.f32 %v86, %v4244
    %v4246 = vand.u32 %v4245, 4294901760
    %4247 = vmatpush.msra.mxu0 %v4246
    %v4248 = vand.u32 %v85, 4294901760
    %v4249 = vsub.f32 %v85, %v4248
    %v4250 = vand.u32 %v4249, 4294901760
    %4251 = vmatpush.msra.mxu0 %v4250
    %v4252 = vand.u32 %v4069, 4294901760
    %4253 = vmatmul.f32.gmra.mxu0 %v4252
    %v4254 = vpop.f32.mrf.mxu0
    %v4255 = vadd.f32 %v4216, %v4254
    %v4256 = vand.u32 %v4072, 4294901760
    %4257 = vmatmul.f32.gmra.mxu0 %v4256
    %v4258 = vpop.f32.mrf.mxu0
    %v4259 = vadd.f32 %v4222, %v4258
    %4260 = vdwg.mxu0
    %4261 = vmatpush.msra.mxu0 0.0
    %4262 = vmatpush.msra.mxu0 0.0
    %4263 = vmatpush.msra.mxu0 0.0
    %4264 = vmatpush.msra.mxu0 0.0
    %4265 = vmatpush.msra.mxu0 0.0
    %4266 = vmatpush.msra.mxu0 0.0
    %4267 = vmatpush.msra.mxu0 0.0
    %4268 = vmatpush.msra.mxu0 0.0
    %4269 = vmatpush.msra.mxu0 0.0
    %4270 = vmatpush.msra.mxu0 0.0
    %4271 = vmatpush.msra.mxu0 0.0
    %4272 = vmatpush.msra.mxu0 0.0
    %v4273 = vand.u32 %v88, 4294901760
    %4274 = vmatpush.msra.mxu0 %v4273
    %v4275 = vand.u32 %v87, 4294901760
    %4276 = vmatpush.msra.mxu0 %v4275
    %v4277 = vand.u32 %v86, 4294901760
    %4278 = vmatpush.msra.mxu0 %v4277
    %v4279 = vand.u32 %v85, 4294901760
    %4280 = vmatpush.msra.mxu0 %v4279
    %v4281 = vand.u32 %v4069, 4294901760
    %4282 = vmatmul.f32.gmra.mxu0 %v4281
    %v4283 = vpop.f32.mrf.mxu0
    %v4284 = vadd.f32 %v4255, %v4283
    %v4285 = vand.u32 %v4072, 4294901760
    %4286 = vmatmul.f32.gmra.mxu0 %v4285
    %v4287 = vpop.f32.mrf.mxu0
    %v4288 = vadd.f32 %v4259, %v4287
    %4289 = vdwg.mxu0
    %4290 = vst [vmem:[%s2] sm:$0xff] %v4284
    %4291 = vst [vmem:[%s2 + $0x8] sm:$0xff] %v4288
    // Predicated region
    $region18: #{integrated_model.1} parent=1 // pred_check
      _
    $region19: #{integrated_model.1} parent=1 // pred_check_branch
      %4293 = sbr.rel (0) target = $region21
    $region20: #{integrated_model.1} parent=1 // pred_region
      _
    $region21: #{integrated_model.1} parent=1 // pred_fallthru
      _
    // Predicated region
    $region22: #{integrated_model.1} parent=1 // pred_check
      _
    $region23: #{integrated_model.1} parent=1 // pred_check_branch
      %4295 = sbr.rel (0) target = $region25
    $region24: #{integrated_model.1} parent=1 // pred_region
      _
    $region25: #{integrated_model.1} parent=1 // pred_fallthru
      _
    %4296 = vsyncpa [#allocation3], 1
    %4297 = vsyncpa [#allocation5], 1

</llo_original>
